<compile_context>
chip_gen: v7x
topology: tpu7x:2x2x1
jax: 0.10.0
libtpu: 0.0.40
codegen_flags: <defaults>
</compile_context>

<pallas_src>
import functools

import numpy as np

import jax
import jax.numpy as jnp
from jax.experimental import pallas as pl
from jax.experimental.pallas import tpu as pltpu

K = 5            # Conv1d kernel_size in the reference module
BN_EPS = 1e-5    # nn.BatchNorm1d default eps
NEG_INF = -1e30  # mask value for padded output classes (f32 logits path)
N_OUT_PAD = 8    # padded class count: next multiple of 8 >= n_output
MAX_BT = 512     # cap on the batch-tile (lane) width


# --------------------------------------------------------------------------
# Kernel
# --------------------------------------------------------------------------
def _cnn_kernel(x_ref,
                w1_ref, b1_ref,
                w2_ref, b2_ref,
                w3_ref, b3_ref,
                wfc_ref, bfc_ref,
                out_ref):
    # Activations live as (channel*position, batch_tile) slabs: batch on the
    # 128-lane axis, channel*position on sublanes.  Each layer is one bf16
    # matmul with the folded conv+BN banded weight, f32 accumulate, + bias,
    # + ReLU.
    def dense_relu(w_ref, h_bf16, b_ref):
        z = jnp.dot(w_ref[...], h_bf16, preferred_element_type=jnp.float32)
        z = z + b_ref[...]                    # (rows, 1) broadcast over lanes
        return jnp.maximum(z, 0.0)

    h = dense_relu(w1_ref, x_ref[...], b1_ref)                 # (C1*L1, BT) f32
    h = dense_relu(w2_ref, h.astype(jnp.bfloat16), b2_ref)     # (C2*L2, BT)
    h = dense_relu(w3_ref, h.astype(jnp.bfloat16), b3_ref)     # (C3*L3, BT)
    # (The post-flatten ReLU in forward() is idempotent after the ReLU above.)

    # FC: classes on sublanes (padded to 8), batch on lanes; f32 logits.
    logits = jnp.dot(wfc_ref[...], h.astype(jnp.bfloat16),
                     preferred_element_type=jnp.float32)
    logits = logits + bfc_ref[...]            # pad classes carry a -1e30 bias

    # Batched softmax over the (8-row) class axis for the whole batch tile.
    m = jnp.max(logits, axis=0, keepdims=True)
    e = jnp.exp(logits - m)
    denom = jnp.sum(e, axis=0, keepdims=True)
    out_ref[...] = e * pl.reciprocal(denom, approx=True)


# --------------------------------------------------------------------------
# Wrapper
# --------------------------------------------------------------------------
def _pick_batch_tiling(batch):
    """Choose (BT, num_tiles): BT multiple of 128, <= MAX_BT, and >= 2 grid
    steps whenever the padded batch spans >= 256 lanes (v7x megacore)."""
    n128 = -(-batch // 128)
    if n128 <= 1:
        return 128, 1
    tiles = max(2, -(-(n128 * 128) // MAX_BT))
    bt = -(-n128 // tiles) * 128
    return bt, tiles


def _call_kernel(xk, p, *, bt, tiles):
    CL, B_pad = xk.shape
    n_out_pad = p["wfc"].shape[0]
    weights = [p["w1"], p["b1"], p["w2"], p["b2"], p["w3"], p["b3"],
               p["wfc"], p["bfc"]]

    in_specs = [pl.BlockSpec((CL, bt), lambda i: (0, i))]
    in_specs += [pl.BlockSpec(w.shape, lambda i: (0, 0)) for w in weights]
    # Per-tile output block so the batch-tile grid axis is legally "parallel".
    out_spec = pl.BlockSpec((n_out_pad, bt), lambda i: (0, i))

    return pl.pallas_call(
        _cnn_kernel,
        out_shape=jax.ShapeDtypeStruct((n_out_pad, B_pad), jnp.float32),
        grid_spec=pltpu.PrefetchScalarGridSpec(
            num_scalar_prefetch=0,
            grid=(tiles,),
            in_specs=in_specs,
            out_specs=out_spec,
        ),
        compiler_params=pltpu.CompilerParams(
            dimension_semantics=("parallel",),
            # Allow XLA to fold the x-layout producer into the kernel operand.
            allow_input_fusion=[True] + [False] * len(weights),
        ),
    )(xk, *weights)


def cnn_forward_slab(xk, p):
    """Fast path: x already as a bf16 (C*L, B_pad) slab, B_pad multiple of 128.
    Returns the padded (n_out_pad, B_pad) softmax slab."""
    bt, tiles = _pick_batch_tiling(xk.shape[1])
    assert bt * tiles == xk.shape[1]
    return _call_kernel(xk, p, bt=bt, tiles=tiles)


@functools.partial(jax.jit, static_argnames=("n_output",))
def cnn_forward(x, p, *, n_output):
    """x: (B, C, L) float32 (torch layout); returns (B, n_output) float32."""
    B, C, L = x.shape
    CL = C * L
    assert p["w1"].shape[1] == CL
    bt, tiles = _pick_batch_tiling(B)
    B_pad = bt * tiles

    # Layout plumbing (fused into the operand via allow_input_fusion):
    # (B, C, L) -> bf16 (C*L, B_pad), row index = c*L + l, batch on lanes.
    xk = jnp.transpose(x.astype(jnp.bfloat16), (1, 2, 0)).reshape(CL, B)
    xk = jnp.pad(xk, ((0, 0), (0, B_pad - B)))

    out = _call_kernel(xk, p, bt=bt, tiles=tiles)

    # Slice away class padding and batch padding; back to torch orientation.
    return jnp.transpose(out[:n_output, :B])


# --------------------------------------------------------------------------
# Parameter construction (torch-style raw params -> folded banded matrices)
# --------------------------------------------------------------------------
def init_raw_params(key, n_output, n_channels, n_samples, n_filters):
    """Deterministic xavier-uniform conv/FC weights, zero biases, default BN stats."""
    l1, l2, l3 = n_filters, n_filters // 2, n_filters // 4
    L1 = n_samples - K + 1
    L2 = L1 - K + 1
    L3 = L2 - K + 1
    size_after_conv = l3 * L3

    def xavier(k, shape, fan_in, fan_out):
        bound = (6.0 / (fan_in + fan_out)) ** 0.5
        return jax.random.uniform(k, shape, jnp.float32, -bound, bound)

    k1, k2, k3, k4 = jax.random.split(key, 4)
    raw = dict(
        w1=xavier(k1, (l1, n_channels, K), n_channels * K, l1 * K),
        b1=jnp.zeros((l1,), jnp.float32),
        w2=xavier(k2, (l2, l1, K), l1 * K, l2 * K),
        b2=jnp.zeros((l2,), jnp.float32),
        w3=xavier(k3, (l3, l2, K), l2 * K, l3 * K),
        b3=jnp.zeros((l3,), jnp.float32),
        wfc=xavier(k4, (n_output, size_after_conv), size_after_conv, n_output),
        bfc=jnp.zeros((n_output,), jnp.float32),
    )
    # BatchNorm1d params as initialized (gamma=1, beta=0) with default running
    # stats (mean=0, var=1) -> eval-mode identity (up to eps).
    for name, c in (("1", l1), ("2", l2), ("3", l3)):
        raw["gamma" + name] = jnp.ones((c,), jnp.float32)
        raw["beta" + name] = jnp.zeros((c,), jnp.float32)
        raw["mean" + name] = jnp.zeros((c,), jnp.float32)
        raw["var" + name] = jnp.ones((c,), jnp.float32)
    return raw


def _banded_conv_weight(w, scale, bias_fold, Lin):
    """Fold conv + (bias, eval-BN) into one banded matmul over the
    (channel*position, batch) slab.

      W_full[co*Lout + l, ci*Lin + l + t] = w[co, ci, t] * scale[co]
      b_full[co*Lout + l]                 = bias_fold[co]
    """
    w = np.asarray(w, np.float32)                        # (Cout, Cin, K)
    scale = np.asarray(scale, np.float32).reshape(-1)    # (Cout,)
    bias_fold = np.asarray(bias_fold, np.float32).reshape(-1)
    Cout, Cin, Kk = w.shape
    Lout = Lin - Kk + 1

    Wf = np.zeros((Cout, Lout, Cin, Lin), np.float32)
    for t in range(Kk):
        for l in range(Lout):
            Wf[:, l, :, l + t] = w[:, :, t]
    Wf *= scale[:, None, None, None]
    Wf = Wf.reshape(Cout * Lout, Cin * Lin)
    bf = np.repeat(bias_fold, Lout).reshape(Cout * Lout, 1)
    return Wf, bf, Lout


def build_kernel_params(raw, n_samples, n_out_pad=N_OUT_PAD):
    """Fold eval-mode BN + conv bias into banded bf16 weights; pad FC to n_out_pad."""
    p = {}
    prev_L = n_samples
    for i in (1, 2, 3):
        gamma = np.asarray(raw[f"gamma{i}"], np.float32)
        beta = np.asarray(raw[f"beta{i}"], np.float32)
        mean = np.asarray(raw[f"mean{i}"], np.float32)
        var = np.asarray(raw[f"var{i}"], np.float32)
        scale = gamma / np.sqrt(var + BN_EPS)
        shift = beta - mean * scale
        bias_fold = np.asarray(raw[f"b{i}"], np.float32) * scale + shift
        Wf, bf, prev_L = _banded_conv_weight(raw[f"w{i}"], scale, bias_fold, prev_L)
        p[f"w{i}"] = jnp.asarray(Wf, dtype=jnp.bfloat16)   # bf16 matmul operand
        p[f"b{i}"] = jnp.asarray(bf, dtype=jnp.float32)    # f32 bias

    # FC: torch flatten of (C3, L3) is row-major (index c*L3 + l) == slab rows.
    wfc = np.asarray(raw["wfc"], np.float32)               # (n_output, C3*L3)
    bfc = np.asarray(raw["bfc"], np.float32)               # (n_output,)
    n_output, feat = wfc.shape
    assert n_out_pad >= n_output and n_out_pad % 8 == 0
    wfc_pad = np.zeros((n_out_pad, feat), np.float32)
    wfc_pad[:n_output] = wfc
    bfc_pad = np.full((n_out_pad, 1), NEG_INF, np.float32)  # mask pad classes
    bfc_pad[:n_output, 0] = bfc
    p["wfc"] = jnp.asarray(wfc_pad, dtype=jnp.bfloat16)
    p["bfc"] = jnp.asarray(bfc_pad, dtype=jnp.float32)
    return p


# --------------------------------------------------------------------------
# Plain-JAX reference of the torch forward (conv1d + eval-BN + ReLU, FC, softmax)
# --------------------------------------------------------------------------
def cnn_reference(x, raw):
    def conv1d(h, w, b):
        Lout = h.shape[-1] - w.shape[-1] + 1
        acc = jnp.zeros((h.shape[0], w.shape[0], Lout), jnp.float32)
        for t in range(w.shape[-1]):
            acc = acc + jnp.einsum("oc,bcl->bol", w[:, :, t], h[:, :, t:t + Lout])
        return acc + b[None, :, None]

    def bn_eval(h, gamma, beta, mean, var):
        scale = gamma / jnp.sqrt(var + BN_EPS)
        shift = beta - mean * scale
        return h * scale[None, :, None] + shift[None, :, None]

    h = x
    for i in (1, 2, 3):
        h = conv1d(h, raw[f"w{i}"], raw[f"b{i}"])
        h = bn_eval(h, raw[f"gamma{i}"], raw[f"beta{i}"],
                    raw[f"mean{i}"], raw[f"var{i}"])
        h = jnp.maximum(h, 0.0)
    flat = jnp.maximum(h.reshape(h.shape[0], -1), 0.0)   # x.view(B,-1) then ReLU
    logits = flat @ raw["wfc"].T + raw["bfc"][None]
    return jax.nn.softmax(logits, axis=1)


# --------------------------------------------------------------------------
if __name__ == "__main__":
    # Small shapes consistent with CNN(n_output, n_channels, n_samples, n_filters)
    n_output, n_channels, n_samples, n_filters = 5, 4, 32, 32
    batch = 2

    key = jax.random.PRNGKey(0)
    pkey, xkey = jax.random.split(key)
    raw = init_raw_params(pkey, n_output, n_channels, n_samples, n_filters)
    kparams = build_kernel_params(raw, n_samples)
    x = jax.random.normal(xkey, (batch, n_channels, n_samples), jnp.float32)

    out = cnn_forward(x, kparams, n_output=n_output)
    out = jax.block_until_ready(out)

    ref = cnn_reference(x, raw)
    assert out.shape == (batch, n_output)
    # approx reciprocal in the softmax denominator + bf16 matmuls -> modest tolerances.
    assert jnp.allclose(jnp.sum(out, axis=1), 1.0, atol=5e-3)
    assert jnp.allclose(out, ref, atol=1e-2, rtol=1e-2)
    print("KERNEL_OK")
</pallas_src>

<mosaic_0001>
module attributes {stable_mosaic.version = 11 : i64} {
  func.func @_cnn_kernel(%arg0: i32, %arg1: memref<128x128xbf16, #tpu.memory_space<vmem>>, %arg2: memref<896x128xbf16, #tpu.memory_space<vmem>>, %arg3: memref<896x1xf32, #tpu.memory_space<vmem>>, %arg4: memref<384x896xbf16, #tpu.memory_space<vmem>>, %arg5: memref<384x1xf32, #tpu.memory_space<vmem>>, %arg6: memref<160x384xbf16, #tpu.memory_space<vmem>>, %arg7: memref<160x1xf32, #tpu.memory_space<vmem>>, %arg8: memref<8x160xbf16, #tpu.memory_space<vmem>>, %arg9: memref<8x1xf32, #tpu.memory_space<vmem>>, %arg10: memref<8x128xf32, #tpu.memory_space<vmem>>) attributes {dimension_semantics = [#tpu.dimension_semantics<parallel>], iteration_bounds = array<i64: 1>, scalar_prefetch = 0 : i64, scratch_operands = 0 : i64, tpu.core_type = #tpu.core_type<tc>, window_params = [{transform_indices = @transform_0, window_bounds = array<i64: 128, 128>}, {pipeline_mode = #tpu.pipeline_mode<synchronous>, transform_indices = @transform_1, window_bounds = array<i64: 896, 128>}, {pipeline_mode = #tpu.pipeline_mode<synchronous>, transform_indices = @transform_2, window_bounds = array<i64: 896, 1>}, {pipeline_mode = #tpu.pipeline_mode<synchronous>, transform_indices = @transform_3, window_bounds = array<i64: 384, 896>}, {pipeline_mode = #tpu.pipeline_mode<synchronous>, transform_indices = @transform_4, window_bounds = array<i64: 384, 1>}, {pipeline_mode = #tpu.pipeline_mode<synchronous>, transform_indices = @transform_5, window_bounds = array<i64: 160, 384>}, {pipeline_mode = #tpu.pipeline_mode<synchronous>, transform_indices = @transform_6, window_bounds = array<i64: 160, 1>}, {pipeline_mode = #tpu.pipeline_mode<synchronous>, transform_indices = @transform_7, window_bounds = array<i64: 8, 160>}, {pipeline_mode = #tpu.pipeline_mode<synchronous>, transform_indices = @transform_8, window_bounds = array<i64: 8, 1>}, {transform_indices = @transform_9, window_bounds = array<i64: 8, 128>}]} {
    %c0 = arith.constant 0 : index
    %c0_0 = arith.constant 0 : index
    %0 = vector.load %arg1[%c0, %c0_0] : memref<128x128xbf16, #tpu.memory_space<vmem>>, vector<128x128xbf16>
    %c0_1 = arith.constant 0 : index
    %c0_2 = arith.constant 0 : index
    %1 = vector.load %arg2[%c0_1, %c0_2] : memref<896x128xbf16, #tpu.memory_space<vmem>>, vector<896x128xbf16>
    %cst = arith.constant dense<0.000000e+00> : vector<896x128xf32>
    %2 = tpu.matmul %1, %0, %cst {dimension_numbers = #tpu.dot_dimension_numbers<[1], [0], [0], [1], [0, 0, 1, 1], [], []>} : vector<896x128xbf16>, vector<128x128xbf16>, vector<896x128xf32> -> vector<896x128xf32>
    %c0_3 = arith.constant 0 : index
    %c0_4 = arith.constant 0 : index
    %3 = vector.load %arg3[%c0_3, %c0_4] : memref<896x1xf32, #tpu.memory_space<vmem>>, vector<896x1xf32>
    %4 = vector.broadcast %3 : vector<896x1xf32> to vector<896x128xf32>
    %5 = arith.addf %2, %4 : vector<896x128xf32>
    %cst_5 = arith.constant 0.000000e+00 : f32
    %6 = vector.broadcast %cst_5 : f32 to vector<896x128xf32>
    %7 = arith.maximumf %5, %6 : vector<896x128xf32>
    %8 = arith.truncf %7 : vector<896x128xf32> to vector<896x128xbf16>
    %c0_6 = arith.constant 0 : index
    %c0_7 = arith.constant 0 : index
    %9 = vector.load %arg4[%c0_6, %c0_7] : memref<384x896xbf16, #tpu.memory_space<vmem>>, vector<384x896xbf16>
    %cst_8 = arith.constant dense<0.000000e+00> : vector<384x128xf32>
    %10 = tpu.matmul %9, %8, %cst_8 {dimension_numbers = #tpu.dot_dimension_numbers<[1], [0], [0], [1], [0, 0, 1, 1], [], []>} : vector<384x896xbf16>, vector<896x128xbf16>, vector<384x128xf32> -> vector<384x128xf32>
    %c0_9 = arith.constant 0 : index
    %c0_10 = arith.constant 0 : index
    %11 = vector.load %arg5[%c0_9, %c0_10] : memref<384x1xf32, #tpu.memory_space<vmem>>, vector<384x1xf32>
    %12 = vector.broadcast %11 : vector<384x1xf32> to vector<384x128xf32>
    %13 = arith.addf %10, %12 : vector<384x128xf32>
    %cst_11 = arith.constant 0.000000e+00 : f32
    %14 = vector.broadcast %cst_11 : f32 to vector<384x128xf32>
    %15 = arith.maximumf %13, %14 : vector<384x128xf32>
    %16 = arith.truncf %15 : vector<384x128xf32> to vector<384x128xbf16>
    %c0_12 = arith.constant 0 : index
    %c0_13 = arith.constant 0 : index
    %17 = vector.load %arg6[%c0_12, %c0_13] : memref<160x384xbf16, #tpu.memory_space<vmem>>, vector<160x384xbf16>
    %cst_14 = arith.constant dense<0.000000e+00> : vector<160x128xf32>
    %18 = tpu.matmul %17, %16, %cst_14 {dimension_numbers = #tpu.dot_dimension_numbers<[1], [0], [0], [1], [0, 0, 1, 1], [], []>} : vector<160x384xbf16>, vector<384x128xbf16>, vector<160x128xf32> -> vector<160x128xf32>
    %c0_15 = arith.constant 0 : index
    %c0_16 = arith.constant 0 : index
    %19 = vector.load %arg7[%c0_15, %c0_16] : memref<160x1xf32, #tpu.memory_space<vmem>>, vector<160x1xf32>
    %20 = vector.broadcast %19 : vector<160x1xf32> to vector<160x128xf32>
    %21 = arith.addf %18, %20 : vector<160x128xf32>
    %cst_17 = arith.constant 0.000000e+00 : f32
    %22 = vector.broadcast %cst_17 : f32 to vector<160x128xf32>
    %23 = arith.maximumf %21, %22 : vector<160x128xf32>
    %c0_18 = arith.constant 0 : index
    %c0_19 = arith.constant 0 : index
    %24 = vector.load %arg8[%c0_18, %c0_19] : memref<8x160xbf16, #tpu.memory_space<vmem>>, vector<8x160xbf16>
    %25 = arith.truncf %23 : vector<160x128xf32> to vector<160x128xbf16>
    %cst_20 = arith.constant dense<0.000000e+00> : vector<8x128xf32>
    %26 = tpu.matmul %24, %25, %cst_20 {dimension_numbers = #tpu.dot_dimension_numbers<[1], [0], [0], [1], [0, 0, 1, 1], [], []>} : vector<8x160xbf16>, vector<160x128xbf16>, vector<8x128xf32> -> vector<8x128xf32>
    %c0_21 = arith.constant 0 : index
    %c0_22 = arith.constant 0 : index
    %27 = vector.load %arg9[%c0_21, %c0_22] : memref<8x1xf32, #tpu.memory_space<vmem>>, vector<8x1xf32>
    %28 = vector.broadcast %27 : vector<8x1xf32> to vector<8x128xf32>
    %29 = arith.addf %26, %28 : vector<8x128xf32>
    %cst_23 = arith.constant dense<0xFF800000> : vector<128xf32>
    %30 = vector.multi_reduction <maximumf>, %29, %cst_23 [0] : vector<8x128xf32> to vector<128xf32>
    %31 = vector.shape_cast %30 : vector<128xf32> to vector<1x128xf32>
    %32 = vector.broadcast %31 : vector<1x128xf32> to vector<8x128xf32>
    %33 = arith.subf %29, %32 : vector<8x128xf32>
    %34 = math.exp %33 : vector<8x128xf32>
    %cst_24 = arith.constant dense<0.000000e+00> : vector<128xf32>
    %35 = vector.multi_reduction <add>, %34, %cst_24 [0] : vector<8x128xf32> to vector<128xf32>
    %36 = vector.shape_cast %35 : vector<128xf32> to vector<1x128xf32>
    %37 = tpu.reciprocal %36 {approx = true} : vector<1x128xf32> -> vector<1x128xf32>
    %38 = vector.broadcast %37 : vector<1x128xf32> to vector<8x128xf32>
    %39 = arith.mulf %34, %38 : vector<8x128xf32>
    %c0_25 = arith.constant 0 : index
    %c0_26 = arith.constant 0 : index
    %40 = vector.load %arg10[%c0_25, %c0_26] : memref<8x128xf32, #tpu.memory_space<vmem>>, vector<8x128xf32>
    tpu.vector_store %arg10[%c0_25, %c0_26], %39 {strides = array<i32>} : memref<8x128xf32, #tpu.memory_space<vmem>>, vector<8x128xf32>,
    return
  }
  func.func @transform_0(%arg0: i32) -> (i32, i32) {
    %c0_i32 = arith.constant 0 : i32
    %c0_i32_0 = arith.constant 0 : i32
    return %c0_i32, %arg0 : i32, i32
  }
  func.func @transform_1(%arg0: i32) -> (i32, i32) {
    %c0_i32 = arith.constant 0 : i32
    %c0_i32_0 = arith.constant 0 : i32
    %c0_i32_1 = arith.constant 0 : i32
    return %c0_i32, %c0_i32_0 : i32, i32
  }
  func.func @transform_2(%arg0: i32) -> (i32, i32) {
    %c0_i32 = arith.constant 0 : i32
    %c0_i32_0 = arith.constant 0 : i32
    %c0_i32_1 = arith.constant 0 : i32
    return %c0_i32, %c0_i32_0 : i32, i32
  }
  func.func @transform_3(%arg0: i32) -> (i32, i32) {
    %c0_i32 = arith.constant 0 : i32
    %c0_i32_0 = arith.constant 0 : i32
    %c0_i32_1 = arith.constant 0 : i32
    return %c0_i32, %c0_i32_0 : i32, i32
  }
  func.func @transform_4(%arg0: i32) -> (i32, i32) {
    %c0_i32 = arith.constant 0 : i32
    %c0_i32_0 = arith.constant 0 : i32
    %c0_i32_1 = arith.constant 0 : i32
    return %c0_i32, %c0_i32_0 : i32, i32
  }
  func.func @transform_5(%arg0: i32) -> (i32, i32) {
    %c0_i32 = arith.constant 0 : i32
    %c0_i32_0 = arith.constant 0 : i32
    %c0_i32_1 = arith.constant 0 : i32
    return %c0_i32, %c0_i32_0 : i32, i32
  }
  func.func @transform_6(%arg0: i32) -> (i32, i32) {
    %c0_i32 = arith.constant 0 : i32
    %c0_i32_0 = arith.constant 0 : i32
    %c0_i32_1 = arith.constant 0 : i32
    return %c0_i32, %c0_i32_0 : i32, i32
  }
  func.func @transform_7(%arg0: i32) -> (i32, i32) {
    %c0_i32 = arith.constant 0 : i32
    %c0_i32_0 = arith.constant 0 : i32
    %c0_i32_1 = arith.constant 0 : i32
    return %c0_i32, %c0_i32_0 : i32, i32
  }
  func.func @transform_8(%arg0: i32) -> (i32, i32) {
    %c0_i32 = arith.constant 0 : i32
    %c0_i32_0 = arith.constant 0 : i32
    %c0_i32_1 = arith.constant 0 : i32
    return %c0_i32, %c0_i32_0 : i32, i32
  }
  func.func @transform_9(%arg0: i32) -> (i32, i32) {
    %c0_i32 = arith.constant 0 : i32
    %c0_i32_0 = arith.constant 0 : i32
    return %c0_i32, %arg0 : i32, i32
  }
}

</mosaic_0001>

<llo_original>
// kernel: cnn_forward.2
$region0: #{cnn_forward.2}
  #allocation0 [shape = 'u32[]', space=smem, size = 0x4, offset = 0x4, fixed_abs, tag = 'smem constant byte address 0x4 - core index']
  #allocation1 [shape = 'u32[144,128]{1,0:T(1,128)}', space=vmem, size = 0x12000, scoped, tag = 'internal scratch']
  #allocation2 [shape = 'u32[2048]{0}', space=vmem, size = 0x2000, scoped, tag = 'scoped memory for cnn_forward.2']
  #allocation3 [shape = 'u32[2048]{0}', space=vmem, size = 0x2000, scoped, tag = 'scoped memory for cnn_forward.2']
  #allocation4 [shape = 'u32[2048]{0}', space=vmem, size = 0x2000, scoped, tag = 'scoped memory for cnn_forward.2']
  #allocation5 [shape = 'u32[2048]{0}', space=vmem, size = 0x2000, scoped, tag = 'scoped memory for cnn_forward.2']
  #allocation6 [shape = 'u32[2048]{0}', space=vmem, size = 0x2000, scoped, tag = 'scoped memory for cnn_forward.2']
  %s0 = inlined_call_operand.hbm [shape: bf16[896,128], index: 0, kind: input, shape index: {}]
  %s1 = inlined_call_operand.vmem [shape: f32[896,1], index: 1, kind: input, shape index: {}]
  %s2 = inlined_call_operand.vmem [shape: bf16[384,896], index: 2, kind: input, shape index: {}]
  %s3 = inlined_call_operand.vmem [shape: f32[384,1], index: 3, kind: input, shape index: {}]
  %s4 = inlined_call_operand.hbm [shape: bf16[160,384], index: 4, kind: input, shape index: {}]
  %s5 = inlined_call_operand.vmem [shape: f32[160,1], index: 5, kind: input, shape index: {}]
  %s6 = inlined_call_operand.vmem [shape: bf16[8,160], index: 6, kind: input, shape index: {}]
  %s7 = inlined_call_operand.vmem [shape: f32[8,1], index: 7, kind: input, shape index: {}]
  %s8 = inlined_call_operand.vmem [shape: bf16[128,2], index: 8, kind: input, shape index: {}]
  %s9 = inlined_call_operand.<no memory space> [shape: bf16[], index: 9, kind: input, shape index: {}]
  %s10 = inlined_call_operand.vmem [shape: f32[8,128], index: 10, kind: output, shape index: {}]
  %s11 = sld [smem:[#allocation0]]
  $region54: #{cnn_forward.2} parent=0
    _
  %s13 = ssub.s32 1, %s11
  %s14 = scalar_select 0, %s13, %s11
  %v15 = vstv %s9
  %v16 = vunpack.i.l.bf16 %v15
  %v18 = vunpack.i.h.bf16 %v15
  $region1: #{cnn_forward.2} parent=0
    #allocation7 [shape = 'u8[229376]{0}', space=vmem, size = 0x38000, scoped, tag = 'input window, operand 1, single buffered']
    #allocation8 [shape = 's32[1]{0}', space=sflag, size = 0x4, scoped, tag = 'scoped memory for cnn_forward.2']
    #allocation9 [shape = 'u8[122880]{0}', space=vmem, size = 0x1e000, scoped, tag = 'input window, operand 5, single buffered']
    #allocation10 [shape = 's32[1]{0}', space=sflag, size = 0x4, scoped, tag = 'scoped memory for cnn_forward.2']
    #allocation11 [shape = 'u8[32768]{0}', space=vmem, size = 0x8000, dematerialized = true, scoped, tag = 'FusionAdapter Buffer %fusion.1 = bf16[128,128]{1,0:T(8,128)(2,1)} fusion(%param_8.1, %param_9), kind=kLoop, calls=%fused_computation.1.clone, metadata={op_name="jit(cnn_forward)/jit(_pad)/pad" stack_frame_id=9}']
    %20 = vsyncpa [#allocation8], 0
    %21 = vsyncpa [#allocation10], 0
    // Predicated region
    $region2: #{cnn_forward.2} parent=1 // pred_check
      _
    $region3: #{cnn_forward.2} parent=1 // pred_check_branch
      %23 = sbr.rel (0) target = $region5
    $region4: #{cnn_forward.2} parent=1 // pred_region
      _
    $region5: #{cnn_forward.2} parent=1 // pred_fallthru
      _
    // Predicated region
    $region6: #{cnn_forward.2} parent=1 // pred_check
      _
    $region7: #{cnn_forward.2} parent=1 // pred_check_branch
      %25 = sbr.rel (0) target = $region9
    $region8: #{cnn_forward.2} parent=1 // pred_region
      %s27 = ssub.s32 7168, 7168
      %28 = vsyncadd [#allocation8], %s27
      %s29 = sshll.u32 [#allocation7], 4
      %s30 = int_to_ptr.vmem [resolvable:$true] %s29
      %35 = dma.hbm_to_vmem [thread:$0]  %s0, 7168, %s30, [#allocation8], 64, 64, 4
    $region9: #{cnn_forward.2} parent=1 // pred_fallthru
      _
    // Predicated region
    $region10: #{cnn_forward.2} parent=1 // pred_check
      _
    $region11: #{cnn_forward.2} parent=1 // pred_check_branch
      %37 = sbr.rel (0) target = $region13
    $region12: #{cnn_forward.2} parent=1 // pred_region
      _
    $region13: #{cnn_forward.2} parent=1 // pred_fallthru
      _
    // Predicated region
    $region14: #{cnn_forward.2} parent=1 // pred_check
      _
    $region15: #{cnn_forward.2} parent=1 // pred_check_branch
      %39 = sbr.rel (0) target = $region17
    $region16: #{cnn_forward.2} parent=1 // pred_region
      _
    $region17: #{cnn_forward.2} parent=1 // pred_fallthru
      _
    // Predicated region
    $region18: #{cnn_forward.2} parent=1 // pred_check
      _
    $region19: #{cnn_forward.2} parent=1 // pred_check_branch
      %41 = sbr.rel (0) target = $region21
    $region20: #{cnn_forward.2} parent=1 // pred_region
      _
    $region21: #{cnn_forward.2} parent=1 // pred_fallthru
      _
    // Predicated region
    $region22: #{cnn_forward.2} parent=1 // pred_check
      _
    $region23: #{cnn_forward.2} parent=1 // pred_check_branch
      %43 = sbr.rel (0) target = $region25
    $region24: #{cnn_forward.2} parent=1 // pred_region
      %s45 = ssub.s32 3840, 3840
      %46 = vsyncadd [#allocation10], %s45
      %s47 = sshll.u32 [#allocation9], 4
      %s48 = int_to_ptr.vmem [resolvable:$true] %s47
      %53 = dma.hbm_to_vmem [thread:$0]  %s4, 3840, %s48, [#allocation10], 192, 192, 12
    $region25: #{cnn_forward.2} parent=1 // pred_fallthru
      _
    // Predicated region
    $region26: #{cnn_forward.2} parent=1 // pred_check
      _
    $region27: #{cnn_forward.2} parent=1 // pred_check_branch
      %55 = sbr.rel (0) target = $region29
    $region28: #{cnn_forward.2} parent=1 // pred_region
      _
    $region29: #{cnn_forward.2} parent=1 // pred_fallthru
      _
    // Predicated region
    $region30: #{cnn_forward.2} parent=1 // pred_check
      _
    $region31: #{cnn_forward.2} parent=1 // pred_check_branch
      %57 = sbr.rel (0) target = $region33
    $region32: #{cnn_forward.2} parent=1 // pred_region
      _
    $region33: #{cnn_forward.2} parent=1 // pred_fallthru
      _
    // Predicated region
    $region34: #{cnn_forward.2} parent=1 // pred_check
      _
    $region35: #{cnn_forward.2} parent=1 // pred_check_branch
      %59 = sbr.rel (0) target = $region37
    $region36: #{cnn_forward.2} parent=1 // pred_region
      _
    $region37: #{cnn_forward.2} parent=1 // pred_fallthru
      _
    // Predicated region
    $region38: #{cnn_forward.2} parent=1 // pred_check
      _
    $region39: #{cnn_forward.2} parent=1 // pred_check_branch
      %61 = sbr.rel (0) target = $region41
    $region40: #{cnn_forward.2} parent=1 // pred_region
      %62 = dma.done [#allocation8], 7168
    $region41: #{cnn_forward.2} parent=1 // pred_fallthru
      _
    // Predicated region
    $region42: #{cnn_forward.2} parent=1 // pred_check
      _
    $region43: #{cnn_forward.2} parent=1 // pred_check_branch
      %64 = sbr.rel (0) target = $region45
    $region44: #{cnn_forward.2} parent=1 // pred_region
      %65 = dma.done [#allocation10], 3840
    $region45: #{cnn_forward.2} parent=1 // pred_fallthru
      _
    %s67 = sor.u32 255, 127
    %s68 = sand.u32 %s67, 85
    %s69 = sshrl.u32 %s68, 1
    %s70 = sor.u32 %s68, %s69
    %s71 = sand.u32 51, %s70
    %s72 = sshrl.u32 %s71, 2
    %s73 = sor.u32 %s71, %s72
    %s74 = sand.u32 15, %s73
    %v75 = vld [vmem:[%s8] sm:%s74]
    %v76 = vunpack.c.l.bf16 %v75
    %v77 = vunpack.c.h.bf16 %v75
    %v78 = vlaneseq
    %v79 = vand.u32 %v78, 127
    %vm81 = vcmp.lt.s32.totalorder %v79, 2
    %v82 = vsel %vm81, %v76, %v16
    %v83 = vpack.c.bf16 0.0, %v82
    %85 = vst [vmem:[#allocation11] sm:$0xf] %v83
    %s86 = scalar_lea.vmem %s8, 4
    %s88 = sor.u32 255, 127
    %s89 = sand.u32 %s88, 85
    %s90 = sshrl.u32 %s89, 1
    %s91 = sor.u32 %s89, %s90
    %s92 = sand.u32 51, %s91
    %s93 = sshrl.u32 %s92, 2
    %s94 = sor.u32 %s92, %s93
    %s95 = sand.u32 15, %s94
    %v96 = vld [vmem:[%s86] sm:%s95]
    %v97 = vunpack.c.l.bf16 %v96
    %v98 = vunpack.c.h.bf16 %v96
    %v99 = vlaneseq
    %v100 = vand.u32 %v99, 127
    %vm102 = vcmp.lt.s32.totalorder %v100, 2
    %v103 = vsel %vm102, %v97, %v16
    %s104 = scalar_lea.vmem [#allocation11], 4
    %v105 = vpack.c.bf16 0.0, %v103
    %107 = vst [vmem:[%s104] sm:$0xf] %v105
    %s108 = scalar_lea.vmem %s8, 8
    %s110 = sor.u32 255, 127
    %s111 = sand.u32 %s110, 85
    %s112 = sshrl.u32 %s111, 1
    %s113 = sor.u32 %s111, %s112
    %s114 = sand.u32 51, %s113
    %s115 = sshrl.u32 %s114, 2
    %s116 = sor.u32 %s114, %s115
    %s117 = sand.u32 15, %s116
    %v118 = vld [vmem:[%s108] sm:%s117]
    %v119 = vunpack.c.l.bf16 %v118
    %v120 = vunpack.c.h.bf16 %v118
    %v121 = vlaneseq
    %v122 = vand.u32 %v121, 127
    %vm124 = vcmp.lt.s32.totalorder %v122, 2
    %v125 = vsel %vm124, %v119, %v16
    %s126 = scalar_lea.vmem [#allocation11], 8
    %v127 = vpack.c.bf16 0.0, %v125
    %129 = vst [vmem:[%s126] sm:$0xf] %v127
    %s130 = scalar_lea.vmem %s8, 12
    %s132 = sor.u32 255, 127
    %s133 = sand.u32 %s132, 85
    %s134 = sshrl.u32 %s133, 1
    %s135 = sor.u32 %s133, %s134
    %s136 = sand.u32 51, %s135
    %s137 = sshrl.u32 %s136, 2
    %s138 = sor.u32 %s136, %s137
    %s139 = sand.u32 15, %s138
    %v140 = vld [vmem:[%s130] sm:%s139]
    %v141 = vunpack.c.l.bf16 %v140
    %v142 = vunpack.c.h.bf16 %v140
    %v143 = vlaneseq
    %v144 = vand.u32 %v143, 127
    %vm146 = vcmp.lt.s32.totalorder %v144, 2
    %v147 = vsel %vm146, %v141, %v16
    %s148 = scalar_lea.vmem [#allocation11], 12
    %v149 = vpack.c.bf16 0.0, %v147
    %151 = vst [vmem:[%s148] sm:$0xf] %v149
    %s152 = scalar_lea.vmem %s8, 16
    %s154 = sor.u32 255, 127
    %s155 = sand.u32 %s154, 85
    %s156 = sshrl.u32 %s155, 1
    %s157 = sor.u32 %s155, %s156
    %s158 = sand.u32 51, %s157
    %s159 = sshrl.u32 %s158, 2
    %s160 = sor.u32 %s158, %s159
    %s161 = sand.u32 15, %s160
    %v162 = vld [vmem:[%s152] sm:%s161]
    %v163 = vunpack.c.l.bf16 %v162
    %v164 = vunpack.c.h.bf16 %v162
    %v165 = vlaneseq
    %v166 = vand.u32 %v165, 127
    %vm168 = vcmp.lt.s32.totalorder %v166, 2
    %v169 = vsel %vm168, %v163, %v16
    %s170 = scalar_lea.vmem [#allocation11], 16
    %v171 = vpack.c.bf16 0.0, %v169
    %173 = vst [vmem:[%s170] sm:$0xf] %v171
    %s174 = scalar_lea.vmem %s8, 20
    %s176 = sor.u32 255, 127
    %s177 = sand.u32 %s176, 85
    %s178 = sshrl.u32 %s177, 1
    %s179 = sor.u32 %s177, %s178
    %s180 = sand.u32 51, %s179
    %s181 = sshrl.u32 %s180, 2
    %s182 = sor.u32 %s180, %s181
    %s183 = sand.u32 15, %s182
    %v184 = vld [vmem:[%s174] sm:%s183]
    %v185 = vunpack.c.l.bf16 %v184
    %v186 = vunpack.c.h.bf16 %v184
    %v187 = vlaneseq
    %v188 = vand.u32 %v187, 127
    %vm190 = vcmp.lt.s32.totalorder %v188, 2
    %v191 = vsel %vm190, %v185, %v16
    %s192 = scalar_lea.vmem [#allocation11], 20
    %v193 = vpack.c.bf16 0.0, %v191
    %195 = vst [vmem:[%s192] sm:$0xf] %v193
    %s196 = scalar_lea.vmem %s8, 24
    %s198 = sor.u32 255, 127
    %s199 = sand.u32 %s198, 85
    %s200 = sshrl.u32 %s199, 1
    %s201 = sor.u32 %s199, %s200
    %s202 = sand.u32 51, %s201
    %s203 = sshrl.u32 %s202, 2
    %s204 = sor.u32 %s202, %s203
    %s205 = sand.u32 15, %s204
    %v206 = vld [vmem:[%s196] sm:%s205]
    %v207 = vunpack.c.l.bf16 %v206
    %v208 = vunpack.c.h.bf16 %v206
    %v209 = vlaneseq
    %v210 = vand.u32 %v209, 127
    %vm212 = vcmp.lt.s32.totalorder %v210, 2
    %v213 = vsel %vm212, %v207, %v16
    %s214 = scalar_lea.vmem [#allocation11], 24
    %v215 = vpack.c.bf16 0.0, %v213
    %217 = vst [vmem:[%s214] sm:$0xf] %v215
    %s218 = scalar_lea.vmem %s8, 28
    %s220 = sor.u32 255, 127
    %s221 = sand.u32 %s220, 85
    %s222 = sshrl.u32 %s221, 1
    %s223 = sor.u32 %s221, %s222
    %s224 = sand.u32 51, %s223
    %s225 = sshrl.u32 %s224, 2
    %s226 = sor.u32 %s224, %s225
    %s227 = sand.u32 15, %s226
    %v228 = vld [vmem:[%s218] sm:%s227]
    %v229 = vunpack.c.l.bf16 %v228
    %v230 = vunpack.c.h.bf16 %v228
    %v231 = vlaneseq
    %v232 = vand.u32 %v231, 127
    %vm234 = vcmp.lt.s32.totalorder %v232, 2
    %v235 = vsel %vm234, %v229, %v16
    %s236 = scalar_lea.vmem [#allocation11], 28
    %v237 = vpack.c.bf16 0.0, %v235
    %239 = vst [vmem:[%s236] sm:$0xf] %v237
    %s240 = scalar_lea.vmem %s8, 32
    %s242 = sor.u32 255, 127
    %s243 = sand.u32 %s242, 85
    %s244 = sshrl.u32 %s243, 1
    %s245 = sor.u32 %s243, %s244
    %s246 = sand.u32 51, %s245
    %s247 = sshrl.u32 %s246, 2
    %s248 = sor.u32 %s246, %s247
    %s249 = sand.u32 15, %s248
    %v250 = vld [vmem:[%s240] sm:%s249]
    %v251 = vunpack.c.l.bf16 %v250
    %v252 = vunpack.c.h.bf16 %v250
    %v253 = vlaneseq
    %v254 = vand.u32 %v253, 127
    %vm256 = vcmp.lt.s32.totalorder %v254, 2
    %v257 = vsel %vm256, %v251, %v16
    %s258 = scalar_lea.vmem [#allocation11], 32
    %v259 = vpack.c.bf16 0.0, %v257
    %261 = vst [vmem:[%s258] sm:$0xf] %v259
    %s262 = scalar_lea.vmem %s8, 36
    %s264 = sor.u32 255, 127
    %s265 = sand.u32 %s264, 85
    %s266 = sshrl.u32 %s265, 1
    %s267 = sor.u32 %s265, %s266
    %s268 = sand.u32 51, %s267
    %s269 = sshrl.u32 %s268, 2
    %s270 = sor.u32 %s268, %s269
    %s271 = sand.u32 15, %s270
    %v272 = vld [vmem:[%s262] sm:%s271]
    %v273 = vunpack.c.l.bf16 %v272
    %v274 = vunpack.c.h.bf16 %v272
    %v275 = vlaneseq
    %v276 = vand.u32 %v275, 127
    %vm278 = vcmp.lt.s32.totalorder %v276, 2
    %v279 = vsel %vm278, %v273, %v16
    %s280 = scalar_lea.vmem [#allocation11], 36
    %v281 = vpack.c.bf16 0.0, %v279
    %283 = vst [vmem:[%s280] sm:$0xf] %v281
    %s284 = scalar_lea.vmem %s8, 40
    %s286 = sor.u32 255, 127
    %s287 = sand.u32 %s286, 85
    %s288 = sshrl.u32 %s287, 1
    %s289 = sor.u32 %s287, %s288
    %s290 = sand.u32 51, %s289
    %s291 = sshrl.u32 %s290, 2
    %s292 = sor.u32 %s290, %s291
    %s293 = sand.u32 15, %s292
    %v294 = vld [vmem:[%s284] sm:%s293]
    %v295 = vunpack.c.l.bf16 %v294
    %v296 = vunpack.c.h.bf16 %v294
    %v297 = vlaneseq
    %v298 = vand.u32 %v297, 127
    %vm300 = vcmp.lt.s32.totalorder %v298, 2
    %v301 = vsel %vm300, %v295, %v16
    %s302 = scalar_lea.vmem [#allocation11], 40
    %v303 = vpack.c.bf16 0.0, %v301
    %305 = vst [vmem:[%s302] sm:$0xf] %v303
    %s306 = scalar_lea.vmem %s8, 44
    %s308 = sor.u32 255, 127
    %s309 = sand.u32 %s308, 85
    %s310 = sshrl.u32 %s309, 1
    %s311 = sor.u32 %s309, %s310
    %s312 = sand.u32 51, %s311
    %s313 = sshrl.u32 %s312, 2
    %s314 = sor.u32 %s312, %s313
    %s315 = sand.u32 15, %s314
    %v316 = vld [vmem:[%s306] sm:%s315]
    %v317 = vunpack.c.l.bf16 %v316
    %v318 = vunpack.c.h.bf16 %v316
    %v319 = vlaneseq
    %v320 = vand.u32 %v319, 127
    %vm322 = vcmp.lt.s32.totalorder %v320, 2
    %v323 = vsel %vm322, %v317, %v16
    %s324 = scalar_lea.vmem [#allocation11], 44
    %v325 = vpack.c.bf16 0.0, %v323
    %327 = vst [vmem:[%s324] sm:$0xf] %v325
    %s328 = scalar_lea.vmem %s8, 48
    %s330 = sor.u32 255, 127
    %s331 = sand.u32 %s330, 85
    %s332 = sshrl.u32 %s331, 1
    %s333 = sor.u32 %s331, %s332
    %s334 = sand.u32 51, %s333
    %s335 = sshrl.u32 %s334, 2
    %s336 = sor.u32 %s334, %s335
    %s337 = sand.u32 15, %s336
    %v338 = vld [vmem:[%s328] sm:%s337]
    %v339 = vunpack.c.l.bf16 %v338
    %v340 = vunpack.c.h.bf16 %v338
    %v341 = vlaneseq
    %v342 = vand.u32 %v341, 127
    %vm344 = vcmp.lt.s32.totalorder %v342, 2
    %v345 = vsel %vm344, %v339, %v16
    %s346 = scalar_lea.vmem [#allocation11], 48
    %v347 = vpack.c.bf16 0.0, %v345
    %349 = vst [vmem:[%s346] sm:$0xf] %v347
    %s350 = scalar_lea.vmem %s8, 52
    %s352 = sor.u32 255, 127
    %s353 = sand.u32 %s352, 85
    %s354 = sshrl.u32 %s353, 1
    %s355 = sor.u32 %s353, %s354
    %s356 = sand.u32 51, %s355
    %s357 = sshrl.u32 %s356, 2
    %s358 = sor.u32 %s356, %s357
    %s359 = sand.u32 15, %s358
    %v360 = vld [vmem:[%s350] sm:%s359]
    %v361 = vunpack.c.l.bf16 %v360
    %v362 = vunpack.c.h.bf16 %v360
    %v363 = vlaneseq
    %v364 = vand.u32 %v363, 127
    %vm366 = vcmp.lt.s32.totalorder %v364, 2
    %v367 = vsel %vm366, %v361, %v16
    %s368 = scalar_lea.vmem [#allocation11], 52
    %v369 = vpack.c.bf16 0.0, %v367
    %371 = vst [vmem:[%s368] sm:$0xf] %v369
    %s372 = scalar_lea.vmem %s8, 56
    %s374 = sor.u32 255, 127
    %s375 = sand.u32 %s374, 85
    %s376 = sshrl.u32 %s375, 1
    %s377 = sor.u32 %s375, %s376
    %s378 = sand.u32 51, %s377
    %s379 = sshrl.u32 %s378, 2
    %s380 = sor.u32 %s378, %s379
    %s381 = sand.u32 15, %s380
    %v382 = vld [vmem:[%s372] sm:%s381]
    %v383 = vunpack.c.l.bf16 %v382
    %v384 = vunpack.c.h.bf16 %v382
    %v385 = vlaneseq
    %v386 = vand.u32 %v385, 127
    %vm388 = vcmp.lt.s32.totalorder %v386, 2
    %v389 = vsel %vm388, %v383, %v16
    %s390 = scalar_lea.vmem [#allocation11], 56
    %v391 = vpack.c.bf16 0.0, %v389
    %393 = vst [vmem:[%s390] sm:$0xf] %v391
    %s394 = scalar_lea.vmem %s8, 60
    %s396 = sor.u32 255, 127
    %s397 = sand.u32 %s396, 85
    %s398 = sshrl.u32 %s397, 1
    %s399 = sor.u32 %s397, %s398
    %s400 = sand.u32 51, %s399
    %s401 = sshrl.u32 %s400, 2
    %s402 = sor.u32 %s400, %s401
    %s403 = sand.u32 15, %s402
    %v404 = vld [vmem:[%s394] sm:%s403]
    %v405 = vunpack.c.l.bf16 %v404
    %v406 = vunpack.c.h.bf16 %v404
    %v407 = vlaneseq
    %v408 = vand.u32 %v407, 127
    %vm410 = vcmp.lt.s32.totalorder %v408, 2
    %v411 = vsel %vm410, %v405, %v16
    %s412 = scalar_lea.vmem [#allocation11], 60
    %v413 = vpack.c.bf16 0.0, %v411
    %415 = vst [vmem:[%s412] sm:$0xf] %v413
    %v417 = vld [vmem:[#allocation11] sm:$0xf]
    %v418 = vld [vmem:[#allocation11 + $0x4] sm:$0xf]
    %v419 = vld [vmem:[#allocation11 + $0x8] sm:$0xf]
    %v420 = vld [vmem:[#allocation11 + $0xc] sm:$0xf]
    %v421 = vld [vmem:[#allocation11 + $0x10] sm:$0xf]
    %v422 = vld [vmem:[#allocation11 + $0x14] sm:$0xf]
    %v423 = vld [vmem:[#allocation11 + $0x18] sm:$0xf]
    %v424 = vld [vmem:[#allocation11 + $0x1c] sm:$0xf]
    %v425 = vld [vmem:[#allocation11 + $0x20] sm:$0xf]
    %v426 = vld [vmem:[#allocation11 + $0x24] sm:$0xf]
    %v427 = vld [vmem:[#allocation11 + $0x28] sm:$0xf]
    %v428 = vld [vmem:[#allocation11 + $0x2c] sm:$0xf]
    %v429 = vld [vmem:[#allocation11 + $0x30] sm:$0xf]
    %v430 = vld [vmem:[#allocation11 + $0x34] sm:$0xf]
    %v431 = vld [vmem:[#allocation11 + $0x38] sm:$0xf]
    %v432 = vld [vmem:[#allocation11 + $0x3c] sm:$0xf]
    %v433 = vld [vmem:[#allocation7] sm:$0xf]
    %v434 = vld [vmem:[#allocation7 + $0x4] sm:$0xf]
    %v435 = vld [vmem:[#allocation7 + $0x8] sm:$0xf]
    %v436 = vld [vmem:[#allocation7 + $0xc] sm:$0xf]
    %v437 = vld [vmem:[#allocation7 + $0x10] sm:$0xf]
    %v438 = vld [vmem:[#allocation7 + $0x14] sm:$0xf]
    %v439 = vld [vmem:[#allocation7 + $0x18] sm:$0xf]
    %v440 = vld [vmem:[#allocation7 + $0x1c] sm:$0xf]
    %v441 = vld [vmem:[#allocation7 + $0x20] sm:$0xf]
    %v442 = vld [vmem:[#allocation7 + $0x24] sm:$0xf]
    %v443 = vld [vmem:[#allocation7 + $0x28] sm:$0xf]
    %v444 = vld [vmem:[#allocation7 + $0x2c] sm:$0xf]
    %v445 = vld [vmem:[#allocation7 + $0x30] sm:$0xf]
    %v446 = vld [vmem:[#allocation7 + $0x34] sm:$0xf]
    %v447 = vld [vmem:[#allocation7 + $0x38] sm:$0xf]
    %v448 = vld [vmem:[#allocation7 + $0x3c] sm:$0xf]
    %v449 = vld [vmem:[#allocation7 + $0x40] sm:$0xf]
    %v450 = vld [vmem:[#allocation7 + $0x44] sm:$0xf]
    %v451 = vld [vmem:[#allocation7 + $0x48] sm:$0xf]
    %v452 = vld [vmem:[#allocation7 + $0x4c] sm:$0xf]
    %v453 = vld [vmem:[#allocation7 + $0x50] sm:$0xf]
    %v454 = vld [vmem:[#allocation7 + $0x54] sm:$0xf]
    %v455 = vld [vmem:[#allocation7 + $0x58] sm:$0xf]
    %v456 = vld [vmem:[#allocation7 + $0x5c] sm:$0xf]
    %v457 = vld [vmem:[#allocation7 + $0x60] sm:$0xf]
    %v458 = vld [vmem:[#allocation7 + $0x64] sm:$0xf]
    %v459 = vld [vmem:[#allocation7 + $0x68] sm:$0xf]
    %v460 = vld [vmem:[#allocation7 + $0x6c] sm:$0xf]
    %v461 = vld [vmem:[#allocation7 + $0x70] sm:$0xf]
    %v462 = vld [vmem:[#allocation7 + $0x74] sm:$0xf]
    %v463 = vld [vmem:[#allocation7 + $0x78] sm:$0xf]
    %v464 = vld [vmem:[#allocation7 + $0x7c] sm:$0xf]
    %v465 = vld [vmem:[#allocation7 + $0x80] sm:$0xf]
    %v466 = vld [vmem:[#allocation7 + $0x84] sm:$0xf]
    %v467 = vld [vmem:[#allocation7 + $0x88] sm:$0xf]
    %v468 = vld [vmem:[#allocation7 + $0x8c] sm:$0xf]
    %v469 = vld [vmem:[#allocation7 + $0x90] sm:$0xf]
    %v470 = vld [vmem:[#allocation7 + $0x94] sm:$0xf]
    %v471 = vld [vmem:[#allocation7 + $0x98] sm:$0xf]
    %v472 = vld [vmem:[#allocation7 + $0x9c] sm:$0xf]
    %v473 = vld [vmem:[#allocation7 + $0xa0] sm:$0xf]
    %v474 = vld [vmem:[#allocation7 + $0xa4] sm:$0xf]
    %v475 = vld [vmem:[#allocation7 + $0xa8] sm:$0xf]
    %v476 = vld [vmem:[#allocation7 + $0xac] sm:$0xf]
    %v477 = vld [vmem:[#allocation7 + $0xb0] sm:$0xf]
    %v478 = vld [vmem:[#allocation7 + $0xb4] sm:$0xf]
    %v479 = vld [vmem:[#allocation7 + $0xb8] sm:$0xf]
    %v480 = vld [vmem:[#allocation7 + $0xbc] sm:$0xf]
    %v481 = vld [vmem:[#allocation7 + $0xc0] sm:$0xf]
    %v482 = vld [vmem:[#allocation7 + $0xc4] sm:$0xf]
    %v483 = vld [vmem:[#allocation7 + $0xc8] sm:$0xf]
    %v484 = vld [vmem:[#allocation7 + $0xcc] sm:$0xf]
    %v485 = vld [vmem:[#allocation7 + $0xd0] sm:$0xf]
    %v486 = vld [vmem:[#allocation7 + $0xd4] sm:$0xf]
    %v487 = vld [vmem:[#allocation7 + $0xd8] sm:$0xf]
    %v488 = vld [vmem:[#allocation7 + $0xdc] sm:$0xf]
    %v489 = vld [vmem:[#allocation7 + $0xe0] sm:$0xf]
    %v490 = vld [vmem:[#allocation7 + $0xe4] sm:$0xf]
    %v491 = vld [vmem:[#allocation7 + $0xe8] sm:$0xf]
    %v492 = vld [vmem:[#allocation7 + $0xec] sm:$0xf]
    %v493 = vld [vmem:[#allocation7 + $0xf0] sm:$0xf]
    %v494 = vld [vmem:[#allocation7 + $0xf4] sm:$0xf]
    %v495 = vld [vmem:[#allocation7 + $0xf8] sm:$0xf]
    %v496 = vld [vmem:[#allocation7 + $0xfc] sm:$0xf]
    %v497 = vld [vmem:[#allocation7 + $0x100] sm:$0xf]
    %v498 = vld [vmem:[#allocation7 + $0x104] sm:$0xf]
    %v499 = vld [vmem:[#allocation7 + $0x108] sm:$0xf]
    %v500 = vld [vmem:[#allocation7 + $0x10c] sm:$0xf]
    %v501 = vld [vmem:[#allocation7 + $0x110] sm:$0xf]
    %v502 = vld [vmem:[#allocation7 + $0x114] sm:$0xf]
    %v503 = vld [vmem:[#allocation7 + $0x118] sm:$0xf]
    %v504 = vld [vmem:[#allocation7 + $0x11c] sm:$0xf]
    %v505 = vld [vmem:[#allocation7 + $0x120] sm:$0xf]
    %v506 = vld [vmem:[#allocation7 + $0x124] sm:$0xf]
    %v507 = vld [vmem:[#allocation7 + $0x128] sm:$0xf]
    %v508 = vld [vmem:[#allocation7 + $0x12c] sm:$0xf]
    %v509 = vld [vmem:[#allocation7 + $0x130] sm:$0xf]
    %v510 = vld [vmem:[#allocation7 + $0x134] sm:$0xf]
    %v511 = vld [vmem:[#allocation7 + $0x138] sm:$0xf]
    %v512 = vld [vmem:[#allocation7 + $0x13c] sm:$0xf]
    %v513 = vld [vmem:[#allocation7 + $0x140] sm:$0xf]
    %v514 = vld [vmem:[#allocation7 + $0x144] sm:$0xf]
    %v515 = vld [vmem:[#allocation7 + $0x148] sm:$0xf]
    %v516 = vld [vmem:[#allocation7 + $0x14c] sm:$0xf]
    %v517 = vld [vmem:[#allocation7 + $0x150] sm:$0xf]
    %v518 = vld [vmem:[#allocation7 + $0x154] sm:$0xf]
    %v519 = vld [vmem:[#allocation7 + $0x158] sm:$0xf]
    %v520 = vld [vmem:[#allocation7 + $0x15c] sm:$0xf]
    %v521 = vld [vmem:[#allocation7 + $0x160] sm:$0xf]
    %v522 = vld [vmem:[#allocation7 + $0x164] sm:$0xf]
    %v523 = vld [vmem:[#allocation7 + $0x168] sm:$0xf]
    %v524 = vld [vmem:[#allocation7 + $0x16c] sm:$0xf]
    %v525 = vld [vmem:[#allocation7 + $0x170] sm:$0xf]
    %v526 = vld [vmem:[#allocation7 + $0x174] sm:$0xf]
    %v527 = vld [vmem:[#allocation7 + $0x178] sm:$0xf]
    %v528 = vld [vmem:[#allocation7 + $0x17c] sm:$0xf]
    %v529 = vld [vmem:[#allocation7 + $0x180] sm:$0xf]
    %v530 = vld [vmem:[#allocation7 + $0x184] sm:$0xf]
    %v531 = vld [vmem:[#allocation7 + $0x188] sm:$0xf]
    %v532 = vld [vmem:[#allocation7 + $0x18c] sm:$0xf]
    %v533 = vld [vmem:[#allocation7 + $0x190] sm:$0xf]
    %v534 = vld [vmem:[#allocation7 + $0x194] sm:$0xf]
    %v535 = vld [vmem:[#allocation7 + $0x198] sm:$0xf]
    %v536 = vld [vmem:[#allocation7 + $0x19c] sm:$0xf]
    %v537 = vld [vmem:[#allocation7 + $0x1a0] sm:$0xf]
    %v538 = vld [vmem:[#allocation7 + $0x1a4] sm:$0xf]
    %v539 = vld [vmem:[#allocation7 + $0x1a8] sm:$0xf]
    %v540 = vld [vmem:[#allocation7 + $0x1ac] sm:$0xf]
    %v541 = vld [vmem:[#allocation7 + $0x1b0] sm:$0xf]
    %v542 = vld [vmem:[#allocation7 + $0x1b4] sm:$0xf]
    %v543 = vld [vmem:[#allocation7 + $0x1b8] sm:$0xf]
    %v544 = vld [vmem:[#allocation7 + $0x1bc] sm:$0xf]
    %v545 = vld [vmem:[%s1] sm:$0xff]
    %v546 = vld [vmem:[%s1 + $0x8] sm:$0xff]
    %v547 = vld [vmem:[%s1 + $0x10] sm:$0xff]
    %v548 = vld [vmem:[%s1 + $0x18] sm:$0xff]
    %v549 = vld [vmem:[%s1 + $0x20] sm:$0xff]
    %v550 = vld [vmem:[%s1 + $0x28] sm:$0xff]
    %v551 = vld [vmem:[%s1 + $0x30] sm:$0xff]
    %v552 = vld [vmem:[%s1 + $0x38] sm:$0xff]
    %v553 = vld [vmem:[%s1 + $0x40] sm:$0xff]
    %v554 = vld [vmem:[%s1 + $0x48] sm:$0xff]
    %v555 = vld [vmem:[%s1 + $0x50] sm:$0xff]
    %v556 = vld [vmem:[%s1 + $0x58] sm:$0xff]
    %v557 = vld [vmem:[%s1 + $0x60] sm:$0xff]
    %v558 = vld [vmem:[%s1 + $0x68] sm:$0xff]
    %v559 = vld [vmem:[%s1 + $0x70] sm:$0xff]
    %v560 = vld [vmem:[%s1 + $0x78] sm:$0xff]
    %v561 = vld [vmem:[%s1 + $0x80] sm:$0xff]
    %v562 = vld [vmem:[%s1 + $0x88] sm:$0xff]
    %v563 = vld [vmem:[%s1 + $0x90] sm:$0xff]
    %v564 = vld [vmem:[%s1 + $0x98] sm:$0xff]
    %v565 = vld [vmem:[%s1 + $0xa0] sm:$0xff]
    %v566 = vld [vmem:[%s1 + $0xa8] sm:$0xff]
    %v567 = vld [vmem:[%s1 + $0xb0] sm:$0xff]
    %v568 = vld [vmem:[%s1 + $0xb8] sm:$0xff]
    %v569 = vld [vmem:[%s1 + $0xc0] sm:$0xff]
    %v570 = vld [vmem:[%s1 + $0xc8] sm:$0xff]
    %v571 = vld [vmem:[%s1 + $0xd0] sm:$0xff]
    %v572 = vld [vmem:[%s1 + $0xd8] sm:$0xff]
    %v573 = vld [vmem:[%s1 + $0xe0] sm:$0xff]
    %v574 = vld [vmem:[%s1 + $0xe8] sm:$0xff]
    %v575 = vld [vmem:[%s1 + $0xf0] sm:$0xff]
    %v576 = vld [vmem:[%s1 + $0xf8] sm:$0xff]
    %v577 = vld [vmem:[%s1 + $0x100] sm:$0xff]
    %v578 = vld [vmem:[%s1 + $0x108] sm:$0xff]
    %v579 = vld [vmem:[%s1 + $0x110] sm:$0xff]
    %v580 = vld [vmem:[%s1 + $0x118] sm:$0xff]
    %v581 = vld [vmem:[%s1 + $0x120] sm:$0xff]
    %v582 = vld [vmem:[%s1 + $0x128] sm:$0xff]
    %v583 = vld [vmem:[%s1 + $0x130] sm:$0xff]
    %v584 = vld [vmem:[%s1 + $0x138] sm:$0xff]
    %v585 = vld [vmem:[%s1 + $0x140] sm:$0xff]
    %v586 = vld [vmem:[%s1 + $0x148] sm:$0xff]
    %v587 = vld [vmem:[%s1 + $0x150] sm:$0xff]
    %v588 = vld [vmem:[%s1 + $0x158] sm:$0xff]
    %v589 = vld [vmem:[%s1 + $0x160] sm:$0xff]
    %v590 = vld [vmem:[%s1 + $0x168] sm:$0xff]
    %v591 = vld [vmem:[%s1 + $0x170] sm:$0xff]
    %v592 = vld [vmem:[%s1 + $0x178] sm:$0xff]
    %v593 = vld [vmem:[%s1 + $0x180] sm:$0xff]
    %v594 = vld [vmem:[%s1 + $0x188] sm:$0xff]
    %v595 = vld [vmem:[%s1 + $0x190] sm:$0xff]
    %v596 = vld [vmem:[%s1 + $0x198] sm:$0xff]
    %v597 = vld [vmem:[%s1 + $0x1a0] sm:$0xff]
    %v598 = vld [vmem:[%s1 + $0x1a8] sm:$0xff]
    %v599 = vld [vmem:[%s1 + $0x1b0] sm:$0xff]
    %v600 = vld [vmem:[%s1 + $0x1b8] sm:$0xff]
    %v601 = vld [vmem:[%s1 + $0x1c0] sm:$0xff]
    %v602 = vld [vmem:[%s1 + $0x1c8] sm:$0xff]
    %v603 = vld [vmem:[%s1 + $0x1d0] sm:$0xff]
    %v604 = vld [vmem:[%s1 + $0x1d8] sm:$0xff]
    %v605 = vld [vmem:[%s1 + $0x1e0] sm:$0xff]
    %v606 = vld [vmem:[%s1 + $0x1e8] sm:$0xff]
    %v607 = vld [vmem:[%s1 + $0x1f0] sm:$0xff]
    %v608 = vld [vmem:[%s1 + $0x1f8] sm:$0xff]
    %v609 = vld [vmem:[%s1 + $0x200] sm:$0xff]
    %v610 = vld [vmem:[%s1 + $0x208] sm:$0xff]
    %v611 = vld [vmem:[%s1 + $0x210] sm:$0xff]
    %v612 = vld [vmem:[%s1 + $0x218] sm:$0xff]
    %v613 = vld [vmem:[%s1 + $0x220] sm:$0xff]
    %v614 = vld [vmem:[%s1 + $0x228] sm:$0xff]
    %v615 = vld [vmem:[%s1 + $0x230] sm:$0xff]
    %v616 = vld [vmem:[%s1 + $0x238] sm:$0xff]
    %v617 = vld [vmem:[%s1 + $0x240] sm:$0xff]
    %v618 = vld [vmem:[%s1 + $0x248] sm:$0xff]
    %v619 = vld [vmem:[%s1 + $0x250] sm:$0xff]
    %v620 = vld [vmem:[%s1 + $0x258] sm:$0xff]
    %v621 = vld [vmem:[%s1 + $0x260] sm:$0xff]
    %v622 = vld [vmem:[%s1 + $0x268] sm:$0xff]
    %v623 = vld [vmem:[%s1 + $0x270] sm:$0xff]
    %v624 = vld [vmem:[%s1 + $0x278] sm:$0xff]
    %v625 = vld [vmem:[%s1 + $0x280] sm:$0xff]
    %v626 = vld [vmem:[%s1 + $0x288] sm:$0xff]
    %v627 = vld [vmem:[%s1 + $0x290] sm:$0xff]
    %v628 = vld [vmem:[%s1 + $0x298] sm:$0xff]
    %v629 = vld [vmem:[%s1 + $0x2a0] sm:$0xff]
    %v630 = vld [vmem:[%s1 + $0x2a8] sm:$0xff]
    %v631 = vld [vmem:[%s1 + $0x2b0] sm:$0xff]
    %v632 = vld [vmem:[%s1 + $0x2b8] sm:$0xff]
    %v633 = vld [vmem:[%s1 + $0x2c0] sm:$0xff]
    %v634 = vld [vmem:[%s1 + $0x2c8] sm:$0xff]
    %v635 = vld [vmem:[%s1 + $0x2d0] sm:$0xff]
    %v636 = vld [vmem:[%s1 + $0x2d8] sm:$0xff]
    %v637 = vld [vmem:[%s1 + $0x2e0] sm:$0xff]
    %v638 = vld [vmem:[%s1 + $0x2e8] sm:$0xff]
    %v639 = vld [vmem:[%s1 + $0x2f0] sm:$0xff]
    %v640 = vld [vmem:[%s1 + $0x2f8] sm:$0xff]
    %v641 = vld [vmem:[%s1 + $0x300] sm:$0xff]
    %v642 = vld [vmem:[%s1 + $0x308] sm:$0xff]
    %v643 = vld [vmem:[%s1 + $0x310] sm:$0xff]
    %v644 = vld [vmem:[%s1 + $0x318] sm:$0xff]
    %v645 = vld [vmem:[%s1 + $0x320] sm:$0xff]
    %v646 = vld [vmem:[%s1 + $0x328] sm:$0xff]
    %v647 = vld [vmem:[%s1 + $0x330] sm:$0xff]
    %v648 = vld [vmem:[%s1 + $0x338] sm:$0xff]
    %v649 = vld [vmem:[%s1 + $0x340] sm:$0xff]
    %v650 = vld [vmem:[%s1 + $0x348] sm:$0xff]
    %v651 = vld [vmem:[%s1 + $0x350] sm:$0xff]
    %v652 = vld [vmem:[%s1 + $0x358] sm:$0xff]
    %v653 = vld [vmem:[%s1 + $0x360] sm:$0xff]
    %v654 = vld [vmem:[%s1 + $0x368] sm:$0xff]
    %v655 = vld [vmem:[%s1 + $0x370] sm:$0xff]
    %v656 = vld [vmem:[%s1 + $0x378] sm:$0xff]
    %658 = vset.pattern.permute.xlu0 0
    %659 = vperm.xlu0 %658, %v545
    %v660 = vpop.permute.xlu0 %659
    %663 = vset.pattern.permute.xlu0 0
    %664 = vperm.xlu0 %663, %v546
    %v665 = vpop.permute.xlu0 %664
    %668 = vset.pattern.permute.xlu0 0
    %669 = vperm.xlu0 %668, %v547
    %v670 = vpop.permute.xlu0 %669
    %673 = vset.pattern.permute.xlu0 0
    %674 = vperm.xlu0 %673, %v548
    %v675 = vpop.permute.xlu0 %674
    %678 = vset.pattern.permute.xlu0 0
    %679 = vperm.xlu0 %678, %v549
    %v680 = vpop.permute.xlu0 %679
    %683 = vset.pattern.permute.xlu0 0
    %684 = vperm.xlu0 %683, %v550
    %v685 = vpop.permute.xlu0 %684
    %688 = vset.pattern.permute.xlu0 0
    %689 = vperm.xlu0 %688, %v551
    %v690 = vpop.permute.xlu0 %689
    %693 = vset.pattern.permute.xlu0 0
    %694 = vperm.xlu0 %693, %v552
    %v695 = vpop.permute.xlu0 %694
    %698 = vset.pattern.permute.xlu0 0
    %699 = vperm.xlu0 %698, %v553
    %v700 = vpop.permute.xlu0 %699
    %703 = vset.pattern.permute.xlu0 0
    %704 = vperm.xlu0 %703, %v554
    %v705 = vpop.permute.xlu0 %704
    %708 = vset.pattern.permute.xlu0 0
    %709 = vperm.xlu0 %708, %v555
    %v710 = vpop.permute.xlu0 %709
    %713 = vset.pattern.permute.xlu0 0
    %714 = vperm.xlu0 %713, %v556
    %v715 = vpop.permute.xlu0 %714
    %718 = vset.pattern.permute.xlu0 0
    %719 = vperm.xlu0 %718, %v557
    %v720 = vpop.permute.xlu0 %719
    %723 = vset.pattern.permute.xlu0 0
    %724 = vperm.xlu0 %723, %v558
    %v725 = vpop.permute.xlu0 %724
    %728 = vset.pattern.permute.xlu0 0
    %729 = vperm.xlu0 %728, %v559
    %v730 = vpop.permute.xlu0 %729
    %733 = vset.pattern.permute.xlu0 0
    %734 = vperm.xlu0 %733, %v560
    %v735 = vpop.permute.xlu0 %734
    %738 = vset.pattern.permute.xlu0 0
    %739 = vperm.xlu0 %738, %v561
    %v740 = vpop.permute.xlu0 %739
    %743 = vset.pattern.permute.xlu0 0
    %744 = vperm.xlu0 %743, %v562
    %v745 = vpop.permute.xlu0 %744
    %748 = vset.pattern.permute.xlu0 0
    %749 = vperm.xlu0 %748, %v563
    %v750 = vpop.permute.xlu0 %749
    %753 = vset.pattern.permute.xlu0 0
    %754 = vperm.xlu0 %753, %v564
    %v755 = vpop.permute.xlu0 %754
    %758 = vset.pattern.permute.xlu0 0
    %759 = vperm.xlu0 %758, %v565
    %v760 = vpop.permute.xlu0 %759
    %763 = vset.pattern.permute.xlu0 0
    %764 = vperm.xlu0 %763, %v566
    %v765 = vpop.permute.xlu0 %764
    %768 = vset.pattern.permute.xlu0 0
    %769 = vperm.xlu0 %768, %v567
    %v770 = vpop.permute.xlu0 %769
    %773 = vset.pattern.permute.xlu0 0
    %774 = vperm.xlu0 %773, %v568
    %v775 = vpop.permute.xlu0 %774
    %778 = vset.pattern.permute.xlu0 0
    %779 = vperm.xlu0 %778, %v569
    %v780 = vpop.permute.xlu0 %779
    %783 = vset.pattern.permute.xlu0 0
    %784 = vperm.xlu0 %783, %v570
    %v785 = vpop.permute.xlu0 %784
    %788 = vset.pattern.permute.xlu0 0
    %789 = vperm.xlu0 %788, %v571
    %v790 = vpop.permute.xlu0 %789
    %793 = vset.pattern.permute.xlu0 0
    %794 = vperm.xlu0 %793, %v572
    %v795 = vpop.permute.xlu0 %794
    %798 = vset.pattern.permute.xlu0 0
    %799 = vperm.xlu0 %798, %v573
    %v800 = vpop.permute.xlu0 %799
    %803 = vset.pattern.permute.xlu0 0
    %804 = vperm.xlu0 %803, %v574
    %v805 = vpop.permute.xlu0 %804
    %808 = vset.pattern.permute.xlu0 0
    %809 = vperm.xlu0 %808, %v575
    %v810 = vpop.permute.xlu0 %809
    %813 = vset.pattern.permute.xlu0 0
    %814 = vperm.xlu0 %813, %v576
    %v815 = vpop.permute.xlu0 %814
    %818 = vset.pattern.permute.xlu0 0
    %819 = vperm.xlu0 %818, %v577
    %v820 = vpop.permute.xlu0 %819
    %823 = vset.pattern.permute.xlu0 0
    %824 = vperm.xlu0 %823, %v578
    %v825 = vpop.permute.xlu0 %824
    %828 = vset.pattern.permute.xlu0 0
    %829 = vperm.xlu0 %828, %v579
    %v830 = vpop.permute.xlu0 %829
    %833 = vset.pattern.permute.xlu0 0
    %834 = vperm.xlu0 %833, %v580
    %v835 = vpop.permute.xlu0 %834
    %838 = vset.pattern.permute.xlu0 0
    %839 = vperm.xlu0 %838, %v581
    %v840 = vpop.permute.xlu0 %839
    %843 = vset.pattern.permute.xlu0 0
    %844 = vperm.xlu0 %843, %v582
    %v845 = vpop.permute.xlu0 %844
    %848 = vset.pattern.permute.xlu0 0
    %849 = vperm.xlu0 %848, %v583
    %v850 = vpop.permute.xlu0 %849
    %853 = vset.pattern.permute.xlu0 0
    %854 = vperm.xlu0 %853, %v584
    %v855 = vpop.permute.xlu0 %854
    %858 = vset.pattern.permute.xlu0 0
    %859 = vperm.xlu0 %858, %v585
    %v860 = vpop.permute.xlu0 %859
    %863 = vset.pattern.permute.xlu0 0
    %864 = vperm.xlu0 %863, %v586
    %v865 = vpop.permute.xlu0 %864
    %868 = vset.pattern.permute.xlu0 0
    %869 = vperm.xlu0 %868, %v587
    %v870 = vpop.permute.xlu0 %869
    %873 = vset.pattern.permute.xlu0 0
    %874 = vperm.xlu0 %873, %v588
    %v875 = vpop.permute.xlu0 %874
    %878 = vset.pattern.permute.xlu0 0
    %879 = vperm.xlu0 %878, %v589
    %v880 = vpop.permute.xlu0 %879
    %883 = vset.pattern.permute.xlu0 0
    %884 = vperm.xlu0 %883, %v590
    %v885 = vpop.permute.xlu0 %884
    %888 = vset.pattern.permute.xlu0 0
    %889 = vperm.xlu0 %888, %v591
    %v890 = vpop.permute.xlu0 %889
    %893 = vset.pattern.permute.xlu0 0
    %894 = vperm.xlu0 %893, %v592
    %v895 = vpop.permute.xlu0 %894
    %898 = vset.pattern.permute.xlu0 0
    %899 = vperm.xlu0 %898, %v593
    %v900 = vpop.permute.xlu0 %899
    %903 = vset.pattern.permute.xlu0 0
    %904 = vperm.xlu0 %903, %v594
    %v905 = vpop.permute.xlu0 %904
    %908 = vset.pattern.permute.xlu0 0
    %909 = vperm.xlu0 %908, %v595
    %v910 = vpop.permute.xlu0 %909
    %913 = vset.pattern.permute.xlu0 0
    %914 = vperm.xlu0 %913, %v596
    %v915 = vpop.permute.xlu0 %914
    %918 = vset.pattern.permute.xlu0 0
    %919 = vperm.xlu0 %918, %v597
    %v920 = vpop.permute.xlu0 %919
    %923 = vset.pattern.permute.xlu0 0
    %924 = vperm.xlu0 %923, %v598
    %v925 = vpop.permute.xlu0 %924
    %928 = vset.pattern.permute.xlu0 0
    %929 = vperm.xlu0 %928, %v599
    %v930 = vpop.permute.xlu0 %929
    %933 = vset.pattern.permute.xlu0 0
    %934 = vperm.xlu0 %933, %v600
    %v935 = vpop.permute.xlu0 %934
    %938 = vset.pattern.permute.xlu0 0
    %939 = vperm.xlu0 %938, %v601
    %v940 = vpop.permute.xlu0 %939
    %943 = vset.pattern.permute.xlu0 0
    %944 = vperm.xlu0 %943, %v602
    %v945 = vpop.permute.xlu0 %944
    %948 = vset.pattern.permute.xlu0 0
    %949 = vperm.xlu0 %948, %v603
    %v950 = vpop.permute.xlu0 %949
    %953 = vset.pattern.permute.xlu0 0
    %954 = vperm.xlu0 %953, %v604
    %v955 = vpop.permute.xlu0 %954
    %958 = vset.pattern.permute.xlu0 0
    %959 = vperm.xlu0 %958, %v605
    %v960 = vpop.permute.xlu0 %959
    %963 = vset.pattern.permute.xlu0 0
    %964 = vperm.xlu0 %963, %v606
    %v965 = vpop.permute.xlu0 %964
    %968 = vset.pattern.permute.xlu0 0
    %969 = vperm.xlu0 %968, %v607
    %v970 = vpop.permute.xlu0 %969
    %973 = vset.pattern.permute.xlu0 0
    %974 = vperm.xlu0 %973, %v608
    %v975 = vpop.permute.xlu0 %974
    %978 = vset.pattern.permute.xlu0 0
    %979 = vperm.xlu0 %978, %v609
    %v980 = vpop.permute.xlu0 %979
    %983 = vset.pattern.permute.xlu0 0
    %984 = vperm.xlu0 %983, %v610
    %v985 = vpop.permute.xlu0 %984
    %988 = vset.pattern.permute.xlu0 0
    %989 = vperm.xlu0 %988, %v611
    %v990 = vpop.permute.xlu0 %989
    %993 = vset.pattern.permute.xlu0 0
    %994 = vperm.xlu0 %993, %v612
    %v995 = vpop.permute.xlu0 %994
    %998 = vset.pattern.permute.xlu0 0
    %999 = vperm.xlu0 %998, %v613
    %v1000 = vpop.permute.xlu0 %999
    %1003 = vset.pattern.permute.xlu0 0
    %1004 = vperm.xlu0 %1003, %v614
    %v1005 = vpop.permute.xlu0 %1004
    %1008 = vset.pattern.permute.xlu0 0
    %1009 = vperm.xlu0 %1008, %v615
    %v1010 = vpop.permute.xlu0 %1009
    %1013 = vset.pattern.permute.xlu0 0
    %1014 = vperm.xlu0 %1013, %v616
    %v1015 = vpop.permute.xlu0 %1014
    %1018 = vset.pattern.permute.xlu0 0
    %1019 = vperm.xlu0 %1018, %v617
    %v1020 = vpop.permute.xlu0 %1019
    %1023 = vset.pattern.permute.xlu0 0
    %1024 = vperm.xlu0 %1023, %v618
    %v1025 = vpop.permute.xlu0 %1024
    %1028 = vset.pattern.permute.xlu0 0
    %1029 = vperm.xlu0 %1028, %v619
    %v1030 = vpop.permute.xlu0 %1029
    %1033 = vset.pattern.permute.xlu0 0
    %1034 = vperm.xlu0 %1033, %v620
    %v1035 = vpop.permute.xlu0 %1034
    %1038 = vset.pattern.permute.xlu0 0
    %1039 = vperm.xlu0 %1038, %v621
    %v1040 = vpop.permute.xlu0 %1039
    %1043 = vset.pattern.permute.xlu0 0
    %1044 = vperm.xlu0 %1043, %v622
    %v1045 = vpop.permute.xlu0 %1044
    %1048 = vset.pattern.permute.xlu0 0
    %1049 = vperm.xlu0 %1048, %v623
    %v1050 = vpop.permute.xlu0 %1049
    %1053 = vset.pattern.permute.xlu0 0
    %1054 = vperm.xlu0 %1053, %v624
    %v1055 = vpop.permute.xlu0 %1054
    %1058 = vset.pattern.permute.xlu0 0
    %1059 = vperm.xlu0 %1058, %v625
    %v1060 = vpop.permute.xlu0 %1059
    %1063 = vset.pattern.permute.xlu0 0
    %1064 = vperm.xlu0 %1063, %v626
    %v1065 = vpop.permute.xlu0 %1064
    %1068 = vset.pattern.permute.xlu0 0
    %1069 = vperm.xlu0 %1068, %v627
    %v1070 = vpop.permute.xlu0 %1069
    %1073 = vset.pattern.permute.xlu0 0
    %1074 = vperm.xlu0 %1073, %v628
    %v1075 = vpop.permute.xlu0 %1074
    %1078 = vset.pattern.permute.xlu0 0
    %1079 = vperm.xlu0 %1078, %v629
    %v1080 = vpop.permute.xlu0 %1079
    %1083 = vset.pattern.permute.xlu0 0
    %1084 = vperm.xlu0 %1083, %v630
    %v1085 = vpop.permute.xlu0 %1084
    %1088 = vset.pattern.permute.xlu0 0
    %1089 = vperm.xlu0 %1088, %v631
    %v1090 = vpop.permute.xlu0 %1089
    %1093 = vset.pattern.permute.xlu0 0
    %1094 = vperm.xlu0 %1093, %v632
    %v1095 = vpop.permute.xlu0 %1094
    %1098 = vset.pattern.permute.xlu0 0
    %1099 = vperm.xlu0 %1098, %v633
    %v1100 = vpop.permute.xlu0 %1099
    %1103 = vset.pattern.permute.xlu0 0
    %1104 = vperm.xlu0 %1103, %v634
    %v1105 = vpop.permute.xlu0 %1104
    %1108 = vset.pattern.permute.xlu0 0
    %1109 = vperm.xlu0 %1108, %v635
    %v1110 = vpop.permute.xlu0 %1109
    %1113 = vset.pattern.permute.xlu0 0
    %1114 = vperm.xlu0 %1113, %v636
    %v1115 = vpop.permute.xlu0 %1114
    %1118 = vset.pattern.permute.xlu0 0
    %1119 = vperm.xlu0 %1118, %v637
    %v1120 = vpop.permute.xlu0 %1119
    %1123 = vset.pattern.permute.xlu0 0
    %1124 = vperm.xlu0 %1123, %v638
    %v1125 = vpop.permute.xlu0 %1124
    %1128 = vset.pattern.permute.xlu0 0
    %1129 = vperm.xlu0 %1128, %v639
    %v1130 = vpop.permute.xlu0 %1129
    %1133 = vset.pattern.permute.xlu0 0
    %1134 = vperm.xlu0 %1133, %v640
    %v1135 = vpop.permute.xlu0 %1134
    %1138 = vset.pattern.permute.xlu0 0
    %1139 = vperm.xlu0 %1138, %v641
    %v1140 = vpop.permute.xlu0 %1139
    %1143 = vset.pattern.permute.xlu0 0
    %1144 = vperm.xlu0 %1143, %v642
    %v1145 = vpop.permute.xlu0 %1144
    %1148 = vset.pattern.permute.xlu0 0
    %1149 = vperm.xlu0 %1148, %v643
    %v1150 = vpop.permute.xlu0 %1149
    %1153 = vset.pattern.permute.xlu0 0
    %1154 = vperm.xlu0 %1153, %v644
    %v1155 = vpop.permute.xlu0 %1154
    %1158 = vset.pattern.permute.xlu0 0
    %1159 = vperm.xlu0 %1158, %v645
    %v1160 = vpop.permute.xlu0 %1159
    %1163 = vset.pattern.permute.xlu0 0
    %1164 = vperm.xlu0 %1163, %v646
    %v1165 = vpop.permute.xlu0 %1164
    %1168 = vset.pattern.permute.xlu0 0
    %1169 = vperm.xlu0 %1168, %v647
    %v1170 = vpop.permute.xlu0 %1169
    %1173 = vset.pattern.permute.xlu0 0
    %1174 = vperm.xlu0 %1173, %v648
    %v1175 = vpop.permute.xlu0 %1174
    %1178 = vset.pattern.permute.xlu0 0
    %1179 = vperm.xlu0 %1178, %v649
    %v1180 = vpop.permute.xlu0 %1179
    %1183 = vset.pattern.permute.xlu0 0
    %1184 = vperm.xlu0 %1183, %v650
    %v1185 = vpop.permute.xlu0 %1184
    %1188 = vset.pattern.permute.xlu0 0
    %1189 = vperm.xlu0 %1188, %v651
    %v1190 = vpop.permute.xlu0 %1189
    %1193 = vset.pattern.permute.xlu0 0
    %1194 = vperm.xlu0 %1193, %v652
    %v1195 = vpop.permute.xlu0 %1194
    %1198 = vset.pattern.permute.xlu0 0
    %1199 = vperm.xlu0 %1198, %v653
    %v1200 = vpop.permute.xlu0 %1199
    %1203 = vset.pattern.permute.xlu0 0
    %1204 = vperm.xlu0 %1203, %v654
    %v1205 = vpop.permute.xlu0 %1204
    %1208 = vset.pattern.permute.xlu0 0
    %1209 = vperm.xlu0 %1208, %v655
    %v1210 = vpop.permute.xlu0 %1209
    %1213 = vset.pattern.permute.xlu0 0
    %1214 = vperm.xlu0 %1213, %v656
    %v1215 = vpop.permute.xlu0 %1214
    %v1329 = vunpack.c.l.b16 %v433
    %v1330 = vunpack.c.l.b16 %v434
    %v1331 = vunpack.c.l.b16 %v435
    %v1332 = vunpack.c.l.b16 %v436
    %v1333 = vunpack.c.l.b16 %v437
    %v1334 = vunpack.c.l.b16 %v438
    %v1335 = vunpack.c.l.b16 %v439
    %v1336 = vunpack.c.l.b16 %v440
    %v1337 = vunpack.c.l.b16 %v441
    %v1338 = vunpack.c.l.b16 %v442
    %v1339 = vunpack.c.l.b16 %v443
    %v1340 = vunpack.c.l.b16 %v444
    %v1341 = vunpack.c.l.b16 %v445
    %v1342 = vunpack.c.l.b16 %v446
    %v1343 = vunpack.c.l.b16 %v447
    %v1344 = vunpack.c.l.b16 %v448
    %v1345 = vunpack.c.l.b16 %v449
    %v1346 = vunpack.c.l.b16 %v450
    %v1347 = vunpack.c.l.b16 %v451
    %v1348 = vunpack.c.l.b16 %v452
    %v1349 = vunpack.c.l.b16 %v453
    %v1350 = vunpack.c.l.b16 %v454
    %v1351 = vunpack.c.l.b16 %v455
    %v1352 = vunpack.c.l.b16 %v456
    %v1353 = vunpack.c.l.b16 %v457
    %v1354 = vunpack.c.l.b16 %v458
    %v1355 = vunpack.c.l.b16 %v459
    %v1356 = vunpack.c.l.b16 %v460
    %v1357 = vunpack.c.l.b16 %v461
    %v1358 = vunpack.c.l.b16 %v462
    %v1359 = vunpack.c.l.b16 %v463
    %v1360 = vunpack.c.l.b16 %v464
    %v1361 = vunpack.c.l.b16 %v465
    %v1362 = vunpack.c.l.b16 %v466
    %v1363 = vunpack.c.l.b16 %v467
    %v1364 = vunpack.c.l.b16 %v468
    %v1365 = vunpack.c.l.b16 %v469
    %v1366 = vunpack.c.l.b16 %v470
    %v1367 = vunpack.c.l.b16 %v471
    %v1368 = vunpack.c.l.b16 %v472
    %v1369 = vunpack.c.l.b16 %v473
    %v1370 = vunpack.c.l.b16 %v474
    %v1371 = vunpack.c.l.b16 %v475
    %v1372 = vunpack.c.l.b16 %v476
    %v1373 = vunpack.c.l.b16 %v477
    %v1374 = vunpack.c.l.b16 %v478
    %v1375 = vunpack.c.l.b16 %v479
    %v1376 = vunpack.c.l.b16 %v480
    %v1377 = vunpack.c.l.b16 %v481
    %v1378 = vunpack.c.l.b16 %v482
    %v1379 = vunpack.c.l.b16 %v483
    %v1380 = vunpack.c.l.b16 %v484
    %v1381 = vunpack.c.l.b16 %v485
    %v1382 = vunpack.c.l.b16 %v486
    %v1383 = vunpack.c.l.b16 %v487
    %v1384 = vunpack.c.l.b16 %v488
    %v1385 = vunpack.c.l.b16 %v489
    %v1386 = vunpack.c.l.b16 %v490
    %v1387 = vunpack.c.l.b16 %v491
    %v1388 = vunpack.c.l.b16 %v492
    %v1389 = vunpack.c.l.b16 %v493
    %v1390 = vunpack.c.l.b16 %v494
    %v1391 = vunpack.c.l.b16 %v495
    %v1392 = vunpack.c.l.b16 %v496
    %v1393 = vunpack.c.l.b16 %v497
    %v1394 = vunpack.c.l.b16 %v498
    %v1395 = vunpack.c.l.b16 %v499
    %v1396 = vunpack.c.l.b16 %v500
    %v1397 = vunpack.c.l.b16 %v501
    %v1398 = vunpack.c.l.b16 %v502
    %v1399 = vunpack.c.l.b16 %v503
    %v1400 = vunpack.c.l.b16 %v504
    %v1401 = vunpack.c.l.b16 %v505
    %v1402 = vunpack.c.l.b16 %v506
    %v1403 = vunpack.c.l.b16 %v507
    %v1404 = vunpack.c.l.b16 %v508
    %v1405 = vunpack.c.l.b16 %v509
    %v1406 = vunpack.c.l.b16 %v510
    %v1407 = vunpack.c.l.b16 %v511
    %v1408 = vunpack.c.l.b16 %v512
    %v1409 = vunpack.c.l.b16 %v513
    %v1410 = vunpack.c.l.b16 %v514
    %v1411 = vunpack.c.l.b16 %v515
    %v1412 = vunpack.c.l.b16 %v516
    %v1413 = vunpack.c.l.b16 %v517
    %v1414 = vunpack.c.l.b16 %v518
    %v1415 = vunpack.c.l.b16 %v519
    %v1416 = vunpack.c.l.b16 %v520
    %v1417 = vunpack.c.l.b16 %v521
    %v1418 = vunpack.c.l.b16 %v522
    %v1419 = vunpack.c.l.b16 %v523
    %v1420 = vunpack.c.l.b16 %v524
    %v1421 = vunpack.c.l.b16 %v525
    %v1422 = vunpack.c.l.b16 %v526
    %v1423 = vunpack.c.l.b16 %v527
    %v1424 = vunpack.c.l.b16 %v528
    %v1425 = vunpack.c.l.b16 %v529
    %v1426 = vunpack.c.l.b16 %v530
    %v1427 = vunpack.c.l.b16 %v531
    %v1428 = vunpack.c.l.b16 %v532
    %v1429 = vunpack.c.l.b16 %v533
    %v1430 = vunpack.c.l.b16 %v534
    %v1431 = vunpack.c.l.b16 %v535
    %v1432 = vunpack.c.l.b16 %v536
    %v1433 = vunpack.c.l.b16 %v537
    %v1434 = vunpack.c.l.b16 %v538
    %v1435 = vunpack.c.l.b16 %v539
    %v1436 = vunpack.c.l.b16 %v540
    %v1437 = vunpack.c.l.b16 %v541
    %v1438 = vunpack.c.l.b16 %v542
    %v1439 = vunpack.c.l.b16 %v543
    %v1440 = vunpack.c.l.b16 %v544
    %v1441 = vpack.c.b16 %v1330, %v1329
    %v1442 = vpack.c.b16 %v1332, %v1331
    %v1443 = vpack.c.b16 %v1334, %v1333
    %v1444 = vpack.c.b16 %v1336, %v1335
    %v1445 = vpack.c.b16 %v1338, %v1337
    %v1446 = vpack.c.b16 %v1340, %v1339
    %v1447 = vpack.c.b16 %v1342, %v1341
    %v1448 = vpack.c.b16 %v1344, %v1343
    %v1449 = vpack.c.b16 %v1346, %v1345
    %v1450 = vpack.c.b16 %v1348, %v1347
    %v1451 = vpack.c.b16 %v1350, %v1349
    %v1452 = vpack.c.b16 %v1352, %v1351
    %v1453 = vpack.c.b16 %v1354, %v1353
    %v1454 = vpack.c.b16 %v1356, %v1355
    %v1455 = vpack.c.b16 %v1358, %v1357
    %v1456 = vpack.c.b16 %v1360, %v1359
    %v1457 = vpack.c.b16 %v1362, %v1361
    %v1458 = vpack.c.b16 %v1364, %v1363
    %v1459 = vpack.c.b16 %v1366, %v1365
    %v1460 = vpack.c.b16 %v1368, %v1367
    %v1461 = vpack.c.b16 %v1370, %v1369
    %v1462 = vpack.c.b16 %v1372, %v1371
    %v1463 = vpack.c.b16 %v1374, %v1373
    %v1464 = vpack.c.b16 %v1376, %v1375
    %v1465 = vpack.c.b16 %v1378, %v1377
    %v1466 = vpack.c.b16 %v1380, %v1379
    %v1467 = vpack.c.b16 %v1382, %v1381
    %v1468 = vpack.c.b16 %v1384, %v1383
    %v1469 = vpack.c.b16 %v1386, %v1385
    %v1470 = vpack.c.b16 %v1388, %v1387
    %v1471 = vpack.c.b16 %v1390, %v1389
    %v1472 = vpack.c.b16 %v1392, %v1391
    %v1473 = vpack.c.b16 %v1394, %v1393
    %v1474 = vpack.c.b16 %v1396, %v1395
    %v1475 = vpack.c.b16 %v1398, %v1397
    %v1476 = vpack.c.b16 %v1400, %v1399
    %v1477 = vpack.c.b16 %v1402, %v1401
    %v1478 = vpack.c.b16 %v1404, %v1403
    %v1479 = vpack.c.b16 %v1406, %v1405
    %v1480 = vpack.c.b16 %v1408, %v1407
    %v1481 = vpack.c.b16 %v1410, %v1409
    %v1482 = vpack.c.b16 %v1412, %v1411
    %v1483 = vpack.c.b16 %v1414, %v1413
    %v1484 = vpack.c.b16 %v1416, %v1415
    %v1485 = vpack.c.b16 %v1418, %v1417
    %v1486 = vpack.c.b16 %v1420, %v1419
    %v1487 = vpack.c.b16 %v1422, %v1421
    %v1488 = vpack.c.b16 %v1424, %v1423
    %v1489 = vpack.c.b16 %v1426, %v1425
    %v1490 = vpack.c.b16 %v1428, %v1427
    %v1491 = vpack.c.b16 %v1430, %v1429
    %v1492 = vpack.c.b16 %v1432, %v1431
    %v1493 = vpack.c.b16 %v1434, %v1433
    %v1494 = vpack.c.b16 %v1436, %v1435
    %v1495 = vpack.c.b16 %v1438, %v1437
    %v1496 = vpack.c.b16 %v1440, %v1439
    %v1569 = vunpack.c.l.b16 %v417
    %v1570 = vunpack.c.l.b16 %v418
    %v1571 = vunpack.c.l.b16 %v419
    %v1572 = vunpack.c.l.b16 %v420
    %v1573 = vunpack.c.l.b16 %v421
    %v1574 = vunpack.c.l.b16 %v422
    %v1575 = vunpack.c.l.b16 %v423
    %v1576 = vunpack.c.l.b16 %v424
    %v1577 = vunpack.c.l.b16 %v425
    %v1578 = vunpack.c.l.b16 %v426
    %v1579 = vunpack.c.l.b16 %v427
    %v1580 = vunpack.c.l.b16 %v428
    %v1581 = vunpack.c.l.b16 %v429
    %v1582 = vunpack.c.l.b16 %v430
    %v1583 = vunpack.c.l.b16 %v431
    %v1584 = vunpack.c.l.b16 %v432
    %v1585 = vpack.c.b16 %v1570, %v1569
    %v1586 = vpack.c.b16 %v1572, %v1571
    %v1587 = vpack.c.b16 %v1574, %v1573
    %v1588 = vpack.c.b16 %v1576, %v1575
    %v1589 = vpack.c.b16 %v1578, %v1577
    %v1590 = vpack.c.b16 %v1580, %v1579
    %v1591 = vpack.c.b16 %v1582, %v1581
    %v1592 = vpack.c.b16 %v1584, %v1583
    %1601 = vmatprep.subr.bf16.mxu0 0
    %1602 = vmatpush1.bf16.msra.mxu0 %v1585
    %1603 = vmatprep.subr.bf16.mxu0 0
    %1604 = vmatpush1.bf16.msra.mxu0 %v1586
    %1605 = vmatprep.subr.bf16.mxu0 0
    %1606 = vmatpush1.bf16.msra.mxu0 %v1587
    %1607 = vmatprep.subr.bf16.mxu0 0
    %1608 = vmatpush1.bf16.msra.mxu0 %v1588
    %1609 = vmatprep.subr.bf16.mxu0 0
    %1610 = vmatpush1.bf16.msra.mxu0 %v1589
    %1611 = vmatprep.subr.bf16.mxu0 0
    %1612 = vmatpush1.bf16.msra.mxu0 %v1590
    %1613 = vmatprep.subr.bf16.mxu0 0
    %1614 = vmatpush1.bf16.msra.mxu0 %v1591
    %1615 = vmatprep.subr.bf16.mxu0 0
    %1616 = vmatpush1.bf16.msra.mxu0 %v1592
    %1617 = vmatprep.subr.bf16.mxu0 0
    %1618 = vmatpush1.bf16.msra.mxu0 0
    %1619 = vmatprep.subr.bf16.mxu0 0
    %1620 = vmatpush1.bf16.msra.mxu0 0
    %1621 = vmatprep.subr.bf16.mxu0 0
    %1622 = vmatpush1.bf16.msra.mxu0 0
    %1623 = vmatprep.subr.bf16.mxu0 0
    %1624 = vmatpush1.bf16.msra.mxu0 0
    %1625 = vmatprep.subr.bf16.mxu0 0
    %1626 = vmatpush1.bf16.msra.mxu0 0
    %1627 = vmatprep.subr.bf16.mxu0 0
    %1628 = vmatpush1.bf16.msra.mxu0 0
    %1629 = vmatprep.subr.bf16.mxu0 0
    %1630 = vmatpush1.bf16.msra.mxu0 0
    %1631 = vmatprep.subr.bf16.mxu0 0
    %1632 = vmatpush1.bf16.msra.mxu0 0
    %1633 = vmatprep.mubr.bf16.mxu0 0
    %1634 = vmatmul.mubr.bf16.gmra.mrb[0].mxu0 %v1441
    %v1635 = vpop.f32.mrb[0].mxu0
    %v1636 = vadd.f32 %v660, %v1635
    %v1637 = vpop.f32.mrb[0].mxu0
    %v1638 = vpop.f32.mrb[0].mxu0
    %v1639 = vadd.f32 %v665, %v1638
    %v1640 = vpop.f32.mrb[0].mxu0
    %1641 = vmatprep.mubr.bf16.mxu0 0
    %1642 = vmatmul.mubr.bf16.gmra.mrb[0].mxu0 %v1442
    %v1643 = vpop.f32.mrb[0].mxu0
    %v1644 = vadd.f32 %v670, %v1643
    %v1645 = vpop.f32.mrb[0].mxu0
    %v1646 = vpop.f32.mrb[0].mxu0
    %v1647 = vadd.f32 %v675, %v1646
    %v1648 = vpop.f32.mrb[0].mxu0
    %1649 = vmatprep.mubr.bf16.mxu0 0
    %1650 = vmatmul.mubr.bf16.gmra.mrb[0].mxu0 %v1443
    %v1651 = vpop.f32.mrb[0].mxu0
    %v1652 = vadd.f32 %v680, %v1651
    %v1653 = vpop.f32.mrb[0].mxu0
    %v1654 = vpop.f32.mrb[0].mxu0
    %v1655 = vadd.f32 %v685, %v1654
    %v1656 = vpop.f32.mrb[0].mxu0
    %1657 = vmatprep.mubr.bf16.mxu0 0
    %1658 = vmatmul.mubr.bf16.gmra.mrb[0].mxu0 %v1444
    %v1659 = vpop.f32.mrb[0].mxu0
    %v1660 = vadd.f32 %v690, %v1659
    %v1661 = vpop.f32.mrb[0].mxu0
    %v1662 = vpop.f32.mrb[0].mxu0
    %v1663 = vadd.f32 %v695, %v1662
    %v1664 = vpop.f32.mrb[0].mxu0
    %1665 = vmatprep.mubr.bf16.mxu0 0
    %1666 = vmatmul.mubr.bf16.gmra.mrb[0].mxu0 %v1445
    %v1667 = vpop.f32.mrb[0].mxu0
    %v1668 = vadd.f32 %v700, %v1667
    %v1669 = vpop.f32.mrb[0].mxu0
    %v1670 = vpop.f32.mrb[0].mxu0
    %v1671 = vadd.f32 %v705, %v1670
    %v1672 = vpop.f32.mrb[0].mxu0
    %1673 = vmatprep.mubr.bf16.mxu0 0
    %1674 = vmatmul.mubr.bf16.gmra.mrb[0].mxu0 %v1446
    %v1675 = vpop.f32.mrb[0].mxu0
    %v1676 = vadd.f32 %v710, %v1675
    %v1677 = vpop.f32.mrb[0].mxu0
    %v1678 = vpop.f32.mrb[0].mxu0
    %v1679 = vadd.f32 %v715, %v1678
    %v1680 = vpop.f32.mrb[0].mxu0
    %1681 = vmatprep.mubr.bf16.mxu0 0
    %1682 = vmatmul.mubr.bf16.gmra.mrb[0].mxu0 %v1447
    %v1683 = vpop.f32.mrb[0].mxu0
    %v1684 = vadd.f32 %v720, %v1683
    %v1685 = vpop.f32.mrb[0].mxu0
    %v1686 = vpop.f32.mrb[0].mxu0
    %v1687 = vadd.f32 %v725, %v1686
    %v1688 = vpop.f32.mrb[0].mxu0
    %1689 = vmatprep.mubr.bf16.mxu0 0
    %1690 = vmatmul.mubr.bf16.gmra.mrb[0].mxu0 %v1448
    %v1691 = vpop.f32.mrb[0].mxu0
    %v1692 = vadd.f32 %v730, %v1691
    %v1693 = vpop.f32.mrb[0].mxu0
    %v1694 = vpop.f32.mrb[0].mxu0
    %v1695 = vadd.f32 %v735, %v1694
    %v1696 = vpop.f32.mrb[0].mxu0
    %1697 = vmatprep.mubr.bf16.mxu0 0
    %1698 = vmatmul.mubr.bf16.gmra.mrb[0].mxu0 %v1449
    %v1699 = vpop.f32.mrb[0].mxu0
    %v1700 = vadd.f32 %v740, %v1699
    %v1701 = vpop.f32.mrb[0].mxu0
    %v1702 = vpop.f32.mrb[0].mxu0
    %v1703 = vadd.f32 %v745, %v1702
    %v1704 = vpop.f32.mrb[0].mxu0
    %1705 = vmatprep.mubr.bf16.mxu0 0
    %1706 = vmatmul.mubr.bf16.gmra.mrb[0].mxu0 %v1450
    %v1707 = vpop.f32.mrb[0].mxu0
    %v1708 = vadd.f32 %v750, %v1707
    %v1709 = vpop.f32.mrb[0].mxu0
    %v1710 = vpop.f32.mrb[0].mxu0
    %v1711 = vadd.f32 %v755, %v1710
    %v1712 = vpop.f32.mrb[0].mxu0
    %1713 = vmatprep.mubr.bf16.mxu0 0
    %1714 = vmatmul.mubr.bf16.gmra.mrb[0].mxu0 %v1451
    %v1715 = vpop.f32.mrb[0].mxu0
    %v1716 = vadd.f32 %v760, %v1715
    %v1717 = vpop.f32.mrb[0].mxu0
    %v1718 = vpop.f32.mrb[0].mxu0
    %v1719 = vadd.f32 %v765, %v1718
    %v1720 = vpop.f32.mrb[0].mxu0
    %1721 = vmatprep.mubr.bf16.mxu0 0
    %1722 = vmatmul.mubr.bf16.gmra.mrb[0].mxu0 %v1452
    %v1723 = vpop.f32.mrb[0].mxu0
    %v1724 = vadd.f32 %v770, %v1723
    %v1725 = vpop.f32.mrb[0].mxu0
    %v1726 = vpop.f32.mrb[0].mxu0
    %v1727 = vadd.f32 %v775, %v1726
    %v1728 = vpop.f32.mrb[0].mxu0
    %1729 = vmatprep.mubr.bf16.mxu0 0
    %1730 = vmatmul.mubr.bf16.gmra.mrb[0].mxu0 %v1453
    %v1731 = vpop.f32.mrb[0].mxu0
    %v1732 = vadd.f32 %v780, %v1731
    %v1733 = vpop.f32.mrb[0].mxu0
    %v1734 = vpop.f32.mrb[0].mxu0
    %v1735 = vadd.f32 %v785, %v1734
    %v1736 = vpop.f32.mrb[0].mxu0
    %1737 = vmatprep.mubr.bf16.mxu0 0
    %1738 = vmatmul.mubr.bf16.gmra.mrb[0].mxu0 %v1454
    %v1739 = vpop.f32.mrb[0].mxu0
    %v1740 = vadd.f32 %v790, %v1739
    %v1741 = vpop.f32.mrb[0].mxu0
    %v1742 = vpop.f32.mrb[0].mxu0
    %v1743 = vadd.f32 %v795, %v1742
    %v1744 = vpop.f32.mrb[0].mxu0
    %1745 = vmatprep.mubr.bf16.mxu0 0
    %1746 = vmatmul.mubr.bf16.gmra.mrb[0].mxu0 %v1455
    %v1747 = vpop.f32.mrb[0].mxu0
    %v1748 = vadd.f32 %v800, %v1747
    %v1749 = vpop.f32.mrb[0].mxu0
    %v1750 = vpop.f32.mrb[0].mxu0
    %v1751 = vadd.f32 %v805, %v1750
    %v1752 = vpop.f32.mrb[0].mxu0
    %1753 = vmatprep.mubr.bf16.mxu0 0
    %1754 = vmatmul.mubr.bf16.gmra.mrb[0].mxu0 %v1456
    %v1755 = vpop.f32.mrb[0].mxu0
    %v1756 = vadd.f32 %v810, %v1755
    %v1757 = vpop.f32.mrb[0].mxu0
    %v1758 = vpop.f32.mrb[0].mxu0
    %v1759 = vadd.f32 %v815, %v1758
    %v1760 = vpop.f32.mrb[0].mxu0
    %1761 = vmatprep.mubr.bf16.mxu0 0
    %1762 = vmatmul.mubr.bf16.gmra.mrb[0].mxu0 %v1457
    %v1763 = vpop.f32.mrb[0].mxu0
    %v1764 = vadd.f32 %v820, %v1763
    %v1765 = vpop.f32.mrb[0].mxu0
    %v1766 = vpop.f32.mrb[0].mxu0
    %v1767 = vadd.f32 %v825, %v1766
    %v1768 = vpop.f32.mrb[0].mxu0
    %1769 = vmatprep.mubr.bf16.mxu0 0
    %1770 = vmatmul.mubr.bf16.gmra.mrb[0].mxu0 %v1458
    %v1771 = vpop.f32.mrb[0].mxu0
    %v1772 = vadd.f32 %v830, %v1771
    %v1773 = vpop.f32.mrb[0].mxu0
    %v1774 = vpop.f32.mrb[0].mxu0
    %v1775 = vadd.f32 %v835, %v1774
    %v1776 = vpop.f32.mrb[0].mxu0
    %1777 = vmatprep.mubr.bf16.mxu0 0
    %1778 = vmatmul.mubr.bf16.gmra.mrb[0].mxu0 %v1459
    %v1779 = vpop.f32.mrb[0].mxu0
    %v1780 = vadd.f32 %v840, %v1779
    %v1781 = vpop.f32.mrb[0].mxu0
    %v1782 = vpop.f32.mrb[0].mxu0
    %v1783 = vadd.f32 %v845, %v1782
    %v1784 = vpop.f32.mrb[0].mxu0
    %1785 = vmatprep.mubr.bf16.mxu0 0
    %1786 = vmatmul.mubr.bf16.gmra.mrb[0].mxu0 %v1460
    %v1787 = vpop.f32.mrb[0].mxu0
    %v1788 = vadd.f32 %v850, %v1787
    %v1789 = vpop.f32.mrb[0].mxu0
    %v1790 = vpop.f32.mrb[0].mxu0
    %v1791 = vadd.f32 %v855, %v1790
    %v1792 = vpop.f32.mrb[0].mxu0
    %1793 = vmatprep.mubr.bf16.mxu0 0
    %1794 = vmatmul.mubr.bf16.gmra.mrb[0].mxu0 %v1461
    %v1795 = vpop.f32.mrb[0].mxu0
    %v1796 = vadd.f32 %v860, %v1795
    %v1797 = vpop.f32.mrb[0].mxu0
    %v1798 = vpop.f32.mrb[0].mxu0
    %v1799 = vadd.f32 %v865, %v1798
    %v1800 = vpop.f32.mrb[0].mxu0
    %1801 = vmatprep.mubr.bf16.mxu0 0
    %1802 = vmatmul.mubr.bf16.gmra.mrb[0].mxu0 %v1462
    %v1803 = vpop.f32.mrb[0].mxu0
    %v1804 = vadd.f32 %v870, %v1803
    %v1805 = vpop.f32.mrb[0].mxu0
    %v1806 = vpop.f32.mrb[0].mxu0
    %v1807 = vadd.f32 %v875, %v1806
    %v1808 = vpop.f32.mrb[0].mxu0
    %1809 = vmatprep.mubr.bf16.mxu0 0
    %1810 = vmatmul.mubr.bf16.gmra.mrb[0].mxu0 %v1463
    %v1811 = vpop.f32.mrb[0].mxu0
    %v1812 = vadd.f32 %v880, %v1811
    %v1813 = vpop.f32.mrb[0].mxu0
    %v1814 = vpop.f32.mrb[0].mxu0
    %v1815 = vadd.f32 %v885, %v1814
    %v1816 = vpop.f32.mrb[0].mxu0
    %1817 = vmatprep.mubr.bf16.mxu0 0
    %1818 = vmatmul.mubr.bf16.gmra.mrb[0].mxu0 %v1464
    %v1819 = vpop.f32.mrb[0].mxu0
    %v1820 = vadd.f32 %v890, %v1819
    %v1821 = vpop.f32.mrb[0].mxu0
    %v1822 = vpop.f32.mrb[0].mxu0
    %v1823 = vadd.f32 %v895, %v1822
    %v1824 = vpop.f32.mrb[0].mxu0
    %1825 = vmatprep.mubr.bf16.mxu0 0
    %1826 = vmatmul.mubr.bf16.gmra.mrb[0].mxu0 %v1465
    %v1827 = vpop.f32.mrb[0].mxu0
    %v1828 = vadd.f32 %v900, %v1827
    %v1829 = vpop.f32.mrb[0].mxu0
    %v1830 = vpop.f32.mrb[0].mxu0
    %v1831 = vadd.f32 %v905, %v1830
    %v1832 = vpop.f32.mrb[0].mxu0
    %1833 = vmatprep.mubr.bf16.mxu0 0
    %1834 = vmatmul.mubr.bf16.gmra.mrb[0].mxu0 %v1466
    %v1835 = vpop.f32.mrb[0].mxu0
    %v1836 = vadd.f32 %v910, %v1835
    %v1837 = vpop.f32.mrb[0].mxu0
    %v1838 = vpop.f32.mrb[0].mxu0
    %v1839 = vadd.f32 %v915, %v1838
    %v1840 = vpop.f32.mrb[0].mxu0
    %1841 = vmatprep.mubr.bf16.mxu0 0
    %1842 = vmatmul.mubr.bf16.gmra.mrb[0].mxu0 %v1467
    %v1843 = vpop.f32.mrb[0].mxu0
    %v1844 = vadd.f32 %v920, %v1843
    %v1845 = vpop.f32.mrb[0].mxu0
    %v1846 = vpop.f32.mrb[0].mxu0
    %v1847 = vadd.f32 %v925, %v1846
    %v1848 = vpop.f32.mrb[0].mxu0
    %1849 = vmatprep.mubr.bf16.mxu0 0
    %1850 = vmatmul.mubr.bf16.gmra.mrb[0].mxu0 %v1468
    %v1851 = vpop.f32.mrb[0].mxu0
    %v1852 = vadd.f32 %v930, %v1851
    %v1853 = vpop.f32.mrb[0].mxu0
    %v1854 = vpop.f32.mrb[0].mxu0
    %v1855 = vadd.f32 %v935, %v1854
    %v1856 = vpop.f32.mrb[0].mxu0
    %1857 = vmatprep.mubr.bf16.mxu0 0
    %1858 = vmatmul.mubr.bf16.gmra.mrb[0].mxu0 %v1469
    %v1859 = vpop.f32.mrb[0].mxu0
    %v1860 = vadd.f32 %v940, %v1859
    %v1861 = vpop.f32.mrb[0].mxu0
    %v1862 = vpop.f32.mrb[0].mxu0
    %v1863 = vadd.f32 %v945, %v1862
    %v1864 = vpop.f32.mrb[0].mxu0
    %1865 = vmatprep.mubr.bf16.mxu0 0
    %1866 = vmatmul.mubr.bf16.gmra.mrb[0].mxu0 %v1470
    %v1867 = vpop.f32.mrb[0].mxu0
    %v1868 = vadd.f32 %v950, %v1867
    %v1869 = vpop.f32.mrb[0].mxu0
    %v1870 = vpop.f32.mrb[0].mxu0
    %v1871 = vadd.f32 %v955, %v1870
    %v1872 = vpop.f32.mrb[0].mxu0
    %1873 = vmatprep.mubr.bf16.mxu0 0
    %1874 = vmatmul.mubr.bf16.gmra.mrb[0].mxu0 %v1471
    %v1875 = vpop.f32.mrb[0].mxu0
    %v1876 = vadd.f32 %v960, %v1875
    %v1877 = vpop.f32.mrb[0].mxu0
    %v1878 = vpop.f32.mrb[0].mxu0
    %v1879 = vadd.f32 %v965, %v1878
    %v1880 = vpop.f32.mrb[0].mxu0
    %1881 = vmatprep.mubr.bf16.mxu0 0
    %1882 = vmatmul.mubr.bf16.gmra.mrb[0].mxu0 %v1472
    %v1883 = vpop.f32.mrb[0].mxu0
    %v1884 = vadd.f32 %v970, %v1883
    %v1885 = vpop.f32.mrb[0].mxu0
    %v1886 = vpop.f32.mrb[0].mxu0
    %v1887 = vadd.f32 %v975, %v1886
    %v1888 = vpop.f32.mrb[0].mxu0
    %1889 = vmatprep.mubr.bf16.mxu0 0
    %1890 = vmatmul.mubr.bf16.gmra.mrb[0].mxu0 %v1473
    %v1891 = vpop.f32.mrb[0].mxu0
    %v1892 = vadd.f32 %v980, %v1891
    %v1893 = vpop.f32.mrb[0].mxu0
    %v1894 = vpop.f32.mrb[0].mxu0
    %v1895 = vadd.f32 %v985, %v1894
    %v1896 = vpop.f32.mrb[0].mxu0
    %1897 = vmatprep.mubr.bf16.mxu0 0
    %1898 = vmatmul.mubr.bf16.gmra.mrb[0].mxu0 %v1474
    %v1899 = vpop.f32.mrb[0].mxu0
    %v1900 = vadd.f32 %v990, %v1899
    %v1901 = vpop.f32.mrb[0].mxu0
    %v1902 = vpop.f32.mrb[0].mxu0
    %v1903 = vadd.f32 %v995, %v1902
    %v1904 = vpop.f32.mrb[0].mxu0
    %1905 = vmatprep.mubr.bf16.mxu0 0
    %1906 = vmatmul.mubr.bf16.gmra.mrb[0].mxu0 %v1475
    %v1907 = vpop.f32.mrb[0].mxu0
    %v1908 = vadd.f32 %v1000, %v1907
    %v1909 = vpop.f32.mrb[0].mxu0
    %v1910 = vpop.f32.mrb[0].mxu0
    %v1911 = vadd.f32 %v1005, %v1910
    %v1912 = vpop.f32.mrb[0].mxu0
    %1913 = vmatprep.mubr.bf16.mxu0 0
    %1914 = vmatmul.mubr.bf16.gmra.mrb[0].mxu0 %v1476
    %v1915 = vpop.f32.mrb[0].mxu0
    %v1916 = vadd.f32 %v1010, %v1915
    %v1917 = vpop.f32.mrb[0].mxu0
    %v1918 = vpop.f32.mrb[0].mxu0
    %v1919 = vadd.f32 %v1015, %v1918
    %v1920 = vpop.f32.mrb[0].mxu0
    %1921 = vmatprep.mubr.bf16.mxu0 0
    %1922 = vmatmul.mubr.bf16.gmra.mrb[0].mxu0 %v1477
    %v1923 = vpop.f32.mrb[0].mxu0
    %v1924 = vadd.f32 %v1020, %v1923
    %v1925 = vpop.f32.mrb[0].mxu0
    %v1926 = vpop.f32.mrb[0].mxu0
    %v1927 = vadd.f32 %v1025, %v1926
    %v1928 = vpop.f32.mrb[0].mxu0
    %1929 = vmatprep.mubr.bf16.mxu0 0
    %1930 = vmatmul.mubr.bf16.gmra.mrb[0].mxu0 %v1478
    %v1931 = vpop.f32.mrb[0].mxu0
    %v1932 = vadd.f32 %v1030, %v1931
    %v1933 = vpop.f32.mrb[0].mxu0
    %v1934 = vpop.f32.mrb[0].mxu0
    %v1935 = vadd.f32 %v1035, %v1934
    %v1936 = vpop.f32.mrb[0].mxu0
    %1937 = vmatprep.mubr.bf16.mxu0 0
    %1938 = vmatmul.mubr.bf16.gmra.mrb[0].mxu0 %v1479
    %v1939 = vpop.f32.mrb[0].mxu0
    %v1940 = vadd.f32 %v1040, %v1939
    %v1941 = vpop.f32.mrb[0].mxu0
    %v1942 = vpop.f32.mrb[0].mxu0
    %v1943 = vadd.f32 %v1045, %v1942
    %v1944 = vpop.f32.mrb[0].mxu0
    %1945 = vmatprep.mubr.bf16.mxu0 0
    %1946 = vmatmul.mubr.bf16.gmra.mrb[0].mxu0 %v1480
    %v1947 = vpop.f32.mrb[0].mxu0
    %v1948 = vadd.f32 %v1050, %v1947
    %v1949 = vpop.f32.mrb[0].mxu0
    %v1950 = vpop.f32.mrb[0].mxu0
    %v1951 = vadd.f32 %v1055, %v1950
    %v1952 = vpop.f32.mrb[0].mxu0
    %1953 = vmatprep.mubr.bf16.mxu0 0
    %1954 = vmatmul.mubr.bf16.gmra.mrb[0].mxu0 %v1481
    %v1955 = vpop.f32.mrb[0].mxu0
    %v1956 = vadd.f32 %v1060, %v1955
    %v1957 = vpop.f32.mrb[0].mxu0
    %v1958 = vpop.f32.mrb[0].mxu0
    %v1959 = vadd.f32 %v1065, %v1958
    %v1960 = vpop.f32.mrb[0].mxu0
    %1961 = vmatprep.mubr.bf16.mxu0 0
    %1962 = vmatmul.mubr.bf16.gmra.mrb[0].mxu0 %v1482
    %v1963 = vpop.f32.mrb[0].mxu0
    %v1964 = vadd.f32 %v1070, %v1963
    %v1965 = vpop.f32.mrb[0].mxu0
    %v1966 = vpop.f32.mrb[0].mxu0
    %v1967 = vadd.f32 %v1075, %v1966
    %v1968 = vpop.f32.mrb[0].mxu0
    %1969 = vmatprep.mubr.bf16.mxu0 0
    %1970 = vmatmul.mubr.bf16.gmra.mrb[0].mxu0 %v1483
    %v1971 = vpop.f32.mrb[0].mxu0
    %v1972 = vadd.f32 %v1080, %v1971
    %v1973 = vpop.f32.mrb[0].mxu0
    %v1974 = vpop.f32.mrb[0].mxu0
    %v1975 = vadd.f32 %v1085, %v1974
    %v1976 = vpop.f32.mrb[0].mxu0
    %1977 = vmatprep.mubr.bf16.mxu0 0
    %1978 = vmatmul.mubr.bf16.gmra.mrb[0].mxu0 %v1484
    %v1979 = vpop.f32.mrb[0].mxu0
    %v1980 = vadd.f32 %v1090, %v1979
    %v1981 = vpop.f32.mrb[0].mxu0
    %v1982 = vpop.f32.mrb[0].mxu0
    %v1983 = vadd.f32 %v1095, %v1982
    %v1984 = vpop.f32.mrb[0].mxu0
    %1985 = vmatprep.mubr.bf16.mxu0 0
    %1986 = vmatmul.mubr.bf16.gmra.mrb[0].mxu0 %v1485
    %v1987 = vpop.f32.mrb[0].mxu0
    %v1988 = vadd.f32 %v1100, %v1987
    %v1989 = vpop.f32.mrb[0].mxu0
    %v1990 = vpop.f32.mrb[0].mxu0
    %v1991 = vadd.f32 %v1105, %v1990
    %v1992 = vpop.f32.mrb[0].mxu0
    %1993 = vmatprep.mubr.bf16.mxu0 0
    %1994 = vmatmul.mubr.bf16.gmra.mrb[0].mxu0 %v1486
    %v1995 = vpop.f32.mrb[0].mxu0
    %v1996 = vadd.f32 %v1110, %v1995
    %v1997 = vpop.f32.mrb[0].mxu0
    %v1998 = vpop.f32.mrb[0].mxu0
    %v1999 = vadd.f32 %v1115, %v1998
    %v2000 = vpop.f32.mrb[0].mxu0
    %2001 = vmatprep.mubr.bf16.mxu0 0
    %2002 = vmatmul.mubr.bf16.gmra.mrb[0].mxu0 %v1487
    %v2003 = vpop.f32.mrb[0].mxu0
    %v2004 = vadd.f32 %v1120, %v2003
    %v2005 = vpop.f32.mrb[0].mxu0
    %v2006 = vpop.f32.mrb[0].mxu0
    %v2007 = vadd.f32 %v1125, %v2006
    %v2008 = vpop.f32.mrb[0].mxu0
    %2009 = vmatprep.mubr.bf16.mxu0 0
    %2010 = vmatmul.mubr.bf16.gmra.mrb[0].mxu0 %v1488
    %v2011 = vpop.f32.mrb[0].mxu0
    %v2012 = vadd.f32 %v1130, %v2011
    %v2013 = vpop.f32.mrb[0].mxu0
    %v2014 = vpop.f32.mrb[0].mxu0
    %v2015 = vadd.f32 %v1135, %v2014
    %v2016 = vpop.f32.mrb[0].mxu0
    %2017 = vmatprep.mubr.bf16.mxu0 0
    %2018 = vmatmul.mubr.bf16.gmra.mrb[0].mxu0 %v1489
    %v2019 = vpop.f32.mrb[0].mxu0
    %v2020 = vadd.f32 %v1140, %v2019
    %v2021 = vpop.f32.mrb[0].mxu0
    %v2022 = vpop.f32.mrb[0].mxu0
    %v2023 = vadd.f32 %v1145, %v2022
    %v2024 = vpop.f32.mrb[0].mxu0
    %2025 = vmatprep.mubr.bf16.mxu0 0
    %2026 = vmatmul.mubr.bf16.gmra.mrb[0].mxu0 %v1490
    %v2027 = vpop.f32.mrb[0].mxu0
    %v2028 = vadd.f32 %v1150, %v2027
    %v2029 = vpop.f32.mrb[0].mxu0
    %v2030 = vpop.f32.mrb[0].mxu0
    %v2031 = vadd.f32 %v1155, %v2030
    %v2032 = vpop.f32.mrb[0].mxu0
    %2033 = vmatprep.mubr.bf16.mxu0 0
    %2034 = vmatmul.mubr.bf16.gmra.mrb[0].mxu0 %v1491
    %v2035 = vpop.f32.mrb[0].mxu0
    %v2036 = vadd.f32 %v1160, %v2035
    %v2037 = vpop.f32.mrb[0].mxu0
    %v2038 = vpop.f32.mrb[0].mxu0
    %v2039 = vadd.f32 %v1165, %v2038
    %v2040 = vpop.f32.mrb[0].mxu0
    %2041 = vmatprep.mubr.bf16.mxu0 0
    %2042 = vmatmul.mubr.bf16.gmra.mrb[0].mxu0 %v1492
    %v2043 = vpop.f32.mrb[0].mxu0
    %v2044 = vadd.f32 %v1170, %v2043
    %v2045 = vpop.f32.mrb[0].mxu0
    %v2046 = vpop.f32.mrb[0].mxu0
    %v2047 = vadd.f32 %v1175, %v2046
    %v2048 = vpop.f32.mrb[0].mxu0
    %2049 = vmatprep.mubr.bf16.mxu0 0
    %2050 = vmatmul.mubr.bf16.gmra.mrb[0].mxu0 %v1493
    %v2051 = vpop.f32.mrb[0].mxu0
    %v2052 = vadd.f32 %v1180, %v2051
    %v2053 = vpop.f32.mrb[0].mxu0
    %v2054 = vpop.f32.mrb[0].mxu0
    %v2055 = vadd.f32 %v1185, %v2054
    %v2056 = vpop.f32.mrb[0].mxu0
    %2057 = vmatprep.mubr.bf16.mxu0 0
    %2058 = vmatmul.mubr.bf16.gmra.mrb[0].mxu0 %v1494
    %v2059 = vpop.f32.mrb[0].mxu0
    %v2060 = vadd.f32 %v1190, %v2059
    %v2061 = vpop.f32.mrb[0].mxu0
    %v2062 = vpop.f32.mrb[0].mxu0
    %v2063 = vadd.f32 %v1195, %v2062
    %v2064 = vpop.f32.mrb[0].mxu0
    %2065 = vmatprep.mubr.bf16.mxu0 0
    %2066 = vmatmul.mubr.bf16.gmra.mrb[0].mxu0 %v1495
    %v2067 = vpop.f32.mrb[0].mxu0
    %v2068 = vadd.f32 %v1200, %v2067
    %v2069 = vpop.f32.mrb[0].mxu0
    %v2070 = vpop.f32.mrb[0].mxu0
    %v2071 = vadd.f32 %v1205, %v2070
    %v2072 = vpop.f32.mrb[0].mxu0
    %2073 = vmatprep.mubr.bf16.mxu0 0
    %2074 = vmatmul.mubr.bf16.gmra.mrb[0].mxu0 %v1496
    %v2075 = vpop.f32.mrb[0].mxu0
    %v2076 = vadd.f32 %v1210, %v2075
    %v2077 = vpop.f32.mrb[0].mxu0
    %v2078 = vpop.f32.mrb[0].mxu0
    %v2079 = vadd.f32 %v1215, %v2078
    %v2080 = vpop.f32.mrb[0].mxu0
    %2081 = vdwg.mxu0
    %v2082 = vmax.f32 %v1636, 0.0
    %v2083 = vmax.f32 %v1639, 0.0
    %v2084 = vmax.f32 %v1644, 0.0
    %v2085 = vmax.f32 %v1647, 0.0
    %v2086 = vmax.f32 %v1652, 0.0
    %v2087 = vmax.f32 %v1655, 0.0
    %v2088 = vmax.f32 %v1660, 0.0
    %v2089 = vmax.f32 %v1663, 0.0
    %v2090 = vmax.f32 %v1668, 0.0
    %v2091 = vmax.f32 %v1671, 0.0
    %v2092 = vmax.f32 %v1676, 0.0
    %v2093 = vmax.f32 %v1679, 0.0
    %v2094 = vmax.f32 %v1684, 0.0
    %v2095 = vmax.f32 %v1687, 0.0
    %v2096 = vmax.f32 %v1692, 0.0
    %v2097 = vmax.f32 %v1695, 0.0
    %v2098 = vmax.f32 %v1700, 0.0
    %v2099 = vmax.f32 %v1703, 0.0
    %v2100 = vmax.f32 %v1708, 0.0
    %v2101 = vmax.f32 %v1711, 0.0
    %v2102 = vmax.f32 %v1716, 0.0
    %v2103 = vmax.f32 %v1719, 0.0
    %v2104 = vmax.f32 %v1724, 0.0
    %v2105 = vmax.f32 %v1727, 0.0
    %v2106 = vmax.f32 %v1732, 0.0
    %v2107 = vmax.f32 %v1735, 0.0
    %v2108 = vmax.f32 %v1740, 0.0
    %v2109 = vmax.f32 %v1743, 0.0
    %v2110 = vmax.f32 %v1748, 0.0
    %v2111 = vmax.f32 %v1751, 0.0
    %v2112 = vmax.f32 %v1756, 0.0
    %v2113 = vmax.f32 %v1759, 0.0
    %v2114 = vmax.f32 %v1764, 0.0
    %v2115 = vmax.f32 %v1767, 0.0
    %v2116 = vmax.f32 %v1772, 0.0
    %v2117 = vmax.f32 %v1775, 0.0
    %v2118 = vmax.f32 %v1780, 0.0
    %v2119 = vmax.f32 %v1783, 0.0
    %v2120 = vmax.f32 %v1788, 0.0
    %v2121 = vmax.f32 %v1791, 0.0
    %v2122 = vmax.f32 %v1796, 0.0
    %v2123 = vmax.f32 %v1799, 0.0
    %v2124 = vmax.f32 %v1804, 0.0
    %v2125 = vmax.f32 %v1807, 0.0
    %v2126 = vmax.f32 %v1812, 0.0
    %v2127 = vmax.f32 %v1815, 0.0
    %v2128 = vmax.f32 %v1820, 0.0
    %v2129 = vmax.f32 %v1823, 0.0
    %v2130 = vmax.f32 %v1828, 0.0
    %v2131 = vmax.f32 %v1831, 0.0
    %v2132 = vmax.f32 %v1836, 0.0
    %v2133 = vmax.f32 %v1839, 0.0
    %v2134 = vmax.f32 %v1844, 0.0
    %v2135 = vmax.f32 %v1847, 0.0
    %v2136 = vmax.f32 %v1852, 0.0
    %v2137 = vmax.f32 %v1855, 0.0
    %v2138 = vmax.f32 %v1860, 0.0
    %v2139 = vmax.f32 %v1863, 0.0
    %v2140 = vmax.f32 %v1868, 0.0
    %v2141 = vmax.f32 %v1871, 0.0
    %v2142 = vmax.f32 %v1876, 0.0
    %v2143 = vmax.f32 %v1879, 0.0
    %v2144 = vmax.f32 %v1884, 0.0
    %v2145 = vmax.f32 %v1887, 0.0
    %v2146 = vmax.f32 %v1892, 0.0
    %v2147 = vmax.f32 %v1895, 0.0
    %v2148 = vmax.f32 %v1900, 0.0
    %v2149 = vmax.f32 %v1903, 0.0
    %v2150 = vmax.f32 %v1908, 0.0
    %v2151 = vmax.f32 %v1911, 0.0
    %v2152 = vmax.f32 %v1916, 0.0
    %v2153 = vmax.f32 %v1919, 0.0
    %v2154 = vmax.f32 %v1924, 0.0
    %v2155 = vmax.f32 %v1927, 0.0
    %v2156 = vmax.f32 %v1932, 0.0
    %v2157 = vmax.f32 %v1935, 0.0
    %v2158 = vmax.f32 %v1940, 0.0
    %v2159 = vmax.f32 %v1943, 0.0
    %v2160 = vmax.f32 %v1948, 0.0
    %v2161 = vmax.f32 %v1951, 0.0
    %v2162 = vmax.f32 %v1956, 0.0
    %v2163 = vmax.f32 %v1959, 0.0
    %v2164 = vmax.f32 %v1964, 0.0
    %v2165 = vmax.f32 %v1967, 0.0
    %v2166 = vmax.f32 %v1972, 0.0
    %v2167 = vmax.f32 %v1975, 0.0
    %v2168 = vmax.f32 %v1980, 0.0
    %v2169 = vmax.f32 %v1983, 0.0
    %v2170 = vmax.f32 %v1988, 0.0
    %v2171 = vmax.f32 %v1991, 0.0
    %v2172 = vmax.f32 %v1996, 0.0
    %v2173 = vmax.f32 %v1999, 0.0
    %v2174 = vmax.f32 %v2004, 0.0
    %v2175 = vmax.f32 %v2007, 0.0
    %v2176 = vmax.f32 %v2012, 0.0
    %v2177 = vmax.f32 %v2015, 0.0
    %v2178 = vmax.f32 %v2020, 0.0
    %v2179 = vmax.f32 %v2023, 0.0
    %v2180 = vmax.f32 %v2028, 0.0
    %v2181 = vmax.f32 %v2031, 0.0
    %v2182 = vmax.f32 %v2036, 0.0
    %v2183 = vmax.f32 %v2039, 0.0
    %v2184 = vmax.f32 %v2044, 0.0
    %v2185 = vmax.f32 %v2047, 0.0
    %v2186 = vmax.f32 %v2052, 0.0
    %v2187 = vmax.f32 %v2055, 0.0
    %v2188 = vmax.f32 %v2060, 0.0
    %v2189 = vmax.f32 %v2063, 0.0
    %v2190 = vmax.f32 %v2068, 0.0
    %v2191 = vmax.f32 %v2071, 0.0
    %v2192 = vmax.f32 %v2076, 0.0
    %v2193 = vmax.f32 %v2079, 0.0
    %v2194 = vpack.c.bf16 %v2083, %v2082
    %v2195 = vpack.c.bf16 %v2085, %v2084
    %v2196 = vpack.c.bf16 %v2087, %v2086
    %v2197 = vpack.c.bf16 %v2089, %v2088
    %v2198 = vpack.c.bf16 %v2091, %v2090
    %v2199 = vpack.c.bf16 %v2093, %v2092
    %v2200 = vpack.c.bf16 %v2095, %v2094
    %v2201 = vpack.c.bf16 %v2097, %v2096
    %v2202 = vpack.c.bf16 %v2099, %v2098
    %v2203 = vpack.c.bf16 %v2101, %v2100
    %v2204 = vpack.c.bf16 %v2103, %v2102
    %v2205 = vpack.c.bf16 %v2105, %v2104
    %v2206 = vpack.c.bf16 %v2107, %v2106
    %v2207 = vpack.c.bf16 %v2109, %v2108
    %v2208 = vpack.c.bf16 %v2111, %v2110
    %v2209 = vpack.c.bf16 %v2113, %v2112
    %v2210 = vpack.c.bf16 %v2115, %v2114
    %v2211 = vpack.c.bf16 %v2117, %v2116
    %v2212 = vpack.c.bf16 %v2119, %v2118
    %v2213 = vpack.c.bf16 %v2121, %v2120
    %v2214 = vpack.c.bf16 %v2123, %v2122
    %v2215 = vpack.c.bf16 %v2125, %v2124
    %v2216 = vpack.c.bf16 %v2127, %v2126
    %v2217 = vpack.c.bf16 %v2129, %v2128
    %v2218 = vpack.c.bf16 %v2131, %v2130
    %v2219 = vpack.c.bf16 %v2133, %v2132
    %v2220 = vpack.c.bf16 %v2135, %v2134
    %v2221 = vpack.c.bf16 %v2137, %v2136
    %v2222 = vpack.c.bf16 %v2139, %v2138
    %v2223 = vpack.c.bf16 %v2141, %v2140
    %v2224 = vpack.c.bf16 %v2143, %v2142
    %v2225 = vpack.c.bf16 %v2145, %v2144
    %v2226 = vpack.c.bf16 %v2147, %v2146
    %v2227 = vpack.c.bf16 %v2149, %v2148
    %v2228 = vpack.c.bf16 %v2151, %v2150
    %v2229 = vpack.c.bf16 %v2153, %v2152
    %v2230 = vpack.c.bf16 %v2155, %v2154
    %v2231 = vpack.c.bf16 %v2157, %v2156
    %v2232 = vpack.c.bf16 %v2159, %v2158
    %v2233 = vpack.c.bf16 %v2161, %v2160
    %v2234 = vpack.c.bf16 %v2163, %v2162
    %v2235 = vpack.c.bf16 %v2165, %v2164
    %v2236 = vpack.c.bf16 %v2167, %v2166
    %v2237 = vpack.c.bf16 %v2169, %v2168
    %v2238 = vpack.c.bf16 %v2171, %v2170
    %v2239 = vpack.c.bf16 %v2173, %v2172
    %v2240 = vpack.c.bf16 %v2175, %v2174
    %v2241 = vpack.c.bf16 %v2177, %v2176
    %v2242 = vpack.c.bf16 %v2179, %v2178
    %v2243 = vpack.c.bf16 %v2181, %v2180
    %v2244 = vpack.c.bf16 %v2183, %v2182
    %v2245 = vpack.c.bf16 %v2185, %v2184
    %v2246 = vpack.c.bf16 %v2187, %v2186
    %v2247 = vpack.c.bf16 %v2189, %v2188
    %v2248 = vpack.c.bf16 %v2191, %v2190
    %v2249 = vpack.c.bf16 %v2193, %v2192
    %v2250 = vld [vmem:[%s2] sm:$0xff]
    %v2251 = vld [vmem:[%s2 + $0x8] sm:$0xff]
    %v2252 = vld [vmem:[%s2 + $0x10] sm:$0xff]
    %v2253 = vld [vmem:[%s2 + $0x18] sm:$0xf]
    %v2254 = vld [vmem:[%s2 + $0x1c] sm:$0xff]
    %v2255 = vld [vmem:[%s2 + $0x24] sm:$0xff]
    %v2256 = vld [vmem:[%s2 + $0x2c] sm:$0xff]
    %v2257 = vld [vmem:[%s2 + $0x34] sm:$0xf]
    %v2258 = vld [vmem:[%s2 + $0x38] sm:$0xff]
    %v2259 = vld [vmem:[%s2 + $0x40] sm:$0xff]
    %v2260 = vld [vmem:[%s2 + $0x48] sm:$0xff]
    %v2261 = vld [vmem:[%s2 + $0x50] sm:$0xf]
    %v2262 = vld [vmem:[%s2 + $0x54] sm:$0xff]
    %v2263 = vld [vmem:[%s2 + $0x5c] sm:$0xff]
    %v2264 = vld [vmem:[%s2 + $0x64] sm:$0xff]
    %v2265 = vld [vmem:[%s2 + $0x6c] sm:$0xf]
    %v2266 = vld [vmem:[%s2 + $0x70] sm:$0xff]
    %v2267 = vld [vmem:[%s2 + $0x78] sm:$0xff]
    %v2268 = vld [vmem:[%s2 + $0x80] sm:$0xff]
    %v2269 = vld [vmem:[%s2 + $0x88] sm:$0xf]
    %v2270 = vld [vmem:[%s2 + $0x8c] sm:$0xff]
    %v2271 = vld [vmem:[%s2 + $0x94] sm:$0xff]
    %v2272 = vld [vmem:[%s2 + $0x9c] sm:$0xff]
    %v2273 = vld [vmem:[%s2 + $0xa4] sm:$0xf]
    %v2274 = vld [vmem:[%s2 + $0xa8] sm:$0xff]
    %v2275 = vld [vmem:[%s2 + $0xb0] sm:$0xff]
    %v2276 = vld [vmem:[%s2 + $0xb8] sm:$0xff]
    %v2277 = vld [vmem:[%s2 + $0xc0] sm:$0xf]
    %v2278 = vld [vmem:[%s2 + $0xc4] sm:$0xff]
    %v2279 = vld [vmem:[%s2 + $0xcc] sm:$0xff]
    %v2280 = vld [vmem:[%s2 + $0xd4] sm:$0xff]
    %v2281 = vld [vmem:[%s2 + $0xdc] sm:$0xf]
    %v2282 = vld [vmem:[%s2 + $0xe0] sm:$0xff]
    %v2283 = vld [vmem:[%s2 + $0xe8] sm:$0xff]
    %v2284 = vld [vmem:[%s2 + $0xf0] sm:$0xff]
    %v2285 = vld [vmem:[%s2 + $0xf8] sm:$0xf]
    %v2286 = vld [vmem:[%s2 + $0xfc] sm:$0xff]
    %v2287 = vld [vmem:[%s2 + $0x104] sm:$0xff]
    %v2288 = vld [vmem:[%s2 + $0x10c] sm:$0xff]
    %v2289 = vld [vmem:[%s2 + $0x114] sm:$0xf]
    %v2290 = vld [vmem:[%s2 + $0x118] sm:$0xff]
    %v2291 = vld [vmem:[%s2 + $0x120] sm:$0xff]
    %v2292 = vld [vmem:[%s2 + $0x128] sm:$0xff]
    %v2293 = vld [vmem:[%s2 + $0x130] sm:$0xf]
    %v2294 = vld [vmem:[%s2 + $0x134] sm:$0xff]
    %v2295 = vld [vmem:[%s2 + $0x13c] sm:$0xff]
    %v2296 = vld [vmem:[%s2 + $0x144] sm:$0xff]
    %v2297 = vld [vmem:[%s2 + $0x14c] sm:$0xf]
    %v2298 = vld [vmem:[%s2 + $0x150] sm:$0xff]
    %v2299 = vld [vmem:[%s2 + $0x158] sm:$0xff]
    %v2300 = vld [vmem:[%s2 + $0x160] sm:$0xff]
    %v2301 = vld [vmem:[%s2 + $0x168] sm:$0xf]
    %v2302 = vld [vmem:[%s2 + $0x16c] sm:$0xff]
    %v2303 = vld [vmem:[%s2 + $0x174] sm:$0xff]
    %v2304 = vld [vmem:[%s2 + $0x17c] sm:$0xff]
    %v2305 = vld [vmem:[%s2 + $0x184] sm:$0xf]
    %v2306 = vld [vmem:[%s2 + $0x188] sm:$0xff]
    %v2307 = vld [vmem:[%s2 + $0x190] sm:$0xff]
    %v2308 = vld [vmem:[%s2 + $0x198] sm:$0xff]
    %v2309 = vld [vmem:[%s2 + $0x1a0] sm:$0xf]
    %v2310 = vld [vmem:[%s2 + $0x1a4] sm:$0xff]
    %v2311 = vld [vmem:[%s2 + $0x1ac] sm:$0xff]
    %v2312 = vld [vmem:[%s2 + $0x1b4] sm:$0xff]
    %v2313 = vld [vmem:[%s2 + $0x1bc] sm:$0xf]
    %v2314 = vld [vmem:[%s2 + $0x1c0] sm:$0xff]
    %v2315 = vld [vmem:[%s2 + $0x1c8] sm:$0xff]
    %v2316 = vld [vmem:[%s2 + $0x1d0] sm:$0xff]
    %v2317 = vld [vmem:[%s2 + $0x1d8] sm:$0xf]
    %v2318 = vld [vmem:[%s2 + $0x1dc] sm:$0xff]
    %v2319 = vld [vmem:[%s2 + $0x1e4] sm:$0xff]
    %v2320 = vld [vmem:[%s2 + $0x1ec] sm:$0xff]
    %v2321 = vld [vmem:[%s2 + $0x1f4] sm:$0xf]
    %v2322 = vld [vmem:[%s2 + $0x1f8] sm:$0xff]
    %v2323 = vld [vmem:[%s2 + $0x200] sm:$0xff]
    %v2324 = vld [vmem:[%s2 + $0x208] sm:$0xff]
    %v2325 = vld [vmem:[%s2 + $0x210] sm:$0xf]
    %v2326 = vld [vmem:[%s2 + $0x214] sm:$0xff]
    %v2327 = vld [vmem:[%s2 + $0x21c] sm:$0xff]
    %v2328 = vld [vmem:[%s2 + $0x224] sm:$0xff]
    %v2329 = vld [vmem:[%s2 + $0x22c] sm:$0xf]
    %v2330 = vld [vmem:[%s2 + $0x230] sm:$0xff]
    %v2331 = vld [vmem:[%s2 + $0x238] sm:$0xff]
    %v2332 = vld [vmem:[%s2 + $0x240] sm:$0xff]
    %v2333 = vld [vmem:[%s2 + $0x248] sm:$0xf]
    %v2334 = vld [vmem:[%s2 + $0x24c] sm:$0xff]
    %v2335 = vld [vmem:[%s2 + $0x254] sm:$0xff]
    %v2336 = vld [vmem:[%s2 + $0x25c] sm:$0xff]
    %v2337 = vld [vmem:[%s2 + $0x264] sm:$0xf]
    %v2338 = vld [vmem:[%s2 + $0x268] sm:$0xff]
    %v2339 = vld [vmem:[%s2 + $0x270] sm:$0xff]
    %v2340 = vld [vmem:[%s2 + $0x278] sm:$0xff]
    %v2341 = vld [vmem:[%s2 + $0x280] sm:$0xf]
    %v2342 = vld [vmem:[%s2 + $0x284] sm:$0xff]
    %v2343 = vld [vmem:[%s2 + $0x28c] sm:$0xff]
    %v2344 = vld [vmem:[%s2 + $0x294] sm:$0xff]
    %v2345 = vld [vmem:[%s2 + $0x29c] sm:$0xf]
    %v2346 = vld [vmem:[%s2 + $0x2a0] sm:$0xff]
    %v2347 = vld [vmem:[%s2 + $0x2a8] sm:$0xff]
    %v2348 = vld [vmem:[%s2 + $0x2b0] sm:$0xff]
    %v2349 = vld [vmem:[%s2 + $0x2b8] sm:$0xf]
    %v2350 = vld [vmem:[%s2 + $0x2bc] sm:$0xff]
    %v2351 = vld [vmem:[%s2 + $0x2c4] sm:$0xff]
    %v2352 = vld [vmem:[%s2 + $0x2cc] sm:$0xff]
    %v2353 = vld [vmem:[%s2 + $0x2d4] sm:$0xf]
    %v2354 = vld [vmem:[%s2 + $0x2d8] sm:$0xff]
    %v2355 = vld [vmem:[%s2 + $0x2e0] sm:$0xff]
    %v2356 = vld [vmem:[%s2 + $0x2e8] sm:$0xff]
    %v2357 = vld [vmem:[%s2 + $0x2f0] sm:$0xf]
    %v2358 = vld [vmem:[%s2 + $0x2f4] sm:$0xff]
    %v2359 = vld [vmem:[%s2 + $0x2fc] sm:$0xff]
    %v2360 = vld [vmem:[%s2 + $0x304] sm:$0xff]
    %v2361 = vld [vmem:[%s2 + $0x30c] sm:$0xf]
    %v2362 = vld [vmem:[%s2 + $0x310] sm:$0xff]
    %v2363 = vld [vmem:[%s2 + $0x318] sm:$0xff]
    %v2364 = vld [vmem:[%s2 + $0x320] sm:$0xff]
    %v2365 = vld [vmem:[%s2 + $0x328] sm:$0xf]
    %v2366 = vld [vmem:[%s2 + $0x32c] sm:$0xff]
    %v2367 = vld [vmem:[%s2 + $0x334] sm:$0xff]
    %v2368 = vld [vmem:[%s2 + $0x33c] sm:$0xff]
    %v2369 = vld [vmem:[%s2 + $0x344] sm:$0xf]
    %v2370 = vld [vmem:[%s2 + $0x348] sm:$0xff]
    %v2371 = vld [vmem:[%s2 + $0x350] sm:$0xff]
    %v2372 = vld [vmem:[%s2 + $0x358] sm:$0xff]
    %v2373 = vld [vmem:[%s2 + $0x360] sm:$0xf]
    %v2374 = vld [vmem:[%s2 + $0x364] sm:$0xff]
    %v2375 = vld [vmem:[%s2 + $0x36c] sm:$0xff]
    %v2376 = vld [vmem:[%s2 + $0x374] sm:$0xff]
    %v2377 = vld [vmem:[%s2 + $0x37c] sm:$0xf]
    %v2378 = vld [vmem:[%s2 + $0x380] sm:$0xff]
    %v2379 = vld [vmem:[%s2 + $0x388] sm:$0xff]
    %v2380 = vld [vmem:[%s2 + $0x390] sm:$0xff]
    %v2381 = vld [vmem:[%s2 + $0x398] sm:$0xf]
    %v2382 = vld [vmem:[%s2 + $0x39c] sm:$0xff]
    %v2383 = vld [vmem:[%s2 + $0x3a4] sm:$0xff]
    %v2384 = vld [vmem:[%s2 + $0x3ac] sm:$0xff]
    %v2385 = vld [vmem:[%s2 + $0x3b4] sm:$0xf]
    %v2386 = vld [vmem:[%s2 + $0x3b8] sm:$0xff]
    %v2387 = vld [vmem:[%s2 + $0x3c0] sm:$0xff]
    %v2388 = vld [vmem:[%s2 + $0x3c8] sm:$0xff]
    %v2389 = vld [vmem:[%s2 + $0x3d0] sm:$0xf]
    %v2390 = vld [vmem:[%s2 + $0x3d4] sm:$0xff]
    %v2391 = vld [vmem:[%s2 + $0x3dc] sm:$0xff]
    %v2392 = vld [vmem:[%s2 + $0x3e4] sm:$0xff]
    %v2393 = vld [vmem:[%s2 + $0x3ec] sm:$0xf]
    %v2394 = vld [vmem:[%s2 + $0x3f0] sm:$0xff]
    %v2395 = vld [vmem:[%s2 + $0x3f8] sm:$0xff]
    %v2396 = vld [vmem:[%s2 + $0x400] sm:$0xff]
    %v2397 = vld [vmem:[%s2 + $0x408] sm:$0xf]
    %v2398 = vld [vmem:[%s2 + $0x40c] sm:$0xff]
    %v2399 = vld [vmem:[%s2 + $0x414] sm:$0xff]
    %v2400 = vld [vmem:[%s2 + $0x41c] sm:$0xff]
    %v2401 = vld [vmem:[%s2 + $0x424] sm:$0xf]
    %v2402 = vld [vmem:[%s2 + $0x428] sm:$0xff]
    %v2403 = vld [vmem:[%s2 + $0x430] sm:$0xff]
    %v2404 = vld [vmem:[%s2 + $0x438] sm:$0xff]
    %v2405 = vld [vmem:[%s2 + $0x440] sm:$0xf]
    %v2406 = vld [vmem:[%s2 + $0x444] sm:$0xff]
    %v2407 = vld [vmem:[%s2 + $0x44c] sm:$0xff]
    %v2408 = vld [vmem:[%s2 + $0x454] sm:$0xff]
    %v2409 = vld [vmem:[%s2 + $0x45c] sm:$0xf]
    %v2410 = vld [vmem:[%s2 + $0x460] sm:$0xff]
    %v2411 = vld [vmem:[%s2 + $0x468] sm:$0xff]
    %v2412 = vld [vmem:[%s2 + $0x470] sm:$0xff]
    %v2413 = vld [vmem:[%s2 + $0x478] sm:$0xf]
    %v2414 = vld [vmem:[%s2 + $0x47c] sm:$0xff]
    %v2415 = vld [vmem:[%s2 + $0x484] sm:$0xff]
    %v2416 = vld [vmem:[%s2 + $0x48c] sm:$0xff]
    %v2417 = vld [vmem:[%s2 + $0x494] sm:$0xf]
    %v2418 = vld [vmem:[%s2 + $0x498] sm:$0xff]
    %v2419 = vld [vmem:[%s2 + $0x4a0] sm:$0xff]
    %v2420 = vld [vmem:[%s2 + $0x4a8] sm:$0xff]
    %v2421 = vld [vmem:[%s2 + $0x4b0] sm:$0xf]
    %v2422 = vld [vmem:[%s2 + $0x4b4] sm:$0xff]
    %v2423 = vld [vmem:[%s2 + $0x4bc] sm:$0xff]
    %v2424 = vld [vmem:[%s2 + $0x4c4] sm:$0xff]
    %v2425 = vld [vmem:[%s2 + $0x4cc] sm:$0xf]
    %v2426 = vld [vmem:[%s2 + $0x4d0] sm:$0xff]
    %v2427 = vld [vmem:[%s2 + $0x4d8] sm:$0xff]
    %v2428 = vld [vmem:[%s2 + $0x4e0] sm:$0xff]
    %v2429 = vld [vmem:[%s2 + $0x4e8] sm:$0xf]
    %v2430 = vld [vmem:[%s2 + $0x4ec] sm:$0xff]
    %v2431 = vld [vmem:[%s2 + $0x4f4] sm:$0xff]
    %v2432 = vld [vmem:[%s2 + $0x4fc] sm:$0xff]
    %v2433 = vld [vmem:[%s2 + $0x504] sm:$0xf]
    %v2434 = vld [vmem:[%s2 + $0x508] sm:$0xff]
    %v2435 = vld [vmem:[%s2 + $0x510] sm:$0xff]
    %v2436 = vld [vmem:[%s2 + $0x518] sm:$0xff]
    %v2437 = vld [vmem:[%s2 + $0x520] sm:$0xf]
    %v2438 = vld [vmem:[%s2 + $0x524] sm:$0xff]
    %v2439 = vld [vmem:[%s2 + $0x52c] sm:$0xff]
    %v2440 = vld [vmem:[%s2 + $0x534] sm:$0xff]
    %v2441 = vld [vmem:[%s2 + $0x53c] sm:$0xf]
    %v2442 = vld [vmem:[%s3] sm:$0xff]
    %v2443 = vld [vmem:[%s3 + $0x8] sm:$0xff]
    %v2444 = vld [vmem:[%s3 + $0x10] sm:$0xff]
    %v2445 = vld [vmem:[%s3 + $0x18] sm:$0xff]
    %v2446 = vld [vmem:[%s3 + $0x20] sm:$0xff]
    %v2447 = vld [vmem:[%s3 + $0x28] sm:$0xff]
    %v2448 = vld [vmem:[%s3 + $0x30] sm:$0xff]
    %v2449 = vld [vmem:[%s3 + $0x38] sm:$0xff]
    %v2450 = vld [vmem:[%s3 + $0x40] sm:$0xff]
    %v2451 = vld [vmem:[%s3 + $0x48] sm:$0xff]
    %v2452 = vld [vmem:[%s3 + $0x50] sm:$0xff]
    %v2453 = vld [vmem:[%s3 + $0x58] sm:$0xff]
    %v2454 = vld [vmem:[%s3 + $0x60] sm:$0xff]
    %v2455 = vld [vmem:[%s3 + $0x68] sm:$0xff]
    %v2456 = vld [vmem:[%s3 + $0x70] sm:$0xff]
    %v2457 = vld [vmem:[%s3 + $0x78] sm:$0xff]
    %v2458 = vld [vmem:[%s3 + $0x80] sm:$0xff]
    %v2459 = vld [vmem:[%s3 + $0x88] sm:$0xff]
    %v2460 = vld [vmem:[%s3 + $0x90] sm:$0xff]
    %v2461 = vld [vmem:[%s3 + $0x98] sm:$0xff]
    %v2462 = vld [vmem:[%s3 + $0xa0] sm:$0xff]
    %v2463 = vld [vmem:[%s3 + $0xa8] sm:$0xff]
    %v2464 = vld [vmem:[%s3 + $0xb0] sm:$0xff]
    %v2465 = vld [vmem:[%s3 + $0xb8] sm:$0xff]
    %v2466 = vld [vmem:[%s3 + $0xc0] sm:$0xff]
    %v2467 = vld [vmem:[%s3 + $0xc8] sm:$0xff]
    %v2468 = vld [vmem:[%s3 + $0xd0] sm:$0xff]
    %v2469 = vld [vmem:[%s3 + $0xd8] sm:$0xff]
    %v2470 = vld [vmem:[%s3 + $0xe0] sm:$0xff]
    %v2471 = vld [vmem:[%s3 + $0xe8] sm:$0xff]
    %v2472 = vld [vmem:[%s3 + $0xf0] sm:$0xff]
    %v2473 = vld [vmem:[%s3 + $0xf8] sm:$0xff]
    %v2474 = vld [vmem:[%s3 + $0x100] sm:$0xff]
    %v2475 = vld [vmem:[%s3 + $0x108] sm:$0xff]
    %v2476 = vld [vmem:[%s3 + $0x110] sm:$0xff]
    %v2477 = vld [vmem:[%s3 + $0x118] sm:$0xff]
    %v2478 = vld [vmem:[%s3 + $0x120] sm:$0xff]
    %v2479 = vld [vmem:[%s3 + $0x128] sm:$0xff]
    %v2480 = vld [vmem:[%s3 + $0x130] sm:$0xff]
    %v2481 = vld [vmem:[%s3 + $0x138] sm:$0xff]
    %v2482 = vld [vmem:[%s3 + $0x140] sm:$0xff]
    %v2483 = vld [vmem:[%s3 + $0x148] sm:$0xff]
    %v2484 = vld [vmem:[%s3 + $0x150] sm:$0xff]
    %v2485 = vld [vmem:[%s3 + $0x158] sm:$0xff]
    %v2486 = vld [vmem:[%s3 + $0x160] sm:$0xff]
    %v2487 = vld [vmem:[%s3 + $0x168] sm:$0xff]
    %v2488 = vld [vmem:[%s3 + $0x170] sm:$0xff]
    %v2489 = vld [vmem:[%s3 + $0x178] sm:$0xff]
    %2491 = vset.pattern.permute.xlu0 0
    %2492 = vperm.xlu0 %2491, %v2442
    %v2493 = vpop.permute.xlu0 %2492
    %2496 = vset.pattern.permute.xlu0 0
    %2497 = vperm.xlu0 %2496, %v2443
    %v2498 = vpop.permute.xlu0 %2497
    %2501 = vset.pattern.permute.xlu0 0
    %2502 = vperm.xlu0 %2501, %v2444
    %v2503 = vpop.permute.xlu0 %2502
    %2506 = vset.pattern.permute.xlu0 0
    %2507 = vperm.xlu0 %2506, %v2445
    %v2508 = vpop.permute.xlu0 %2507
    %2511 = vset.pattern.permute.xlu0 0
    %2512 = vperm.xlu0 %2511, %v2446
    %v2513 = vpop.permute.xlu0 %2512
    %2516 = vset.pattern.permute.xlu0 0
    %2517 = vperm.xlu0 %2516, %v2447
    %v2518 = vpop.permute.xlu0 %2517
    %2521 = vset.pattern.permute.xlu0 0
    %2522 = vperm.xlu0 %2521, %v2448
    %v2523 = vpop.permute.xlu0 %2522
    %2526 = vset.pattern.permute.xlu0 0
    %2527 = vperm.xlu0 %2526, %v2449
    %v2528 = vpop.permute.xlu0 %2527
    %2531 = vset.pattern.permute.xlu0 0
    %2532 = vperm.xlu0 %2531, %v2450
    %v2533 = vpop.permute.xlu0 %2532
    %2536 = vset.pattern.permute.xlu0 0
    %2537 = vperm.xlu0 %2536, %v2451
    %v2538 = vpop.permute.xlu0 %2537
    %2541 = vset.pattern.permute.xlu0 0
    %2542 = vperm.xlu0 %2541, %v2452
    %v2543 = vpop.permute.xlu0 %2542
    %2546 = vset.pattern.permute.xlu0 0
    %2547 = vperm.xlu0 %2546, %v2453
    %v2548 = vpop.permute.xlu0 %2547
    %2551 = vset.pattern.permute.xlu0 0
    %2552 = vperm.xlu0 %2551, %v2454
    %v2553 = vpop.permute.xlu0 %2552
    %2556 = vset.pattern.permute.xlu0 0
    %2557 = vperm.xlu0 %2556, %v2455
    %v2558 = vpop.permute.xlu0 %2557
    %2561 = vset.pattern.permute.xlu0 0
    %2562 = vperm.xlu0 %2561, %v2456
    %v2563 = vpop.permute.xlu0 %2562
    %2566 = vset.pattern.permute.xlu0 0
    %2567 = vperm.xlu0 %2566, %v2457
    %v2568 = vpop.permute.xlu0 %2567
    %2571 = vset.pattern.permute.xlu0 0
    %2572 = vperm.xlu0 %2571, %v2458
    %v2573 = vpop.permute.xlu0 %2572
    %2576 = vset.pattern.permute.xlu0 0
    %2577 = vperm.xlu0 %2576, %v2459
    %v2578 = vpop.permute.xlu0 %2577
    %2581 = vset.pattern.permute.xlu0 0
    %2582 = vperm.xlu0 %2581, %v2460
    %v2583 = vpop.permute.xlu0 %2582
    %2586 = vset.pattern.permute.xlu0 0
    %2587 = vperm.xlu0 %2586, %v2461
    %v2588 = vpop.permute.xlu0 %2587
    %2591 = vset.pattern.permute.xlu0 0
    %2592 = vperm.xlu0 %2591, %v2462
    %v2593 = vpop.permute.xlu0 %2592
    %2596 = vset.pattern.permute.xlu0 0
    %2597 = vperm.xlu0 %2596, %v2463
    %v2598 = vpop.permute.xlu0 %2597
    %2601 = vset.pattern.permute.xlu0 0
    %2602 = vperm.xlu0 %2601, %v2464
    %v2603 = vpop.permute.xlu0 %2602
    %2606 = vset.pattern.permute.xlu0 0
    %2607 = vperm.xlu0 %2606, %v2465
    %v2608 = vpop.permute.xlu0 %2607
    %2611 = vset.pattern.permute.xlu0 0
    %2612 = vperm.xlu0 %2611, %v2466
    %v2613 = vpop.permute.xlu0 %2612
    %2616 = vset.pattern.permute.xlu0 0
    %2617 = vperm.xlu0 %2616, %v2467
    %v2618 = vpop.permute.xlu0 %2617
    %2621 = vset.pattern.permute.xlu0 0
    %2622 = vperm.xlu0 %2621, %v2468
    %v2623 = vpop.permute.xlu0 %2622
    %2626 = vset.pattern.permute.xlu0 0
    %2627 = vperm.xlu0 %2626, %v2469
    %v2628 = vpop.permute.xlu0 %2627
    %2631 = vset.pattern.permute.xlu0 0
    %2632 = vperm.xlu0 %2631, %v2470
    %v2633 = vpop.permute.xlu0 %2632
    %2636 = vset.pattern.permute.xlu0 0
    %2637 = vperm.xlu0 %2636, %v2471
    %v2638 = vpop.permute.xlu0 %2637
    %2641 = vset.pattern.permute.xlu0 0
    %2642 = vperm.xlu0 %2641, %v2472
    %v2643 = vpop.permute.xlu0 %2642
    %2646 = vset.pattern.permute.xlu0 0
    %2647 = vperm.xlu0 %2646, %v2473
    %v2648 = vpop.permute.xlu0 %2647
    %2651 = vset.pattern.permute.xlu0 0
    %2652 = vperm.xlu0 %2651, %v2474
    %v2653 = vpop.permute.xlu0 %2652
    %2656 = vset.pattern.permute.xlu0 0
    %2657 = vperm.xlu0 %2656, %v2475
    %v2658 = vpop.permute.xlu0 %2657
    %2661 = vset.pattern.permute.xlu0 0
    %2662 = vperm.xlu0 %2661, %v2476
    %v2663 = vpop.permute.xlu0 %2662
    %2666 = vset.pattern.permute.xlu0 0
    %2667 = vperm.xlu0 %2666, %v2477
    %v2668 = vpop.permute.xlu0 %2667
    %2671 = vset.pattern.permute.xlu0 0
    %2672 = vperm.xlu0 %2671, %v2478
    %v2673 = vpop.permute.xlu0 %2672
    %2676 = vset.pattern.permute.xlu0 0
    %2677 = vperm.xlu0 %2676, %v2479
    %v2678 = vpop.permute.xlu0 %2677
    %2681 = vset.pattern.permute.xlu0 0
    %2682 = vperm.xlu0 %2681, %v2480
    %v2683 = vpop.permute.xlu0 %2682
    %2686 = vset.pattern.permute.xlu0 0
    %2687 = vperm.xlu0 %2686, %v2481
    %v2688 = vpop.permute.xlu0 %2687
    %2691 = vset.pattern.permute.xlu0 0
    %2692 = vperm.xlu0 %2691, %v2482
    %v2693 = vpop.permute.xlu0 %2692
    %2696 = vset.pattern.permute.xlu0 0
    %2697 = vperm.xlu0 %2696, %v2483
    %v2698 = vpop.permute.xlu0 %2697
    %2701 = vset.pattern.permute.xlu0 0
    %2702 = vperm.xlu0 %2701, %v2484
    %v2703 = vpop.permute.xlu0 %2702
    %2706 = vset.pattern.permute.xlu0 0
    %2707 = vperm.xlu0 %2706, %v2485
    %v2708 = vpop.permute.xlu0 %2707
    %2711 = vset.pattern.permute.xlu0 0
    %2712 = vperm.xlu0 %2711, %v2486
    %v2713 = vpop.permute.xlu0 %2712
    %2716 = vset.pattern.permute.xlu0 0
    %2717 = vperm.xlu0 %2716, %v2487
    %v2718 = vpop.permute.xlu0 %2717
    %2721 = vset.pattern.permute.xlu0 0
    %2722 = vperm.xlu0 %2721, %v2488
    %v2723 = vpop.permute.xlu0 %2722
    %2726 = vset.pattern.permute.xlu0 0
    %2727 = vperm.xlu0 %2726, %v2489
    %v2728 = vpop.permute.xlu0 %2727
    %v2922 = vunpack.c.l.b16 %v2250
    %v2923 = vunpack.c.h.b16 %v2250
    %v2924 = vunpack.c.l.b16 %v2251
    %v2925 = vunpack.c.h.b16 %v2251
    %v2926 = vunpack.c.l.b16 %v2252
    %v2927 = vunpack.c.h.b16 %v2252
    %v2928 = vunpack.c.l.b16 %v2253
    %v2929 = vunpack.c.l.b16 %v2254
    %v2930 = vunpack.c.h.b16 %v2254
    %v2931 = vunpack.c.l.b16 %v2255
    %v2932 = vunpack.c.h.b16 %v2255
    %v2933 = vunpack.c.l.b16 %v2256
    %v2934 = vunpack.c.h.b16 %v2256
    %v2935 = vunpack.c.l.b16 %v2257
    %v2936 = vunpack.c.l.b16 %v2258
    %v2937 = vunpack.c.h.b16 %v2258
    %v2938 = vunpack.c.l.b16 %v2259
    %v2939 = vunpack.c.h.b16 %v2259
    %v2940 = vunpack.c.l.b16 %v2260
    %v2941 = vunpack.c.h.b16 %v2260
    %v2942 = vunpack.c.l.b16 %v2261
    %v2943 = vunpack.c.l.b16 %v2262
    %v2944 = vunpack.c.h.b16 %v2262
    %v2945 = vunpack.c.l.b16 %v2263
    %v2946 = vunpack.c.h.b16 %v2263
    %v2947 = vunpack.c.l.b16 %v2264
    %v2948 = vunpack.c.h.b16 %v2264
    %v2949 = vunpack.c.l.b16 %v2265
    %v2950 = vunpack.c.l.b16 %v2266
    %v2951 = vunpack.c.h.b16 %v2266
    %v2952 = vunpack.c.l.b16 %v2267
    %v2953 = vunpack.c.h.b16 %v2267
    %v2954 = vunpack.c.l.b16 %v2268
    %v2955 = vunpack.c.h.b16 %v2268
    %v2956 = vunpack.c.l.b16 %v2269
    %v2957 = vunpack.c.l.b16 %v2270
    %v2958 = vunpack.c.h.b16 %v2270
    %v2959 = vunpack.c.l.b16 %v2271
    %v2960 = vunpack.c.h.b16 %v2271
    %v2961 = vunpack.c.l.b16 %v2272
    %v2962 = vunpack.c.h.b16 %v2272
    %v2963 = vunpack.c.l.b16 %v2273
    %v2964 = vunpack.c.l.b16 %v2274
    %v2965 = vunpack.c.h.b16 %v2274
    %v2966 = vunpack.c.l.b16 %v2275
    %v2967 = vunpack.c.h.b16 %v2275
    %v2968 = vunpack.c.l.b16 %v2276
    %v2969 = vunpack.c.h.b16 %v2276
    %v2970 = vunpack.c.l.b16 %v2277
    %v2971 = vunpack.c.l.b16 %v2278
    %v2972 = vunpack.c.h.b16 %v2278
    %v2973 = vunpack.c.l.b16 %v2279
    %v2974 = vunpack.c.h.b16 %v2279
    %v2975 = vunpack.c.l.b16 %v2280
    %v2976 = vunpack.c.h.b16 %v2280
    %v2977 = vunpack.c.l.b16 %v2281
    %v2978 = vunpack.c.l.b16 %v2282
    %v2979 = vunpack.c.h.b16 %v2282
    %v2980 = vunpack.c.l.b16 %v2283
    %v2981 = vunpack.c.h.b16 %v2283
    %v2982 = vunpack.c.l.b16 %v2284
    %v2983 = vunpack.c.h.b16 %v2284
    %v2984 = vunpack.c.l.b16 %v2285
    %v2985 = vunpack.c.l.b16 %v2286
    %v2986 = vunpack.c.h.b16 %v2286
    %v2987 = vunpack.c.l.b16 %v2287
    %v2988 = vunpack.c.h.b16 %v2287
    %v2989 = vunpack.c.l.b16 %v2288
    %v2990 = vunpack.c.h.b16 %v2288
    %v2991 = vunpack.c.l.b16 %v2289
    %v2992 = vunpack.c.l.b16 %v2290
    %v2993 = vunpack.c.h.b16 %v2290
    %v2994 = vunpack.c.l.b16 %v2291
    %v2995 = vunpack.c.h.b16 %v2291
    %v2996 = vunpack.c.l.b16 %v2292
    %v2997 = vunpack.c.h.b16 %v2292
    %v2998 = vunpack.c.l.b16 %v2293
    %v2999 = vunpack.c.l.b16 %v2294
    %v3000 = vunpack.c.h.b16 %v2294
    %v3001 = vunpack.c.l.b16 %v2295
    %v3002 = vunpack.c.h.b16 %v2295
    %v3003 = vunpack.c.l.b16 %v2296
    %v3004 = vunpack.c.h.b16 %v2296
    %v3005 = vunpack.c.l.b16 %v2297
    %v3006 = vunpack.c.l.b16 %v2298
    %v3007 = vunpack.c.h.b16 %v2298
    %v3008 = vunpack.c.l.b16 %v2299
    %v3009 = vunpack.c.h.b16 %v2299
    %v3010 = vunpack.c.l.b16 %v2300
    %v3011 = vunpack.c.h.b16 %v2300
    %v3012 = vunpack.c.l.b16 %v2301
    %v3013 = vunpack.c.l.b16 %v2302
    %v3014 = vunpack.c.h.b16 %v2302
    %v3015 = vunpack.c.l.b16 %v2303
    %v3016 = vunpack.c.h.b16 %v2303
    %v3017 = vunpack.c.l.b16 %v2304
    %v3018 = vunpack.c.h.b16 %v2304
    %v3019 = vunpack.c.l.b16 %v2305
    %v3020 = vunpack.c.l.b16 %v2306
    %v3021 = vunpack.c.h.b16 %v2306
    %v3022 = vunpack.c.l.b16 %v2307
    %v3023 = vunpack.c.h.b16 %v2307
    %v3024 = vunpack.c.l.b16 %v2308
    %v3025 = vunpack.c.h.b16 %v2308
    %v3026 = vunpack.c.l.b16 %v2309
    %v3027 = vunpack.c.l.b16 %v2310
    %v3028 = vunpack.c.h.b16 %v2310
    %v3029 = vunpack.c.l.b16 %v2311
    %v3030 = vunpack.c.h.b16 %v2311
    %v3031 = vunpack.c.l.b16 %v2312
    %v3032 = vunpack.c.h.b16 %v2312
    %v3033 = vunpack.c.l.b16 %v2313
    %v3034 = vunpack.c.l.b16 %v2314
    %v3035 = vunpack.c.h.b16 %v2314
    %v3036 = vunpack.c.l.b16 %v2315
    %v3037 = vunpack.c.h.b16 %v2315
    %v3038 = vunpack.c.l.b16 %v2316
    %v3039 = vunpack.c.h.b16 %v2316
    %v3040 = vunpack.c.l.b16 %v2317
    %v3041 = vunpack.c.l.b16 %v2318
    %v3042 = vunpack.c.h.b16 %v2318
    %v3043 = vunpack.c.l.b16 %v2319
    %v3044 = vunpack.c.h.b16 %v2319
    %v3045 = vunpack.c.l.b16 %v2320
    %v3046 = vunpack.c.h.b16 %v2320
    %v3047 = vunpack.c.l.b16 %v2321
    %v3048 = vunpack.c.l.b16 %v2322
    %v3049 = vunpack.c.h.b16 %v2322
    %v3050 = vunpack.c.l.b16 %v2323
    %v3051 = vunpack.c.h.b16 %v2323
    %v3052 = vunpack.c.l.b16 %v2324
    %v3053 = vunpack.c.h.b16 %v2324
    %v3054 = vunpack.c.l.b16 %v2325
    %v3055 = vunpack.c.l.b16 %v2326
    %v3056 = vunpack.c.h.b16 %v2326
    %v3057 = vunpack.c.l.b16 %v2327
    %v3058 = vunpack.c.h.b16 %v2327
    %v3059 = vunpack.c.l.b16 %v2328
    %v3060 = vunpack.c.h.b16 %v2328
    %v3061 = vunpack.c.l.b16 %v2329
    %v3062 = vunpack.c.l.b16 %v2330
    %v3063 = vunpack.c.h.b16 %v2330
    %v3064 = vunpack.c.l.b16 %v2331
    %v3065 = vunpack.c.h.b16 %v2331
    %v3066 = vunpack.c.l.b16 %v2332
    %v3067 = vunpack.c.h.b16 %v2332
    %v3068 = vunpack.c.l.b16 %v2333
    %v3069 = vunpack.c.l.b16 %v2334
    %v3070 = vunpack.c.h.b16 %v2334
    %v3071 = vunpack.c.l.b16 %v2335
    %v3072 = vunpack.c.h.b16 %v2335
    %v3073 = vunpack.c.l.b16 %v2336
    %v3074 = vunpack.c.h.b16 %v2336
    %v3075 = vunpack.c.l.b16 %v2337
    %v3076 = vunpack.c.l.b16 %v2338
    %v3077 = vunpack.c.h.b16 %v2338
    %v3078 = vunpack.c.l.b16 %v2339
    %v3079 = vunpack.c.h.b16 %v2339
    %v3080 = vunpack.c.l.b16 %v2340
    %v3081 = vunpack.c.h.b16 %v2340
    %v3082 = vunpack.c.l.b16 %v2341
    %v3083 = vunpack.c.l.b16 %v2342
    %v3084 = vunpack.c.h.b16 %v2342
    %v3085 = vunpack.c.l.b16 %v2343
    %v3086 = vunpack.c.h.b16 %v2343
    %v3087 = vunpack.c.l.b16 %v2344
    %v3088 = vunpack.c.h.b16 %v2344
    %v3089 = vunpack.c.l.b16 %v2345
    %v3090 = vunpack.c.l.b16 %v2346
    %v3091 = vunpack.c.h.b16 %v2346
    %v3092 = vunpack.c.l.b16 %v2347
    %v3093 = vunpack.c.h.b16 %v2347
    %v3094 = vunpack.c.l.b16 %v2348
    %v3095 = vunpack.c.h.b16 %v2348
    %v3096 = vunpack.c.l.b16 %v2349
    %v3097 = vunpack.c.l.b16 %v2350
    %v3098 = vunpack.c.h.b16 %v2350
    %v3099 = vunpack.c.l.b16 %v2351
    %v3100 = vunpack.c.h.b16 %v2351
    %v3101 = vunpack.c.l.b16 %v2352
    %v3102 = vunpack.c.h.b16 %v2352
    %v3103 = vunpack.c.l.b16 %v2353
    %v3104 = vunpack.c.l.b16 %v2354
    %v3105 = vunpack.c.h.b16 %v2354
    %v3106 = vunpack.c.l.b16 %v2355
    %v3107 = vunpack.c.h.b16 %v2355
    %v3108 = vunpack.c.l.b16 %v2356
    %v3109 = vunpack.c.h.b16 %v2356
    %v3110 = vunpack.c.l.b16 %v2357
    %v3111 = vunpack.c.l.b16 %v2358
    %v3112 = vunpack.c.h.b16 %v2358
    %v3113 = vunpack.c.l.b16 %v2359
    %v3114 = vunpack.c.h.b16 %v2359
    %v3115 = vunpack.c.l.b16 %v2360
    %v3116 = vunpack.c.h.b16 %v2360
    %v3117 = vunpack.c.l.b16 %v2361
    %v3118 = vunpack.c.l.b16 %v2362
    %v3119 = vunpack.c.h.b16 %v2362
    %v3120 = vunpack.c.l.b16 %v2363
    %v3121 = vunpack.c.h.b16 %v2363
    %v3122 = vunpack.c.l.b16 %v2364
    %v3123 = vunpack.c.h.b16 %v2364
    %v3124 = vunpack.c.l.b16 %v2365
    %v3125 = vunpack.c.l.b16 %v2366
    %v3126 = vunpack.c.h.b16 %v2366
    %v3127 = vunpack.c.l.b16 %v2367
    %v3128 = vunpack.c.h.b16 %v2367
    %v3129 = vunpack.c.l.b16 %v2368
    %v3130 = vunpack.c.h.b16 %v2368
    %v3131 = vunpack.c.l.b16 %v2369
    %v3132 = vunpack.c.l.b16 %v2370
    %v3133 = vunpack.c.h.b16 %v2370
    %v3134 = vunpack.c.l.b16 %v2371
    %v3135 = vunpack.c.h.b16 %v2371
    %v3136 = vunpack.c.l.b16 %v2372
    %v3137 = vunpack.c.h.b16 %v2372
    %v3138 = vunpack.c.l.b16 %v2373
    %v3139 = vunpack.c.l.b16 %v2374
    %v3140 = vunpack.c.h.b16 %v2374
    %v3141 = vunpack.c.l.b16 %v2375
    %v3142 = vunpack.c.h.b16 %v2375
    %v3143 = vunpack.c.l.b16 %v2376
    %v3144 = vunpack.c.h.b16 %v2376
    %v3145 = vunpack.c.l.b16 %v2377
    %v3146 = vunpack.c.l.b16 %v2378
    %v3147 = vunpack.c.h.b16 %v2378
    %v3148 = vunpack.c.l.b16 %v2379
    %v3149 = vunpack.c.h.b16 %v2379
    %v3150 = vunpack.c.l.b16 %v2380
    %v3151 = vunpack.c.h.b16 %v2380
    %v3152 = vunpack.c.l.b16 %v2381
    %v3153 = vunpack.c.l.b16 %v2382
    %v3154 = vunpack.c.h.b16 %v2382
    %v3155 = vunpack.c.l.b16 %v2383
    %v3156 = vunpack.c.h.b16 %v2383
    %v3157 = vunpack.c.l.b16 %v2384
    %v3158 = vunpack.c.h.b16 %v2384
    %v3159 = vunpack.c.l.b16 %v2385
    %v3160 = vunpack.c.l.b16 %v2386
    %v3161 = vunpack.c.h.b16 %v2386
    %v3162 = vunpack.c.l.b16 %v2387
    %v3163 = vunpack.c.h.b16 %v2387
    %v3164 = vunpack.c.l.b16 %v2388
    %v3165 = vunpack.c.h.b16 %v2388
    %v3166 = vunpack.c.l.b16 %v2389
    %v3167 = vunpack.c.l.b16 %v2390
    %v3168 = vunpack.c.h.b16 %v2390
    %v3169 = vunpack.c.l.b16 %v2391
    %v3170 = vunpack.c.h.b16 %v2391
    %v3171 = vunpack.c.l.b16 %v2392
    %v3172 = vunpack.c.h.b16 %v2392
    %v3173 = vunpack.c.l.b16 %v2393
    %v3174 = vunpack.c.l.b16 %v2394
    %v3175 = vunpack.c.h.b16 %v2394
    %v3176 = vunpack.c.l.b16 %v2395
    %v3177 = vunpack.c.h.b16 %v2395
    %v3178 = vunpack.c.l.b16 %v2396
    %v3179 = vunpack.c.h.b16 %v2396
    %v3180 = vunpack.c.l.b16 %v2397
    %v3181 = vunpack.c.l.b16 %v2398
    %v3182 = vunpack.c.h.b16 %v2398
    %v3183 = vunpack.c.l.b16 %v2399
    %v3184 = vunpack.c.h.b16 %v2399
    %v3185 = vunpack.c.l.b16 %v2400
    %v3186 = vunpack.c.h.b16 %v2400
    %v3187 = vunpack.c.l.b16 %v2401
    %v3188 = vunpack.c.l.b16 %v2402
    %v3189 = vunpack.c.h.b16 %v2402
    %v3190 = vunpack.c.l.b16 %v2403
    %v3191 = vunpack.c.h.b16 %v2403
    %v3192 = vunpack.c.l.b16 %v2404
    %v3193 = vunpack.c.h.b16 %v2404
    %v3194 = vunpack.c.l.b16 %v2405
    %v3195 = vunpack.c.l.b16 %v2406
    %v3196 = vunpack.c.h.b16 %v2406
    %v3197 = vunpack.c.l.b16 %v2407
    %v3198 = vunpack.c.h.b16 %v2407
    %v3199 = vunpack.c.l.b16 %v2408
    %v3200 = vunpack.c.h.b16 %v2408
    %v3201 = vunpack.c.l.b16 %v2409
    %v3202 = vunpack.c.l.b16 %v2410
    %v3203 = vunpack.c.h.b16 %v2410
    %v3204 = vunpack.c.l.b16 %v2411
    %v3205 = vunpack.c.h.b16 %v2411
    %v3206 = vunpack.c.l.b16 %v2412
    %v3207 = vunpack.c.h.b16 %v2412
    %v3208 = vunpack.c.l.b16 %v2413
    %v3209 = vunpack.c.l.b16 %v2414
    %v3210 = vunpack.c.h.b16 %v2414
    %v3211 = vunpack.c.l.b16 %v2415
    %v3212 = vunpack.c.h.b16 %v2415
    %v3213 = vunpack.c.l.b16 %v2416
    %v3214 = vunpack.c.h.b16 %v2416
    %v3215 = vunpack.c.l.b16 %v2417
    %v3216 = vunpack.c.l.b16 %v2418
    %v3217 = vunpack.c.h.b16 %v2418
    %v3218 = vunpack.c.l.b16 %v2419
    %v3219 = vunpack.c.h.b16 %v2419
    %v3220 = vunpack.c.l.b16 %v2420
    %v3221 = vunpack.c.h.b16 %v2420
    %v3222 = vunpack.c.l.b16 %v2421
    %v3223 = vunpack.c.l.b16 %v2422
    %v3224 = vunpack.c.h.b16 %v2422
    %v3225 = vunpack.c.l.b16 %v2423
    %v3226 = vunpack.c.h.b16 %v2423
    %v3227 = vunpack.c.l.b16 %v2424
    %v3228 = vunpack.c.h.b16 %v2424
    %v3229 = vunpack.c.l.b16 %v2425
    %v3230 = vunpack.c.l.b16 %v2426
    %v3231 = vunpack.c.h.b16 %v2426
    %v3232 = vunpack.c.l.b16 %v2427
    %v3233 = vunpack.c.h.b16 %v2427
    %v3234 = vunpack.c.l.b16 %v2428
    %v3235 = vunpack.c.h.b16 %v2428
    %v3236 = vunpack.c.l.b16 %v2429
    %v3237 = vunpack.c.l.b16 %v2430
    %v3238 = vunpack.c.h.b16 %v2430
    %v3239 = vunpack.c.l.b16 %v2431
    %v3240 = vunpack.c.h.b16 %v2431
    %v3241 = vunpack.c.l.b16 %v2432
    %v3242 = vunpack.c.h.b16 %v2432
    %v3243 = vunpack.c.l.b16 %v2433
    %v3244 = vunpack.c.l.b16 %v2434
    %v3245 = vunpack.c.h.b16 %v2434
    %v3246 = vunpack.c.l.b16 %v2435
    %v3247 = vunpack.c.h.b16 %v2435
    %v3248 = vunpack.c.l.b16 %v2436
    %v3249 = vunpack.c.h.b16 %v2436
    %v3250 = vunpack.c.l.b16 %v2437
    %v3251 = vunpack.c.l.b16 %v2438
    %v3252 = vunpack.c.h.b16 %v2438
    %v3253 = vunpack.c.l.b16 %v2439
    %v3254 = vunpack.c.h.b16 %v2439
    %v3255 = vunpack.c.l.b16 %v2440
    %v3256 = vunpack.c.h.b16 %v2440
    %v3257 = vunpack.c.l.b16 %v2441
    %v3258 = vpack.c.b16 %v2929, %v2922
    %v3259 = vpack.c.b16 %v2930, %v2923
    %v3260 = vpack.c.b16 %v2931, %v2924
    %v3261 = vpack.c.b16 %v2932, %v2925
    %v3262 = vpack.c.b16 %v2933, %v2926
    %v3263 = vpack.c.b16 %v2934, %v2927
    %v3264 = vpack.c.b16 %v2935, %v2928
    %v3265 = vpack.c.b16 %v2943, %v2936
    %v3266 = vpack.c.b16 %v2944, %v2937
    %v3267 = vpack.c.b16 %v2945, %v2938
    %v3268 = vpack.c.b16 %v2946, %v2939
    %v3269 = vpack.c.b16 %v2947, %v2940
    %v3270 = vpack.c.b16 %v2948, %v2941
    %v3271 = vpack.c.b16 %v2949, %v2942
    %v3272 = vpack.c.b16 %v2957, %v2950
    %v3273 = vpack.c.b16 %v2958, %v2951
    %v3274 = vpack.c.b16 %v2959, %v2952
    %v3275 = vpack.c.b16 %v2960, %v2953
    %v3276 = vpack.c.b16 %v2961, %v2954
    %v3277 = vpack.c.b16 %v2962, %v2955
    %v3278 = vpack.c.b16 %v2963, %v2956
    %v3279 = vpack.c.b16 %v2971, %v2964
    %v3280 = vpack.c.b16 %v2972, %v2965
    %v3281 = vpack.c.b16 %v2973, %v2966
    %v3282 = vpack.c.b16 %v2974, %v2967
    %v3283 = vpack.c.b16 %v2975, %v2968
    %v3284 = vpack.c.b16 %v2976, %v2969
    %v3285 = vpack.c.b16 %v2977, %v2970
    %v3286 = vpack.c.b16 %v2985, %v2978
    %v3287 = vpack.c.b16 %v2986, %v2979
    %v3288 = vpack.c.b16 %v2987, %v2980
    %v3289 = vpack.c.b16 %v2988, %v2981
    %v3290 = vpack.c.b16 %v2989, %v2982
    %v3291 = vpack.c.b16 %v2990, %v2983
    %v3292 = vpack.c.b16 %v2991, %v2984
    %v3293 = vpack.c.b16 %v2999, %v2992
    %v3294 = vpack.c.b16 %v3000, %v2993
    %v3295 = vpack.c.b16 %v3001, %v2994
    %v3296 = vpack.c.b16 %v3002, %v2995
    %v3297 = vpack.c.b16 %v3003, %v2996
    %v3298 = vpack.c.b16 %v3004, %v2997
    %v3299 = vpack.c.b16 %v3005, %v2998
    %v3300 = vpack.c.b16 %v3013, %v3006
    %v3301 = vpack.c.b16 %v3014, %v3007
    %v3302 = vpack.c.b16 %v3015, %v3008
    %v3303 = vpack.c.b16 %v3016, %v3009
    %v3304 = vpack.c.b16 %v3017, %v3010
    %v3305 = vpack.c.b16 %v3018, %v3011
    %v3306 = vpack.c.b16 %v3019, %v3012
    %v3307 = vpack.c.b16 %v3027, %v3020
    %v3308 = vpack.c.b16 %v3028, %v3021
    %v3309 = vpack.c.b16 %v3029, %v3022
    %v3310 = vpack.c.b16 %v3030, %v3023
    %v3311 = vpack.c.b16 %v3031, %v3024
    %v3312 = vpack.c.b16 %v3032, %v3025
    %v3313 = vpack.c.b16 %v3033, %v3026
    %v3314 = vpack.c.b16 %v3041, %v3034
    %v3315 = vpack.c.b16 %v3042, %v3035
    %v3316 = vpack.c.b16 %v3043, %v3036
    %v3317 = vpack.c.b16 %v3044, %v3037
    %v3318 = vpack.c.b16 %v3045, %v3038
    %v3319 = vpack.c.b16 %v3046, %v3039
    %v3320 = vpack.c.b16 %v3047, %v3040
    %v3321 = vpack.c.b16 %v3055, %v3048
    %v3322 = vpack.c.b16 %v3056, %v3049
    %v3323 = vpack.c.b16 %v3057, %v3050
    %v3324 = vpack.c.b16 %v3058, %v3051
    %v3325 = vpack.c.b16 %v3059, %v3052
    %v3326 = vpack.c.b16 %v3060, %v3053
    %v3327 = vpack.c.b16 %v3061, %v3054
    %v3328 = vpack.c.b16 %v3069, %v3062
    %v3329 = vpack.c.b16 %v3070, %v3063
    %v3330 = vpack.c.b16 %v3071, %v3064
    %v3331 = vpack.c.b16 %v3072, %v3065
    %v3332 = vpack.c.b16 %v3073, %v3066
    %v3333 = vpack.c.b16 %v3074, %v3067
    %v3334 = vpack.c.b16 %v3075, %v3068
    %v3335 = vpack.c.b16 %v3083, %v3076
    %v3336 = vpack.c.b16 %v3084, %v3077
    %v3337 = vpack.c.b16 %v3085, %v3078
    %v3338 = vpack.c.b16 %v3086, %v3079
    %v3339 = vpack.c.b16 %v3087, %v3080
    %v3340 = vpack.c.b16 %v3088, %v3081
    %v3341 = vpack.c.b16 %v3089, %v3082
    %v3342 = vpack.c.b16 %v3097, %v3090
    %v3343 = vpack.c.b16 %v3098, %v3091
    %v3344 = vpack.c.b16 %v3099, %v3092
    %v3345 = vpack.c.b16 %v3100, %v3093
    %v3346 = vpack.c.b16 %v3101, %v3094
    %v3347 = vpack.c.b16 %v3102, %v3095
    %v3348 = vpack.c.b16 %v3103, %v3096
    %v3349 = vpack.c.b16 %v3111, %v3104
    %v3350 = vpack.c.b16 %v3112, %v3105
    %v3351 = vpack.c.b16 %v3113, %v3106
    %v3352 = vpack.c.b16 %v3114, %v3107
    %v3353 = vpack.c.b16 %v3115, %v3108
    %v3354 = vpack.c.b16 %v3116, %v3109
    %v3355 = vpack.c.b16 %v3117, %v3110
    %v3356 = vpack.c.b16 %v3125, %v3118
    %v3357 = vpack.c.b16 %v3126, %v3119
    %v3358 = vpack.c.b16 %v3127, %v3120
    %v3359 = vpack.c.b16 %v3128, %v3121
    %v3360 = vpack.c.b16 %v3129, %v3122
    %v3361 = vpack.c.b16 %v3130, %v3123
    %v3362 = vpack.c.b16 %v3131, %v3124
    %v3363 = vpack.c.b16 %v3139, %v3132
    %v3364 = vpack.c.b16 %v3140, %v3133
    %v3365 = vpack.c.b16 %v3141, %v3134
    %v3366 = vpack.c.b16 %v3142, %v3135
    %v3367 = vpack.c.b16 %v3143, %v3136
    %v3368 = vpack.c.b16 %v3144, %v3137
    %v3369 = vpack.c.b16 %v3145, %v3138
    %v3370 = vpack.c.b16 %v3153, %v3146
    %v3371 = vpack.c.b16 %v3154, %v3147
    %v3372 = vpack.c.b16 %v3155, %v3148
    %v3373 = vpack.c.b16 %v3156, %v3149
    %v3374 = vpack.c.b16 %v3157, %v3150
    %v3375 = vpack.c.b16 %v3158, %v3151
    %v3376 = vpack.c.b16 %v3159, %v3152
    %v3377 = vpack.c.b16 %v3167, %v3160
    %v3378 = vpack.c.b16 %v3168, %v3161
    %v3379 = vpack.c.b16 %v3169, %v3162
    %v3380 = vpack.c.b16 %v3170, %v3163
    %v3381 = vpack.c.b16 %v3171, %v3164
    %v3382 = vpack.c.b16 %v3172, %v3165
    %v3383 = vpack.c.b16 %v3173, %v3166
    %v3384 = vpack.c.b16 %v3181, %v3174
    %v3385 = vpack.c.b16 %v3182, %v3175
    %v3386 = vpack.c.b16 %v3183, %v3176
    %v3387 = vpack.c.b16 %v3184, %v3177
    %v3388 = vpack.c.b16 %v3185, %v3178
    %v3389 = vpack.c.b16 %v3186, %v3179
    %v3390 = vpack.c.b16 %v3187, %v3180
    %v3391 = vpack.c.b16 %v3195, %v3188
    %v3392 = vpack.c.b16 %v3196, %v3189
    %v3393 = vpack.c.b16 %v3197, %v3190
    %v3394 = vpack.c.b16 %v3198, %v3191
    %v3395 = vpack.c.b16 %v3199, %v3192
    %v3396 = vpack.c.b16 %v3200, %v3193
    %v3397 = vpack.c.b16 %v3201, %v3194
    %v3398 = vpack.c.b16 %v3209, %v3202
    %v3399 = vpack.c.b16 %v3210, %v3203
    %v3400 = vpack.c.b16 %v3211, %v3204
    %v3401 = vpack.c.b16 %v3212, %v3205
    %v3402 = vpack.c.b16 %v3213, %v3206
    %v3403 = vpack.c.b16 %v3214, %v3207
    %v3404 = vpack.c.b16 %v3215, %v3208
    %v3405 = vpack.c.b16 %v3223, %v3216
    %v3406 = vpack.c.b16 %v3224, %v3217
    %v3407 = vpack.c.b16 %v3225, %v3218
    %v3408 = vpack.c.b16 %v3226, %v3219
    %v3409 = vpack.c.b16 %v3227, %v3220
    %v3410 = vpack.c.b16 %v3228, %v3221
    %v3411 = vpack.c.b16 %v3229, %v3222
    %v3412 = vpack.c.b16 %v3237, %v3230
    %v3413 = vpack.c.b16 %v3238, %v3231
    %v3414 = vpack.c.b16 %v3239, %v3232
    %v3415 = vpack.c.b16 %v3240, %v3233
    %v3416 = vpack.c.b16 %v3241, %v3234
    %v3417 = vpack.c.b16 %v3242, %v3235
    %v3418 = vpack.c.b16 %v3243, %v3236
    %v3419 = vpack.c.b16 %v3251, %v3244
    %v3420 = vpack.c.b16 %v3252, %v3245
    %v3421 = vpack.c.b16 %v3253, %v3246
    %v3422 = vpack.c.b16 %v3254, %v3247
    %v3423 = vpack.c.b16 %v3255, %v3248
    %v3424 = vpack.c.b16 %v3256, %v3249
    %v3425 = vpack.c.b16 %v3257, %v3250
    %3594 = vmatprep.subr.bf16.mxu0 0
    %3595 = vmatpush1.bf16.msra.mxu0 %v2194
    %3596 = vmatprep.subr.bf16.mxu0 0
    %3597 = vmatpush1.bf16.msra.mxu0 %v2195
    %3598 = vmatprep.subr.bf16.mxu0 0
    %3599 = vmatpush1.bf16.msra.mxu0 %v2196
    %3600 = vmatprep.subr.bf16.mxu0 0
    %3601 = vmatpush1.bf16.msra.mxu0 %v2197
    %3602 = vmatprep.subr.bf16.mxu0 0
    %3603 = vmatpush1.bf16.msra.mxu0 %v2198
    %3604 = vmatprep.subr.bf16.mxu0 0
    %3605 = vmatpush1.bf16.msra.mxu0 %v2199
    %3606 = vmatprep.subr.bf16.mxu0 0
    %3607 = vmatpush1.bf16.msra.mxu0 %v2200
    %3608 = vmatprep.subr.bf16.mxu0 0
    %3609 = vmatpush1.bf16.msra.mxu0 %v2201
    %3610 = vmatprep.subr.bf16.mxu0 0
    %3611 = vmatpush1.bf16.msra.mxu0 %v2202
    %3612 = vmatprep.subr.bf16.mxu0 0
    %3613 = vmatpush1.bf16.msra.mxu0 %v2203
    %3614 = vmatprep.subr.bf16.mxu0 0
    %3615 = vmatpush1.bf16.msra.mxu0 %v2204
    %3616 = vmatprep.subr.bf16.mxu0 0
    %3617 = vmatpush1.bf16.msra.mxu0 %v2205
    %3618 = vmatprep.subr.bf16.mxu0 0
    %3619 = vmatpush1.bf16.msra.mxu0 %v2206
    %3620 = vmatprep.subr.bf16.mxu0 0
    %3621 = vmatpush1.bf16.msra.mxu0 %v2207
    %3622 = vmatprep.subr.bf16.mxu0 0
    %3623 = vmatpush1.bf16.msra.mxu0 %v2208
    %3624 = vmatprep.subr.bf16.mxu0 0
    %3625 = vmatpush1.bf16.msra.mxu0 %v2209
    %3626 = vmatprep.mubr.bf16.mxu0 %v3259
    %3627 = vmatmul.mubr.bf16.gmra.mrb[0].mxu0 %v3258
    %v3628 = vpop.f32.mrb[0].mxu0
    %v3629 = vadd.f32 %v2493, %v3628
    %v3630 = vpop.f32.mrb[0].mxu0
    %v3631 = vpop.f32.mrb[0].mxu0
    %v3632 = vadd.f32 %v2498, %v3631
    %v3633 = vpop.f32.mrb[0].mxu0
    %3634 = vmatprep.mubr.bf16.mxu0 %v3266
    %3635 = vmatmul.mubr.bf16.gmra.mrb[0].mxu0 %v3265
    %v3636 = vpop.f32.mrb[0].mxu0
    %v3637 = vadd.f32 %v2503, %v3636
    %v3638 = vpop.f32.mrb[0].mxu0
    %v3639 = vpop.f32.mrb[0].mxu0
    %v3640 = vadd.f32 %v2508, %v3639
    %v3641 = vpop.f32.mrb[0].mxu0
    %3642 = vmatprep.mubr.bf16.mxu0 %v3273
    %3643 = vmatmul.mubr.bf16.gmra.mrb[0].mxu0 %v3272
    %v3644 = vpop.f32.mrb[0].mxu0
    %v3645 = vadd.f32 %v2513, %v3644
    %v3646 = vpop.f32.mrb[0].mxu0
    %v3647 = vpop.f32.mrb[0].mxu0
    %v3648 = vadd.f32 %v2518, %v3647
    %v3649 = vpop.f32.mrb[0].mxu0
    %3650 = vmatprep.mubr.bf16.mxu0 %v3280
    %3651 = vmatmul.mubr.bf16.gmra.mrb[0].mxu0 %v3279
    %v3652 = vpop.f32.mrb[0].mxu0
    %v3653 = vadd.f32 %v2523, %v3652
    %v3654 = vpop.f32.mrb[0].mxu0
    %v3655 = vpop.f32.mrb[0].mxu0
    %v3656 = vadd.f32 %v2528, %v3655
    %v3657 = vpop.f32.mrb[0].mxu0
    %3658 = vmatprep.mubr.bf16.mxu0 %v3287
    %3659 = vmatmul.mubr.bf16.gmra.mrb[0].mxu0 %v3286
    %v3660 = vpop.f32.mrb[0].mxu0
    %v3661 = vadd.f32 %v2533, %v3660
    %v3662 = vpop.f32.mrb[0].mxu0
    %v3663 = vpop.f32.mrb[0].mxu0
    %v3664 = vadd.f32 %v2538, %v3663
    %v3665 = vpop.f32.mrb[0].mxu0
    %3666 = vmatprep.mubr.bf16.mxu0 %v3294
    %3667 = vmatmul.mubr.bf16.gmra.mrb[0].mxu0 %v3293
    %v3668 = vpop.f32.mrb[0].mxu0
    %v3669 = vadd.f32 %v2543, %v3668
    %v3670 = vpop.f32.mrb[0].mxu0
    %v3671 = vpop.f32.mrb[0].mxu0
    %v3672 = vadd.f32 %v2548, %v3671
    %v3673 = vpop.f32.mrb[0].mxu0
    %3674 = vmatprep.mubr.bf16.mxu0 %v3301
    %3675 = vmatmul.mubr.bf16.gmra.mrb[0].mxu0 %v3300
    %v3676 = vpop.f32.mrb[0].mxu0
    %v3677 = vadd.f32 %v2553, %v3676
    %v3678 = vpop.f32.mrb[0].mxu0
    %v3679 = vpop.f32.mrb[0].mxu0
    %v3680 = vadd.f32 %v2558, %v3679
    %v3681 = vpop.f32.mrb[0].mxu0
    %3682 = vmatprep.mubr.bf16.mxu0 %v3308
    %3683 = vmatmul.mubr.bf16.gmra.mrb[0].mxu0 %v3307
    %v3684 = vpop.f32.mrb[0].mxu0
    %v3685 = vadd.f32 %v2563, %v3684
    %v3686 = vpop.f32.mrb[0].mxu0
    %v3687 = vpop.f32.mrb[0].mxu0
    %v3688 = vadd.f32 %v2568, %v3687
    %v3689 = vpop.f32.mrb[0].mxu0
    %3690 = vmatprep.mubr.bf16.mxu0 %v3315
    %3691 = vmatmul.mubr.bf16.gmra.mrb[0].mxu0 %v3314
    %v3692 = vpop.f32.mrb[0].mxu0
    %v3693 = vadd.f32 %v2573, %v3692
    %v3694 = vpop.f32.mrb[0].mxu0
    %v3695 = vpop.f32.mrb[0].mxu0
    %v3696 = vadd.f32 %v2578, %v3695
    %v3697 = vpop.f32.mrb[0].mxu0
    %3698 = vmatprep.mubr.bf16.mxu0 %v3322
    %3699 = vmatmul.mubr.bf16.gmra.mrb[0].mxu0 %v3321
    %v3700 = vpop.f32.mrb[0].mxu0
    %v3701 = vadd.f32 %v2583, %v3700
    %v3702 = vpop.f32.mrb[0].mxu0
    %v3703 = vpop.f32.mrb[0].mxu0
    %v3704 = vadd.f32 %v2588, %v3703
    %v3705 = vpop.f32.mrb[0].mxu0
    %3706 = vmatprep.mubr.bf16.mxu0 %v3329
    %3707 = vmatmul.mubr.bf16.gmra.mrb[0].mxu0 %v3328
    %v3708 = vpop.f32.mrb[0].mxu0
    %v3709 = vadd.f32 %v2593, %v3708
    %v3710 = vpop.f32.mrb[0].mxu0
    %v3711 = vpop.f32.mrb[0].mxu0
    %v3712 = vadd.f32 %v2598, %v3711
    %v3713 = vpop.f32.mrb[0].mxu0
    %3714 = vmatprep.mubr.bf16.mxu0 %v3336
    %3715 = vmatmul.mubr.bf16.gmra.mrb[0].mxu0 %v3335
    %v3716 = vpop.f32.mrb[0].mxu0
    %v3717 = vadd.f32 %v2603, %v3716
    %v3718 = vpop.f32.mrb[0].mxu0
    %v3719 = vpop.f32.mrb[0].mxu0
    %v3720 = vadd.f32 %v2608, %v3719
    %v3721 = vpop.f32.mrb[0].mxu0
    %3722 = vmatprep.mubr.bf16.mxu0 %v3343
    %3723 = vmatmul.mubr.bf16.gmra.mrb[0].mxu0 %v3342
    %v3724 = vpop.f32.mrb[0].mxu0
    %v3725 = vadd.f32 %v2613, %v3724
    %v3726 = vpop.f32.mrb[0].mxu0
    %v3727 = vpop.f32.mrb[0].mxu0
    %v3728 = vadd.f32 %v2618, %v3727
    %v3729 = vpop.f32.mrb[0].mxu0
    %3730 = vmatprep.mubr.bf16.mxu0 %v3350
    %3731 = vmatmul.mubr.bf16.gmra.mrb[0].mxu0 %v3349
    %v3732 = vpop.f32.mrb[0].mxu0
    %v3733 = vadd.f32 %v2623, %v3732
    %v3734 = vpop.f32.mrb[0].mxu0
    %v3735 = vpop.f32.mrb[0].mxu0
    %v3736 = vadd.f32 %v2628, %v3735
    %v3737 = vpop.f32.mrb[0].mxu0
    %3738 = vmatprep.mubr.bf16.mxu0 %v3357
    %3739 = vmatmul.mubr.bf16.gmra.mrb[0].mxu0 %v3356
    %v3740 = vpop.f32.mrb[0].mxu0
    %v3741 = vadd.f32 %v2633, %v3740
    %v3742 = vpop.f32.mrb[0].mxu0
    %v3743 = vpop.f32.mrb[0].mxu0
    %v3744 = vadd.f32 %v2638, %v3743
    %v3745 = vpop.f32.mrb[0].mxu0
    %3746 = vmatprep.mubr.bf16.mxu0 %v3364
    %3747 = vmatmul.mubr.bf16.gmra.mrb[0].mxu0 %v3363
    %v3748 = vpop.f32.mrb[0].mxu0
    %v3749 = vadd.f32 %v2643, %v3748
    %v3750 = vpop.f32.mrb[0].mxu0
    %v3751 = vpop.f32.mrb[0].mxu0
    %v3752 = vadd.f32 %v2648, %v3751
    %v3753 = vpop.f32.mrb[0].mxu0
    %3754 = vmatprep.mubr.bf16.mxu0 %v3371
    %3755 = vmatmul.mubr.bf16.gmra.mrb[0].mxu0 %v3370
    %v3756 = vpop.f32.mrb[0].mxu0
    %v3757 = vadd.f32 %v2653, %v3756
    %v3758 = vpop.f32.mrb[0].mxu0
    %v3759 = vpop.f32.mrb[0].mxu0
    %v3760 = vadd.f32 %v2658, %v3759
    %v3761 = vpop.f32.mrb[0].mxu0
    %3762 = vmatprep.mubr.bf16.mxu0 %v3378
    %3763 = vmatmul.mubr.bf16.gmra.mrb[0].mxu0 %v3377
    %v3764 = vpop.f32.mrb[0].mxu0
    %v3765 = vadd.f32 %v2663, %v3764
    %v3766 = vpop.f32.mrb[0].mxu0
    %v3767 = vpop.f32.mrb[0].mxu0
    %v3768 = vadd.f32 %v2668, %v3767
    %v3769 = vpop.f32.mrb[0].mxu0
    %3770 = vmatprep.mubr.bf16.mxu0 %v3385
    %3771 = vmatmul.mubr.bf16.gmra.mrb[0].mxu0 %v3384
    %v3772 = vpop.f32.mrb[0].mxu0
    %v3773 = vadd.f32 %v2673, %v3772
    %v3774 = vpop.f32.mrb[0].mxu0
    %v3775 = vpop.f32.mrb[0].mxu0
    %v3776 = vadd.f32 %v2678, %v3775
    %v3777 = vpop.f32.mrb[0].mxu0
    %3778 = vmatprep.mubr.bf16.mxu0 %v3392
    %3779 = vmatmul.mubr.bf16.gmra.mrb[0].mxu0 %v3391
    %v3780 = vpop.f32.mrb[0].mxu0
    %v3781 = vadd.f32 %v2683, %v3780
    %v3782 = vpop.f32.mrb[0].mxu0
    %v3783 = vpop.f32.mrb[0].mxu0
    %v3784 = vadd.f32 %v2688, %v3783
    %v3785 = vpop.f32.mrb[0].mxu0
    %3786 = vmatprep.mubr.bf16.mxu0 %v3399
    %3787 = vmatmul.mubr.bf16.gmra.mrb[0].mxu0 %v3398
    %v3788 = vpop.f32.mrb[0].mxu0
    %v3789 = vadd.f32 %v2693, %v3788
    %v3790 = vpop.f32.mrb[0].mxu0
    %v3791 = vpop.f32.mrb[0].mxu0
    %v3792 = vadd.f32 %v2698, %v3791
    %v3793 = vpop.f32.mrb[0].mxu0
    %3794 = vmatprep.mubr.bf16.mxu0 %v3406
    %3795 = vmatmul.mubr.bf16.gmra.mrb[0].mxu0 %v3405
    %v3796 = vpop.f32.mrb[0].mxu0
    %v3797 = vadd.f32 %v2703, %v3796
    %v3798 = vpop.f32.mrb[0].mxu0
    %v3799 = vpop.f32.mrb[0].mxu0
    %v3800 = vadd.f32 %v2708, %v3799
    %v3801 = vpop.f32.mrb[0].mxu0
    %3802 = vmatprep.mubr.bf16.mxu0 %v3413
    %3803 = vmatmul.mubr.bf16.gmra.mrb[0].mxu0 %v3412
    %v3804 = vpop.f32.mrb[0].mxu0
    %v3805 = vadd.f32 %v2713, %v3804
    %v3806 = vpop.f32.mrb[0].mxu0
    %v3807 = vpop.f32.mrb[0].mxu0
    %v3808 = vadd.f32 %v2718, %v3807
    %v3809 = vpop.f32.mrb[0].mxu0
    %3810 = vmatprep.mubr.bf16.mxu0 %v3420
    %3811 = vmatmul.mubr.bf16.gmra.mrb[0].mxu0 %v3419
    %v3812 = vpop.f32.mrb[0].mxu0
    %v3813 = vadd.f32 %v2723, %v3812
    %v3814 = vpop.f32.mrb[0].mxu0
    %v3815 = vpop.f32.mrb[0].mxu0
    %v3816 = vadd.f32 %v2728, %v3815
    %v3817 = vpop.f32.mrb[0].mxu0
    %3818 = vdwg.mxu0
    %3819 = vmatprep.subr.bf16.mxu0 0
    %3820 = vmatpush1.bf16.msra.mxu0 %v2210
    %3821 = vmatprep.subr.bf16.mxu0 0
    %3822 = vmatpush1.bf16.msra.mxu0 %v2211
    %3823 = vmatprep.subr.bf16.mxu0 0
    %3824 = vmatpush1.bf16.msra.mxu0 %v2212
    %3825 = vmatprep.subr.bf16.mxu0 0
    %3826 = vmatpush1.bf16.msra.mxu0 %v2213
    %3827 = vmatprep.subr.bf16.mxu0 0
    %3828 = vmatpush1.bf16.msra.mxu0 %v2214
    %3829 = vmatprep.subr.bf16.mxu0 0
    %3830 = vmatpush1.bf16.msra.mxu0 %v2215
    %3831 = vmatprep.subr.bf16.mxu0 0
    %3832 = vmatpush1.bf16.msra.mxu0 %v2216
    %3833 = vmatprep.subr.bf16.mxu0 0
    %3834 = vmatpush1.bf16.msra.mxu0 %v2217
    %3835 = vmatprep.subr.bf16.mxu0 0
    %3836 = vmatpush1.bf16.msra.mxu0 %v2218
    %3837 = vmatprep.subr.bf16.mxu0 0
    %3838 = vmatpush1.bf16.msra.mxu0 %v2219
    %3839 = vmatprep.subr.bf16.mxu0 0
    %3840 = vmatpush1.bf16.msra.mxu0 %v2220
    %3841 = vmatprep.subr.bf16.mxu0 0
    %3842 = vmatpush1.bf16.msra.mxu0 %v2221
    %3843 = vmatprep.subr.bf16.mxu0 0
    %3844 = vmatpush1.bf16.msra.mxu0 %v2222
    %3845 = vmatprep.subr.bf16.mxu0 0
    %3846 = vmatpush1.bf16.msra.mxu0 %v2223
    %3847 = vmatprep.subr.bf16.mxu0 0
    %3848 = vmatpush1.bf16.msra.mxu0 %v2224
    %3849 = vmatprep.subr.bf16.mxu0 0
    %3850 = vmatpush1.bf16.msra.mxu0 %v2225
    %3851 = vmatprep.mubr.bf16.mxu0 %v3261
    %3852 = vmatmul.mubr.bf16.gmra.mrb[0].mxu0 %v3260
    %v3853 = vpop.f32.mrb[0].mxu0
    %v3854 = vadd.f32 %v3629, %v3853
    %v3855 = vpop.f32.mrb[0].mxu0
    %v3856 = vpop.f32.mrb[0].mxu0
    %v3857 = vadd.f32 %v3632, %v3856
    %v3858 = vpop.f32.mrb[0].mxu0
    %3859 = vmatprep.mubr.bf16.mxu0 %v3268
    %3860 = vmatmul.mubr.bf16.gmra.mrb[0].mxu0 %v3267
    %v3861 = vpop.f32.mrb[0].mxu0
    %v3862 = vadd.f32 %v3637, %v3861
    %v3863 = vpop.f32.mrb[0].mxu0
    %v3864 = vpop.f32.mrb[0].mxu0
    %v3865 = vadd.f32 %v3640, %v3864
    %v3866 = vpop.f32.mrb[0].mxu0
    %3867 = vmatprep.mubr.bf16.mxu0 %v3275
    %3868 = vmatmul.mubr.bf16.gmra.mrb[0].mxu0 %v3274
    %v3869 = vpop.f32.mrb[0].mxu0
    %v3870 = vadd.f32 %v3645, %v3869
    %v3871 = vpop.f32.mrb[0].mxu0
    %v3872 = vpop.f32.mrb[0].mxu0
    %v3873 = vadd.f32 %v3648, %v3872
    %v3874 = vpop.f32.mrb[0].mxu0
    %3875 = vmatprep.mubr.bf16.mxu0 %v3282
    %3876 = vmatmul.mubr.bf16.gmra.mrb[0].mxu0 %v3281
    %v3877 = vpop.f32.mrb[0].mxu0
    %v3878 = vadd.f32 %v3653, %v3877
    %v3879 = vpop.f32.mrb[0].mxu0
    %v3880 = vpop.f32.mrb[0].mxu0
    %v3881 = vadd.f32 %v3656, %v3880
    %v3882 = vpop.f32.mrb[0].mxu0
    %3883 = vmatprep.mubr.bf16.mxu0 %v3289
    %3884 = vmatmul.mubr.bf16.gmra.mrb[0].mxu0 %v3288
    %v3885 = vpop.f32.mrb[0].mxu0
    %v3886 = vadd.f32 %v3661, %v3885
    %v3887 = vpop.f32.mrb[0].mxu0
    %v3888 = vpop.f32.mrb[0].mxu0
    %v3889 = vadd.f32 %v3664, %v3888
    %v3890 = vpop.f32.mrb[0].mxu0
    %3891 = vmatprep.mubr.bf16.mxu0 %v3296
    %3892 = vmatmul.mubr.bf16.gmra.mrb[0].mxu0 %v3295
    %v3893 = vpop.f32.mrb[0].mxu0
    %v3894 = vadd.f32 %v3669, %v3893
    %v3895 = vpop.f32.mrb[0].mxu0
    %v3896 = vpop.f32.mrb[0].mxu0
    %v3897 = vadd.f32 %v3672, %v3896
    %v3898 = vpop.f32.mrb[0].mxu0
    %3899 = vmatprep.mubr.bf16.mxu0 %v3303
    %3900 = vmatmul.mubr.bf16.gmra.mrb[0].mxu0 %v3302
    %v3901 = vpop.f32.mrb[0].mxu0
    %v3902 = vadd.f32 %v3677, %v3901
    %v3903 = vpop.f32.mrb[0].mxu0
    %v3904 = vpop.f32.mrb[0].mxu0
    %v3905 = vadd.f32 %v3680, %v3904
    %v3906 = vpop.f32.mrb[0].mxu0
    %3907 = vmatprep.mubr.bf16.mxu0 %v3310
    %3908 = vmatmul.mubr.bf16.gmra.mrb[0].mxu0 %v3309
    %v3909 = vpop.f32.mrb[0].mxu0
    %v3910 = vadd.f32 %v3685, %v3909
    %v3911 = vpop.f32.mrb[0].mxu0
    %v3912 = vpop.f32.mrb[0].mxu0
    %v3913 = vadd.f32 %v3688, %v3912
    %v3914 = vpop.f32.mrb[0].mxu0
    %3915 = vmatprep.mubr.bf16.mxu0 %v3317
    %3916 = vmatmul.mubr.bf16.gmra.mrb[0].mxu0 %v3316
    %v3917 = vpop.f32.mrb[0].mxu0
    %v3918 = vadd.f32 %v3693, %v3917
    %v3919 = vpop.f32.mrb[0].mxu0
    %v3920 = vpop.f32.mrb[0].mxu0
    %v3921 = vadd.f32 %v3696, %v3920
    %v3922 = vpop.f32.mrb[0].mxu0
    %3923 = vmatprep.mubr.bf16.mxu0 %v3324
    %3924 = vmatmul.mubr.bf16.gmra.mrb[0].mxu0 %v3323
    %v3925 = vpop.f32.mrb[0].mxu0
    %v3926 = vadd.f32 %v3701, %v3925
    %v3927 = vpop.f32.mrb[0].mxu0
    %v3928 = vpop.f32.mrb[0].mxu0
    %v3929 = vadd.f32 %v3704, %v3928
    %v3930 = vpop.f32.mrb[0].mxu0
    %3931 = vmatprep.mubr.bf16.mxu0 %v3331
    %3932 = vmatmul.mubr.bf16.gmra.mrb[0].mxu0 %v3330
    %v3933 = vpop.f32.mrb[0].mxu0
    %v3934 = vadd.f32 %v3709, %v3933
    %v3935 = vpop.f32.mrb[0].mxu0
    %v3936 = vpop.f32.mrb[0].mxu0
    %v3937 = vadd.f32 %v3712, %v3936
    %v3938 = vpop.f32.mrb[0].mxu0
    %3939 = vmatprep.mubr.bf16.mxu0 %v3338
    %3940 = vmatmul.mubr.bf16.gmra.mrb[0].mxu0 %v3337
    %v3941 = vpop.f32.mrb[0].mxu0
    %v3942 = vadd.f32 %v3717, %v3941
    %v3943 = vpop.f32.mrb[0].mxu0
    %v3944 = vpop.f32.mrb[0].mxu0
    %v3945 = vadd.f32 %v3720, %v3944
    %v3946 = vpop.f32.mrb[0].mxu0
    %3947 = vmatprep.mubr.bf16.mxu0 %v3345
    %3948 = vmatmul.mubr.bf16.gmra.mrb[0].mxu0 %v3344
    %v3949 = vpop.f32.mrb[0].mxu0
    %v3950 = vadd.f32 %v3725, %v3949
    %v3951 = vpop.f32.mrb[0].mxu0
    %v3952 = vpop.f32.mrb[0].mxu0
    %v3953 = vadd.f32 %v3728, %v3952
    %v3954 = vpop.f32.mrb[0].mxu0
    %3955 = vmatprep.mubr.bf16.mxu0 %v3352
    %3956 = vmatmul.mubr.bf16.gmra.mrb[0].mxu0 %v3351
    %v3957 = vpop.f32.mrb[0].mxu0
    %v3958 = vadd.f32 %v3733, %v3957
    %v3959 = vpop.f32.mrb[0].mxu0
    %v3960 = vpop.f32.mrb[0].mxu0
    %v3961 = vadd.f32 %v3736, %v3960
    %v3962 = vpop.f32.mrb[0].mxu0
    %3963 = vmatprep.mubr.bf16.mxu0 %v3359
    %3964 = vmatmul.mubr.bf16.gmra.mrb[0].mxu0 %v3358
    %v3965 = vpop.f32.mrb[0].mxu0
    %v3966 = vadd.f32 %v3741, %v3965
    %v3967 = vpop.f32.mrb[0].mxu0
    %v3968 = vpop.f32.mrb[0].mxu0
    %v3969 = vadd.f32 %v3744, %v3968
    %v3970 = vpop.f32.mrb[0].mxu0
    %3971 = vmatprep.mubr.bf16.mxu0 %v3366
    %3972 = vmatmul.mubr.bf16.gmra.mrb[0].mxu0 %v3365
    %v3973 = vpop.f32.mrb[0].mxu0
    %v3974 = vadd.f32 %v3749, %v3973
    %v3975 = vpop.f32.mrb[0].mxu0
    %v3976 = vpop.f32.mrb[0].mxu0
    %v3977 = vadd.f32 %v3752, %v3976
    %v3978 = vpop.f32.mrb[0].mxu0
    %3979 = vmatprep.mubr.bf16.mxu0 %v3373
    %3980 = vmatmul.mubr.bf16.gmra.mrb[0].mxu0 %v3372
    %v3981 = vpop.f32.mrb[0].mxu0
    %v3982 = vadd.f32 %v3757, %v3981
    %v3983 = vpop.f32.mrb[0].mxu0
    %v3984 = vpop.f32.mrb[0].mxu0
    %v3985 = vadd.f32 %v3760, %v3984
    %v3986 = vpop.f32.mrb[0].mxu0
    %3987 = vmatprep.mubr.bf16.mxu0 %v3380
    %3988 = vmatmul.mubr.bf16.gmra.mrb[0].mxu0 %v3379
    %v3989 = vpop.f32.mrb[0].mxu0
    %v3990 = vadd.f32 %v3765, %v3989
    %v3991 = vpop.f32.mrb[0].mxu0
    %v3992 = vpop.f32.mrb[0].mxu0
    %v3993 = vadd.f32 %v3768, %v3992
    %v3994 = vpop.f32.mrb[0].mxu0
    %3995 = vmatprep.mubr.bf16.mxu0 %v3387
    %3996 = vmatmul.mubr.bf16.gmra.mrb[0].mxu0 %v3386
    %v3997 = vpop.f32.mrb[0].mxu0
    %v3998 = vadd.f32 %v3773, %v3997
    %v3999 = vpop.f32.mrb[0].mxu0
    %v4000 = vpop.f32.mrb[0].mxu0
    %v4001 = vadd.f32 %v3776, %v4000
    %v4002 = vpop.f32.mrb[0].mxu0
    %4003 = vmatprep.mubr.bf16.mxu0 %v3394
    %4004 = vmatmul.mubr.bf16.gmra.mrb[0].mxu0 %v3393
    %v4005 = vpop.f32.mrb[0].mxu0
    %v4006 = vadd.f32 %v3781, %v4005
    %v4007 = vpop.f32.mrb[0].mxu0
    %v4008 = vpop.f32.mrb[0].mxu0
    %v4009 = vadd.f32 %v3784, %v4008
    %v4010 = vpop.f32.mrb[0].mxu0
    %4011 = vmatprep.mubr.bf16.mxu0 %v3401
    %4012 = vmatmul.mubr.bf16.gmra.mrb[0].mxu0 %v3400
    %v4013 = vpop.f32.mrb[0].mxu0
    %v4014 = vadd.f32 %v3789, %v4013
    %v4015 = vpop.f32.mrb[0].mxu0
    %v4016 = vpop.f32.mrb[0].mxu0
    %v4017 = vadd.f32 %v3792, %v4016
    %v4018 = vpop.f32.mrb[0].mxu0
    %4019 = vmatprep.mubr.bf16.mxu0 %v3408
    %4020 = vmatmul.mubr.bf16.gmra.mrb[0].mxu0 %v3407
    %v4021 = vpop.f32.mrb[0].mxu0
    %v4022 = vadd.f32 %v3797, %v4021
    %v4023 = vpop.f32.mrb[0].mxu0
    %v4024 = vpop.f32.mrb[0].mxu0
    %v4025 = vadd.f32 %v3800, %v4024
    %v4026 = vpop.f32.mrb[0].mxu0
    %4027 = vmatprep.mubr.bf16.mxu0 %v3415
    %4028 = vmatmul.mubr.bf16.gmra.mrb[0].mxu0 %v3414
    %v4029 = vpop.f32.mrb[0].mxu0
    %v4030 = vadd.f32 %v3805, %v4029
    %v4031 = vpop.f32.mrb[0].mxu0
    %v4032 = vpop.f32.mrb[0].mxu0
    %v4033 = vadd.f32 %v3808, %v4032
    %v4034 = vpop.f32.mrb[0].mxu0
    %4035 = vmatprep.mubr.bf16.mxu0 %v3422
    %4036 = vmatmul.mubr.bf16.gmra.mrb[0].mxu0 %v3421
    %v4037 = vpop.f32.mrb[0].mxu0
    %v4038 = vadd.f32 %v3813, %v4037
    %v4039 = vpop.f32.mrb[0].mxu0
    %v4040 = vpop.f32.mrb[0].mxu0
    %v4041 = vadd.f32 %v3816, %v4040
    %v4042 = vpop.f32.mrb[0].mxu0
    %4043 = vdwg.mxu0
    %4044 = vmatprep.subr.bf16.mxu0 0
    %4045 = vmatpush1.bf16.msra.mxu0 %v2226
    %4046 = vmatprep.subr.bf16.mxu0 0
    %4047 = vmatpush1.bf16.msra.mxu0 %v2227
    %4048 = vmatprep.subr.bf16.mxu0 0
    %4049 = vmatpush1.bf16.msra.mxu0 %v2228
    %4050 = vmatprep.subr.bf16.mxu0 0
    %4051 = vmatpush1.bf16.msra.mxu0 %v2229
    %4052 = vmatprep.subr.bf16.mxu0 0
    %4053 = vmatpush1.bf16.msra.mxu0 %v2230
    %4054 = vmatprep.subr.bf16.mxu0 0
    %4055 = vmatpush1.bf16.msra.mxu0 %v2231
    %4056 = vmatprep.subr.bf16.mxu0 0
    %4057 = vmatpush1.bf16.msra.mxu0 %v2232
    %4058 = vmatprep.subr.bf16.mxu0 0
    %4059 = vmatpush1.bf16.msra.mxu0 %v2233
    %4060 = vmatprep.subr.bf16.mxu0 0
    %4061 = vmatpush1.bf16.msra.mxu0 %v2234
    %4062 = vmatprep.subr.bf16.mxu0 0
    %4063 = vmatpush1.bf16.msra.mxu0 %v2235
    %4064 = vmatprep.subr.bf16.mxu0 0
    %4065 = vmatpush1.bf16.msra.mxu0 %v2236
    %4066 = vmatprep.subr.bf16.mxu0 0
    %4067 = vmatpush1.bf16.msra.mxu0 %v2237
    %4068 = vmatprep.subr.bf16.mxu0 0
    %4069 = vmatpush1.bf16.msra.mxu0 %v2238
    %4070 = vmatprep.subr.bf16.mxu0 0
    %4071 = vmatpush1.bf16.msra.mxu0 %v2239
    %4072 = vmatprep.subr.bf16.mxu0 0
    %4073 = vmatpush1.bf16.msra.mxu0 %v2240
    %4074 = vmatprep.subr.bf16.mxu0 0
    %4075 = vmatpush1.bf16.msra.mxu0 %v2241
    %4076 = vmatprep.mubr.bf16.mxu0 %v3263
    %4077 = vmatmul.mubr.bf16.gmra.mrb[0].mxu0 %v3262
    %v4078 = vpop.f32.mrb[0].mxu0
    %v4079 = vadd.f32 %v3854, %v4078
    %v4080 = vpop.f32.mrb[0].mxu0
    %v4081 = vpop.f32.mrb[0].mxu0
    %v4082 = vadd.f32 %v3857, %v4081
    %v4083 = vpop.f32.mrb[0].mxu0
    %4084 = vmatprep.mubr.bf16.mxu0 %v3270
    %4085 = vmatmul.mubr.bf16.gmra.mrb[0].mxu0 %v3269
    %v4086 = vpop.f32.mrb[0].mxu0
    %v4087 = vadd.f32 %v3862, %v4086
    %v4088 = vpop.f32.mrb[0].mxu0
    %v4089 = vpop.f32.mrb[0].mxu0
    %v4090 = vadd.f32 %v3865, %v4089
    %v4091 = vpop.f32.mrb[0].mxu0
    %4092 = vmatprep.mubr.bf16.mxu0 %v3277
    %4093 = vmatmul.mubr.bf16.gmra.mrb[0].mxu0 %v3276
    %v4094 = vpop.f32.mrb[0].mxu0
    %v4095 = vadd.f32 %v3870, %v4094
    %v4096 = vpop.f32.mrb[0].mxu0
    %v4097 = vpop.f32.mrb[0].mxu0
    %v4098 = vadd.f32 %v3873, %v4097
    %v4099 = vpop.f32.mrb[0].mxu0
    %4100 = vmatprep.mubr.bf16.mxu0 %v3284
    %4101 = vmatmul.mubr.bf16.gmra.mrb[0].mxu0 %v3283
    %v4102 = vpop.f32.mrb[0].mxu0
    %v4103 = vadd.f32 %v3878, %v4102
    %v4104 = vpop.f32.mrb[0].mxu0
    %v4105 = vpop.f32.mrb[0].mxu0
    %v4106 = vadd.f32 %v3881, %v4105
    %v4107 = vpop.f32.mrb[0].mxu0
    %4108 = vmatprep.mubr.bf16.mxu0 %v3291
    %4109 = vmatmul.mubr.bf16.gmra.mrb[0].mxu0 %v3290
    %v4110 = vpop.f32.mrb[0].mxu0
    %v4111 = vadd.f32 %v3886, %v4110
    %v4112 = vpop.f32.mrb[0].mxu0
    %v4113 = vpop.f32.mrb[0].mxu0
    %v4114 = vadd.f32 %v3889, %v4113
    %v4115 = vpop.f32.mrb[0].mxu0
    %4116 = vmatprep.mubr.bf16.mxu0 %v3298
    %4117 = vmatmul.mubr.bf16.gmra.mrb[0].mxu0 %v3297
    %v4118 = vpop.f32.mrb[0].mxu0
    %v4119 = vadd.f32 %v3894, %v4118
    %v4120 = vpop.f32.mrb[0].mxu0
    %v4121 = vpop.f32.mrb[0].mxu0
    %v4122 = vadd.f32 %v3897, %v4121
    %v4123 = vpop.f32.mrb[0].mxu0
    %4124 = vmatprep.mubr.bf16.mxu0 %v3305
    %4125 = vmatmul.mubr.bf16.gmra.mrb[0].mxu0 %v3304
    %v4126 = vpop.f32.mrb[0].mxu0
    %v4127 = vadd.f32 %v3902, %v4126
    %v4128 = vpop.f32.mrb[0].mxu0
    %v4129 = vpop.f32.mrb[0].mxu0
    %v4130 = vadd.f32 %v3905, %v4129
    %v4131 = vpop.f32.mrb[0].mxu0
    %4132 = vmatprep.mubr.bf16.mxu0 %v3312
    %4133 = vmatmul.mubr.bf16.gmra.mrb[0].mxu0 %v3311
    %v4134 = vpop.f32.mrb[0].mxu0
    %v4135 = vadd.f32 %v3910, %v4134
    %v4136 = vpop.f32.mrb[0].mxu0
    %v4137 = vpop.f32.mrb[0].mxu0
    %v4138 = vadd.f32 %v3913, %v4137
    %v4139 = vpop.f32.mrb[0].mxu0
    %4140 = vmatprep.mubr.bf16.mxu0 %v3319
    %4141 = vmatmul.mubr.bf16.gmra.mrb[0].mxu0 %v3318
    %v4142 = vpop.f32.mrb[0].mxu0
    %v4143 = vadd.f32 %v3918, %v4142
    %v4144 = vpop.f32.mrb[0].mxu0
    %v4145 = vpop.f32.mrb[0].mxu0
    %v4146 = vadd.f32 %v3921, %v4145
    %v4147 = vpop.f32.mrb[0].mxu0
    %4148 = vmatprep.mubr.bf16.mxu0 %v3326
    %4149 = vmatmul.mubr.bf16.gmra.mrb[0].mxu0 %v3325
    %v4150 = vpop.f32.mrb[0].mxu0
    %v4151 = vadd.f32 %v3926, %v4150
    %v4152 = vpop.f32.mrb[0].mxu0
    %v4153 = vpop.f32.mrb[0].mxu0
    %v4154 = vadd.f32 %v3929, %v4153
    %v4155 = vpop.f32.mrb[0].mxu0
    %4156 = vmatprep.mubr.bf16.mxu0 %v3333
    %4157 = vmatmul.mubr.bf16.gmra.mrb[0].mxu0 %v3332
    %v4158 = vpop.f32.mrb[0].mxu0
    %v4159 = vadd.f32 %v3934, %v4158
    %v4160 = vpop.f32.mrb[0].mxu0
    %v4161 = vpop.f32.mrb[0].mxu0
    %v4162 = vadd.f32 %v3937, %v4161
    %v4163 = vpop.f32.mrb[0].mxu0
    %4164 = vmatprep.mubr.bf16.mxu0 %v3340
    %4165 = vmatmul.mubr.bf16.gmra.mrb[0].mxu0 %v3339
    %v4166 = vpop.f32.mrb[0].mxu0
    %v4167 = vadd.f32 %v3942, %v4166
    %v4168 = vpop.f32.mrb[0].mxu0
    %v4169 = vpop.f32.mrb[0].mxu0
    %v4170 = vadd.f32 %v3945, %v4169
    %v4171 = vpop.f32.mrb[0].mxu0
    %4172 = vmatprep.mubr.bf16.mxu0 %v3347
    %4173 = vmatmul.mubr.bf16.gmra.mrb[0].mxu0 %v3346
    %v4174 = vpop.f32.mrb[0].mxu0
    %v4175 = vadd.f32 %v3950, %v4174
    %v4176 = vpop.f32.mrb[0].mxu0
    %v4177 = vpop.f32.mrb[0].mxu0
    %v4178 = vadd.f32 %v3953, %v4177
    %v4179 = vpop.f32.mrb[0].mxu0
    %4180 = vmatprep.mubr.bf16.mxu0 %v3354
    %4181 = vmatmul.mubr.bf16.gmra.mrb[0].mxu0 %v3353
    %v4182 = vpop.f32.mrb[0].mxu0
    %v4183 = vadd.f32 %v3958, %v4182
    %v4184 = vpop.f32.mrb[0].mxu0
    %v4185 = vpop.f32.mrb[0].mxu0
    %v4186 = vadd.f32 %v3961, %v4185
    %v4187 = vpop.f32.mrb[0].mxu0
    %4188 = vmatprep.mubr.bf16.mxu0 %v3361
    %4189 = vmatmul.mubr.bf16.gmra.mrb[0].mxu0 %v3360
    %v4190 = vpop.f32.mrb[0].mxu0
    %v4191 = vadd.f32 %v3966, %v4190
    %v4192 = vpop.f32.mrb[0].mxu0
    %v4193 = vpop.f32.mrb[0].mxu0
    %v4194 = vadd.f32 %v3969, %v4193
    %v4195 = vpop.f32.mrb[0].mxu0
    %4196 = vmatprep.mubr.bf16.mxu0 %v3368
    %4197 = vmatmul.mubr.bf16.gmra.mrb[0].mxu0 %v3367
    %v4198 = vpop.f32.mrb[0].mxu0
    %v4199 = vadd.f32 %v3974, %v4198
    %v4200 = vpop.f32.mrb[0].mxu0
    %v4201 = vpop.f32.mrb[0].mxu0
    %v4202 = vadd.f32 %v3977, %v4201
    %v4203 = vpop.f32.mrb[0].mxu0
    %4204 = vmatprep.mubr.bf16.mxu0 %v3375
    %4205 = vmatmul.mubr.bf16.gmra.mrb[0].mxu0 %v3374
    %v4206 = vpop.f32.mrb[0].mxu0
    %v4207 = vadd.f32 %v3982, %v4206
    %v4208 = vpop.f32.mrb[0].mxu0
    %v4209 = vpop.f32.mrb[0].mxu0
    %v4210 = vadd.f32 %v3985, %v4209
    %v4211 = vpop.f32.mrb[0].mxu0
    %4212 = vmatprep.mubr.bf16.mxu0 %v3382
    %4213 = vmatmul.mubr.bf16.gmra.mrb[0].mxu0 %v3381
    %v4214 = vpop.f32.mrb[0].mxu0
    %v4215 = vadd.f32 %v3990, %v4214
    %v4216 = vpop.f32.mrb[0].mxu0
    %v4217 = vpop.f32.mrb[0].mxu0
    %v4218 = vadd.f32 %v3993, %v4217
    %v4219 = vpop.f32.mrb[0].mxu0
    %4220 = vmatprep.mubr.bf16.mxu0 %v3389
    %4221 = vmatmul.mubr.bf16.gmra.mrb[0].mxu0 %v3388
    %v4222 = vpop.f32.mrb[0].mxu0
    %v4223 = vadd.f32 %v3998, %v4222
    %v4224 = vpop.f32.mrb[0].mxu0
    %v4225 = vpop.f32.mrb[0].mxu0
    %v4226 = vadd.f32 %v4001, %v4225
    %v4227 = vpop.f32.mrb[0].mxu0
    %4228 = vmatprep.mubr.bf16.mxu0 %v3396
    %4229 = vmatmul.mubr.bf16.gmra.mrb[0].mxu0 %v3395
    %v4230 = vpop.f32.mrb[0].mxu0
    %v4231 = vadd.f32 %v4006, %v4230
    %v4232 = vpop.f32.mrb[0].mxu0
    %v4233 = vpop.f32.mrb[0].mxu0
    %v4234 = vadd.f32 %v4009, %v4233
    %v4235 = vpop.f32.mrb[0].mxu0
    %4236 = vmatprep.mubr.bf16.mxu0 %v3403
    %4237 = vmatmul.mubr.bf16.gmra.mrb[0].mxu0 %v3402
    %v4238 = vpop.f32.mrb[0].mxu0
    %v4239 = vadd.f32 %v4014, %v4238
    %v4240 = vpop.f32.mrb[0].mxu0
    %v4241 = vpop.f32.mrb[0].mxu0
    %v4242 = vadd.f32 %v4017, %v4241
    %v4243 = vpop.f32.mrb[0].mxu0
    %4244 = vmatprep.mubr.bf16.mxu0 %v3410
    %4245 = vmatmul.mubr.bf16.gmra.mrb[0].mxu0 %v3409
    %v4246 = vpop.f32.mrb[0].mxu0
    %v4247 = vadd.f32 %v4022, %v4246
    %v4248 = vpop.f32.mrb[0].mxu0
    %v4249 = vpop.f32.mrb[0].mxu0
    %v4250 = vadd.f32 %v4025, %v4249
    %v4251 = vpop.f32.mrb[0].mxu0
    %4252 = vmatprep.mubr.bf16.mxu0 %v3417
    %4253 = vmatmul.mubr.bf16.gmra.mrb[0].mxu0 %v3416
    %v4254 = vpop.f32.mrb[0].mxu0
    %v4255 = vadd.f32 %v4030, %v4254
    %v4256 = vpop.f32.mrb[0].mxu0
    %v4257 = vpop.f32.mrb[0].mxu0
    %v4258 = vadd.f32 %v4033, %v4257
    %v4259 = vpop.f32.mrb[0].mxu0
    %4260 = vmatprep.mubr.bf16.mxu0 %v3424
    %4261 = vmatmul.mubr.bf16.gmra.mrb[0].mxu0 %v3423
    %v4262 = vpop.f32.mrb[0].mxu0
    %v4263 = vadd.f32 %v4038, %v4262
    %v4264 = vpop.f32.mrb[0].mxu0
    %v4265 = vpop.f32.mrb[0].mxu0
    %v4266 = vadd.f32 %v4041, %v4265
    %v4267 = vpop.f32.mrb[0].mxu0
    %4268 = vdwg.mxu0
    %4269 = vmatprep.subr.bf16.mxu0 0
    %4270 = vmatpush1.bf16.msra.mxu0 %v2242
    %4271 = vmatprep.subr.bf16.mxu0 0
    %4272 = vmatpush1.bf16.msra.mxu0 %v2243
    %4273 = vmatprep.subr.bf16.mxu0 0
    %4274 = vmatpush1.bf16.msra.mxu0 %v2244
    %4275 = vmatprep.subr.bf16.mxu0 0
    %4276 = vmatpush1.bf16.msra.mxu0 %v2245
    %4277 = vmatprep.subr.bf16.mxu0 0
    %4278 = vmatpush1.bf16.msra.mxu0 %v2246
    %4279 = vmatprep.subr.bf16.mxu0 0
    %4280 = vmatpush1.bf16.msra.mxu0 %v2247
    %4281 = vmatprep.subr.bf16.mxu0 0
    %4282 = vmatpush1.bf16.msra.mxu0 %v2248
    %4283 = vmatprep.subr.bf16.mxu0 0
    %4284 = vmatpush1.bf16.msra.mxu0 %v2249
    %4285 = vmatprep.subr.bf16.mxu0 0
    %4286 = vmatpush1.bf16.msra.mxu0 0
    %4287 = vmatprep.subr.bf16.mxu0 0
    %4288 = vmatpush1.bf16.msra.mxu0 0
    %4289 = vmatprep.subr.bf16.mxu0 0
    %4290 = vmatpush1.bf16.msra.mxu0 0
    %4291 = vmatprep.subr.bf16.mxu0 0
    %4292 = vmatpush1.bf16.msra.mxu0 0
    %4293 = vmatprep.subr.bf16.mxu0 0
    %4294 = vmatpush1.bf16.msra.mxu0 0
    %4295 = vmatprep.subr.bf16.mxu0 0
    %4296 = vmatpush1.bf16.msra.mxu0 0
    %4297 = vmatprep.subr.bf16.mxu0 0
    %4298 = vmatpush1.bf16.msra.mxu0 0
    %4299 = vmatprep.subr.bf16.mxu0 0
    %4300 = vmatpush1.bf16.msra.mxu0 0
    %4301 = vmatprep.mubr.bf16.mxu0 0
    %4302 = vmatmul.mubr.bf16.gmra.mrb[0].mxu0 %v3264
    %v4303 = vpop.f32.mrb[0].mxu0
    %v4304 = vadd.f32 %v4079, %v4303
    %v4305 = vpop.f32.mrb[0].mxu0
    %v4306 = vpop.f32.mrb[0].mxu0
    %v4307 = vadd.f32 %v4082, %v4306
    %v4308 = vpop.f32.mrb[0].mxu0
    %4309 = vmatprep.mubr.bf16.mxu0 0
    %4310 = vmatmul.mubr.bf16.gmra.mrb[0].mxu0 %v3271
    %v4311 = vpop.f32.mrb[0].mxu0
    %v4312 = vadd.f32 %v4087, %v4311
    %v4313 = vpop.f32.mrb[0].mxu0
    %v4314 = vpop.f32.mrb[0].mxu0
    %v4315 = vadd.f32 %v4090, %v4314
    %v4316 = vpop.f32.mrb[0].mxu0
    %4317 = vmatprep.mubr.bf16.mxu0 0
    %4318 = vmatmul.mubr.bf16.gmra.mrb[0].mxu0 %v3278
    %v4319 = vpop.f32.mrb[0].mxu0
    %v4320 = vadd.f32 %v4095, %v4319
    %v4321 = vpop.f32.mrb[0].mxu0
    %v4322 = vpop.f32.mrb[0].mxu0
    %v4323 = vadd.f32 %v4098, %v4322
    %v4324 = vpop.f32.mrb[0].mxu0
    %4325 = vmatprep.mubr.bf16.mxu0 0
    %4326 = vmatmul.mubr.bf16.gmra.mrb[0].mxu0 %v3285
    %v4327 = vpop.f32.mrb[0].mxu0
    %v4328 = vadd.f32 %v4103, %v4327
    %v4329 = vpop.f32.mrb[0].mxu0
    %v4330 = vpop.f32.mrb[0].mxu0
    %v4331 = vadd.f32 %v4106, %v4330
    %v4332 = vpop.f32.mrb[0].mxu0
    %4333 = vmatprep.mubr.bf16.mxu0 0
    %4334 = vmatmul.mubr.bf16.gmra.mrb[0].mxu0 %v3292
    %v4335 = vpop.f32.mrb[0].mxu0
    %v4336 = vadd.f32 %v4111, %v4335
    %v4337 = vpop.f32.mrb[0].mxu0
    %v4338 = vpop.f32.mrb[0].mxu0
    %v4339 = vadd.f32 %v4114, %v4338
    %v4340 = vpop.f32.mrb[0].mxu0
    %4341 = vmatprep.mubr.bf16.mxu0 0
    %4342 = vmatmul.mubr.bf16.gmra.mrb[0].mxu0 %v3299
    %v4343 = vpop.f32.mrb[0].mxu0
    %v4344 = vadd.f32 %v4119, %v4343
    %v4345 = vpop.f32.mrb[0].mxu0
    %v4346 = vpop.f32.mrb[0].mxu0
    %v4347 = vadd.f32 %v4122, %v4346
    %v4348 = vpop.f32.mrb[0].mxu0
    %4349 = vmatprep.mubr.bf16.mxu0 0
    %4350 = vmatmul.mubr.bf16.gmra.mrb[0].mxu0 %v3306
    %v4351 = vpop.f32.mrb[0].mxu0
    %v4352 = vadd.f32 %v4127, %v4351
    %v4353 = vpop.f32.mrb[0].mxu0
    %v4354 = vpop.f32.mrb[0].mxu0
    %v4355 = vadd.f32 %v4130, %v4354
    %v4356 = vpop.f32.mrb[0].mxu0
    %4357 = vmatprep.mubr.bf16.mxu0 0
    %4358 = vmatmul.mubr.bf16.gmra.mrb[0].mxu0 %v3313
    %v4359 = vpop.f32.mrb[0].mxu0
    %v4360 = vadd.f32 %v4135, %v4359
    %v4361 = vpop.f32.mrb[0].mxu0
    %v4362 = vpop.f32.mrb[0].mxu0
    %v4363 = vadd.f32 %v4138, %v4362
    %v4364 = vpop.f32.mrb[0].mxu0
    %4365 = vmatprep.mubr.bf16.mxu0 0
    %4366 = vmatmul.mubr.bf16.gmra.mrb[0].mxu0 %v3320
    %v4367 = vpop.f32.mrb[0].mxu0
    %v4368 = vadd.f32 %v4143, %v4367
    %v4369 = vpop.f32.mrb[0].mxu0
    %v4370 = vpop.f32.mrb[0].mxu0
    %v4371 = vadd.f32 %v4146, %v4370
    %v4372 = vpop.f32.mrb[0].mxu0
    %4373 = vmatprep.mubr.bf16.mxu0 0
    %4374 = vmatmul.mubr.bf16.gmra.mrb[0].mxu0 %v3327
    %v4375 = vpop.f32.mrb[0].mxu0
    %v4376 = vadd.f32 %v4151, %v4375
    %v4377 = vpop.f32.mrb[0].mxu0
    %v4378 = vpop.f32.mrb[0].mxu0
    %v4379 = vadd.f32 %v4154, %v4378
    %v4380 = vpop.f32.mrb[0].mxu0
    %4381 = vmatprep.mubr.bf16.mxu0 0
    %4382 = vmatmul.mubr.bf16.gmra.mrb[0].mxu0 %v3334
    %v4383 = vpop.f32.mrb[0].mxu0
    %v4384 = vadd.f32 %v4159, %v4383
    %v4385 = vpop.f32.mrb[0].mxu0
    %v4386 = vpop.f32.mrb[0].mxu0
    %v4387 = vadd.f32 %v4162, %v4386
    %v4388 = vpop.f32.mrb[0].mxu0
    %4389 = vmatprep.mubr.bf16.mxu0 0
    %4390 = vmatmul.mubr.bf16.gmra.mrb[0].mxu0 %v3341
    %v4391 = vpop.f32.mrb[0].mxu0
    %v4392 = vadd.f32 %v4167, %v4391
    %v4393 = vpop.f32.mrb[0].mxu0
    %v4394 = vpop.f32.mrb[0].mxu0
    %v4395 = vadd.f32 %v4170, %v4394
    %v4396 = vpop.f32.mrb[0].mxu0
    %4397 = vmatprep.mubr.bf16.mxu0 0
    %4398 = vmatmul.mubr.bf16.gmra.mrb[0].mxu0 %v3348
    %v4399 = vpop.f32.mrb[0].mxu0
    %v4400 = vadd.f32 %v4175, %v4399
    %v4401 = vpop.f32.mrb[0].mxu0
    %v4402 = vpop.f32.mrb[0].mxu0
    %v4403 = vadd.f32 %v4178, %v4402
    %v4404 = vpop.f32.mrb[0].mxu0
    %4405 = vmatprep.mubr.bf16.mxu0 0
    %4406 = vmatmul.mubr.bf16.gmra.mrb[0].mxu0 %v3355
    %v4407 = vpop.f32.mrb[0].mxu0
    %v4408 = vadd.f32 %v4183, %v4407
    %v4409 = vpop.f32.mrb[0].mxu0
    %v4410 = vpop.f32.mrb[0].mxu0
    %v4411 = vadd.f32 %v4186, %v4410
    %v4412 = vpop.f32.mrb[0].mxu0
    %4413 = vmatprep.mubr.bf16.mxu0 0
    %4414 = vmatmul.mubr.bf16.gmra.mrb[0].mxu0 %v3362
    %v4415 = vpop.f32.mrb[0].mxu0
    %v4416 = vadd.f32 %v4191, %v4415
    %v4417 = vpop.f32.mrb[0].mxu0
    %v4418 = vpop.f32.mrb[0].mxu0
    %v4419 = vadd.f32 %v4194, %v4418
    %v4420 = vpop.f32.mrb[0].mxu0
    %4421 = vmatprep.mubr.bf16.mxu0 0
    %4422 = vmatmul.mubr.bf16.gmra.mrb[0].mxu0 %v3369
    %v4423 = vpop.f32.mrb[0].mxu0
    %v4424 = vadd.f32 %v4199, %v4423
    %v4425 = vpop.f32.mrb[0].mxu0
    %v4426 = vpop.f32.mrb[0].mxu0
    %v4427 = vadd.f32 %v4202, %v4426
    %v4428 = vpop.f32.mrb[0].mxu0
    %4429 = vmatprep.mubr.bf16.mxu0 0
    %4430 = vmatmul.mubr.bf16.gmra.mrb[0].mxu0 %v3376
    %v4431 = vpop.f32.mrb[0].mxu0
    %v4432 = vadd.f32 %v4207, %v4431
    %v4433 = vpop.f32.mrb[0].mxu0
    %v4434 = vpop.f32.mrb[0].mxu0
    %v4435 = vadd.f32 %v4210, %v4434
    %v4436 = vpop.f32.mrb[0].mxu0
    %4437 = vmatprep.mubr.bf16.mxu0 0
    %4438 = vmatmul.mubr.bf16.gmra.mrb[0].mxu0 %v3383
    %v4439 = vpop.f32.mrb[0].mxu0
    %v4440 = vadd.f32 %v4215, %v4439
    %v4441 = vpop.f32.mrb[0].mxu0
    %v4442 = vpop.f32.mrb[0].mxu0
    %v4443 = vadd.f32 %v4218, %v4442
    %v4444 = vpop.f32.mrb[0].mxu0
    %4445 = vmatprep.mubr.bf16.mxu0 0
    %4446 = vmatmul.mubr.bf16.gmra.mrb[0].mxu0 %v3390
    %v4447 = vpop.f32.mrb[0].mxu0
    %v4448 = vadd.f32 %v4223, %v4447
    %v4449 = vpop.f32.mrb[0].mxu0
    %v4450 = vpop.f32.mrb[0].mxu0
    %v4451 = vadd.f32 %v4226, %v4450
    %v4452 = vpop.f32.mrb[0].mxu0
    %4453 = vmatprep.mubr.bf16.mxu0 0
    %4454 = vmatmul.mubr.bf16.gmra.mrb[0].mxu0 %v3397
    %v4455 = vpop.f32.mrb[0].mxu0
    %v4456 = vadd.f32 %v4231, %v4455
    %v4457 = vpop.f32.mrb[0].mxu0
    %v4458 = vpop.f32.mrb[0].mxu0
    %v4459 = vadd.f32 %v4234, %v4458
    %v4460 = vpop.f32.mrb[0].mxu0
    %4461 = vmatprep.mubr.bf16.mxu0 0
    %4462 = vmatmul.mubr.bf16.gmra.mrb[0].mxu0 %v3404
    %v4463 = vpop.f32.mrb[0].mxu0
    %v4464 = vadd.f32 %v4239, %v4463
    %v4465 = vpop.f32.mrb[0].mxu0
    %v4466 = vpop.f32.mrb[0].mxu0
    %v4467 = vadd.f32 %v4242, %v4466
    %v4468 = vpop.f32.mrb[0].mxu0
    %4469 = vmatprep.mubr.bf16.mxu0 0
    %4470 = vmatmul.mubr.bf16.gmra.mrb[0].mxu0 %v3411
    %v4471 = vpop.f32.mrb[0].mxu0
    %v4472 = vadd.f32 %v4247, %v4471
    %v4473 = vpop.f32.mrb[0].mxu0
    %v4474 = vpop.f32.mrb[0].mxu0
    %v4475 = vadd.f32 %v4250, %v4474
    %v4476 = vpop.f32.mrb[0].mxu0
    %4477 = vmatprep.mubr.bf16.mxu0 0
    %4478 = vmatmul.mubr.bf16.gmra.mrb[0].mxu0 %v3418
    %v4479 = vpop.f32.mrb[0].mxu0
    %v4480 = vadd.f32 %v4255, %v4479
    %v4481 = vpop.f32.mrb[0].mxu0
    %v4482 = vpop.f32.mrb[0].mxu0
    %v4483 = vadd.f32 %v4258, %v4482
    %v4484 = vpop.f32.mrb[0].mxu0
    %4485 = vmatprep.mubr.bf16.mxu0 0
    %4486 = vmatmul.mubr.bf16.gmra.mrb[0].mxu0 %v3425
    %v4487 = vpop.f32.mrb[0].mxu0
    %v4488 = vadd.f32 %v4263, %v4487
    %v4489 = vpop.f32.mrb[0].mxu0
    %v4490 = vpop.f32.mrb[0].mxu0
    %v4491 = vadd.f32 %v4266, %v4490
    %v4492 = vpop.f32.mrb[0].mxu0
    %4493 = vdwg.mxu0
    %v4494 = vmax.f32 %v4304, 0.0
    %v4495 = vmax.f32 %v4307, 0.0
    %v4496 = vmax.f32 %v4312, 0.0
    %v4497 = vmax.f32 %v4315, 0.0
    %v4498 = vmax.f32 %v4320, 0.0
    %v4499 = vmax.f32 %v4323, 0.0
    %v4500 = vmax.f32 %v4328, 0.0
    %v4501 = vmax.f32 %v4331, 0.0
    %v4502 = vmax.f32 %v4336, 0.0
    %v4503 = vmax.f32 %v4339, 0.0
    %v4504 = vmax.f32 %v4344, 0.0
    %v4505 = vmax.f32 %v4347, 0.0
    %v4506 = vmax.f32 %v4352, 0.0
    %v4507 = vmax.f32 %v4355, 0.0
    %v4508 = vmax.f32 %v4360, 0.0
    %v4509 = vmax.f32 %v4363, 0.0
    %v4510 = vmax.f32 %v4368, 0.0
    %v4511 = vmax.f32 %v4371, 0.0
    %v4512 = vmax.f32 %v4376, 0.0
    %v4513 = vmax.f32 %v4379, 0.0
    %v4514 = vmax.f32 %v4384, 0.0
    %v4515 = vmax.f32 %v4387, 0.0
    %v4516 = vmax.f32 %v4392, 0.0
    %v4517 = vmax.f32 %v4395, 0.0
    %v4518 = vmax.f32 %v4400, 0.0
    %v4519 = vmax.f32 %v4403, 0.0
    %v4520 = vmax.f32 %v4408, 0.0
    %v4521 = vmax.f32 %v4411, 0.0
    %v4522 = vmax.f32 %v4416, 0.0
    %v4523 = vmax.f32 %v4419, 0.0
    %v4524 = vmax.f32 %v4424, 0.0
    %v4525 = vmax.f32 %v4427, 0.0
    %v4526 = vmax.f32 %v4432, 0.0
    %v4527 = vmax.f32 %v4435, 0.0
    %v4528 = vmax.f32 %v4440, 0.0
    %v4529 = vmax.f32 %v4443, 0.0
    %v4530 = vmax.f32 %v4448, 0.0
    %v4531 = vmax.f32 %v4451, 0.0
    %v4532 = vmax.f32 %v4456, 0.0
    %v4533 = vmax.f32 %v4459, 0.0
    %v4534 = vmax.f32 %v4464, 0.0
    %v4535 = vmax.f32 %v4467, 0.0
    %v4536 = vmax.f32 %v4472, 0.0
    %v4537 = vmax.f32 %v4475, 0.0
    %v4538 = vmax.f32 %v4480, 0.0
    %v4539 = vmax.f32 %v4483, 0.0
    %v4540 = vmax.f32 %v4488, 0.0
    %v4541 = vmax.f32 %v4491, 0.0
    %v4542 = vpack.c.bf16 %v4495, %v4494
    %v4543 = vpack.c.bf16 %v4497, %v4496
    %v4544 = vpack.c.bf16 %v4499, %v4498
    %v4545 = vpack.c.bf16 %v4501, %v4500
    %v4546 = vpack.c.bf16 %v4503, %v4502
    %v4547 = vpack.c.bf16 %v4505, %v4504
    %v4548 = vpack.c.bf16 %v4507, %v4506
    %v4549 = vpack.c.bf16 %v4509, %v4508
    %v4550 = vpack.c.bf16 %v4511, %v4510
    %v4551 = vpack.c.bf16 %v4513, %v4512
    %v4552 = vpack.c.bf16 %v4515, %v4514
    %v4553 = vpack.c.bf16 %v4517, %v4516
    %v4554 = vpack.c.bf16 %v4519, %v4518
    %v4555 = vpack.c.bf16 %v4521, %v4520
    %v4556 = vpack.c.bf16 %v4523, %v4522
    %v4557 = vpack.c.bf16 %v4525, %v4524
    %v4558 = vpack.c.bf16 %v4527, %v4526
    %v4559 = vpack.c.bf16 %v4529, %v4528
    %v4560 = vpack.c.bf16 %v4531, %v4530
    %v4561 = vpack.c.bf16 %v4533, %v4532
    %v4562 = vpack.c.bf16 %v4535, %v4534
    %v4563 = vpack.c.bf16 %v4537, %v4536
    %v4564 = vpack.c.bf16 %v4539, %v4538
    %v4565 = vpack.c.bf16 %v4541, %v4540
    %v4566 = vld [vmem:[#allocation9] sm:$0xff]
    %v4567 = vld [vmem:[#allocation9 + $0x8] sm:$0xf]
    %v4568 = vld [vmem:[#allocation9 + $0xc] sm:$0xff]
    %v4569 = vld [vmem:[#allocation9 + $0x14] sm:$0xf]
    %v4570 = vld [vmem:[#allocation9 + $0x18] sm:$0xff]
    %v4571 = vld [vmem:[#allocation9 + $0x20] sm:$0xf]
    %v4572 = vld [vmem:[#allocation9 + $0x24] sm:$0xff]
    %v4573 = vld [vmem:[#allocation9 + $0x2c] sm:$0xf]
    %v4574 = vld [vmem:[#allocation9 + $0x30] sm:$0xff]
    %v4575 = vld [vmem:[#allocation9 + $0x38] sm:$0xf]
    %v4576 = vld [vmem:[#allocation9 + $0x3c] sm:$0xff]
    %v4577 = vld [vmem:[#allocation9 + $0x44] sm:$0xf]
    %v4578 = vld [vmem:[#allocation9 + $0x48] sm:$0xff]
    %v4579 = vld [vmem:[#allocation9 + $0x50] sm:$0xf]
    %v4580 = vld [vmem:[#allocation9 + $0x54] sm:$0xff]
    %v4581 = vld [vmem:[#allocation9 + $0x5c] sm:$0xf]
    %v4582 = vld [vmem:[#allocation9 + $0x60] sm:$0xff]
    %v4583 = vld [vmem:[#allocation9 + $0x68] sm:$0xf]
    %v4584 = vld [vmem:[#allocation9 + $0x6c] sm:$0xff]
    %v4585 = vld [vmem:[#allocation9 + $0x74] sm:$0xf]
    %v4586 = vld [vmem:[#allocation9 + $0x78] sm:$0xff]
    %v4587 = vld [vmem:[#allocation9 + $0x80] sm:$0xf]
    %v4588 = vld [vmem:[#allocation9 + $0x84] sm:$0xff]
    %v4589 = vld [vmem:[#allocation9 + $0x8c] sm:$0xf]
    %v4590 = vld [vmem:[#allocation9 + $0x90] sm:$0xff]
    %v4591 = vld [vmem:[#allocation9 + $0x98] sm:$0xf]
    %v4592 = vld [vmem:[#allocation9 + $0x9c] sm:$0xff]
    %v4593 = vld [vmem:[#allocation9 + $0xa4] sm:$0xf]
    %v4594 = vld [vmem:[#allocation9 + $0xa8] sm:$0xff]
    %v4595 = vld [vmem:[#allocation9 + $0xb0] sm:$0xf]
    %v4596 = vld [vmem:[#allocation9 + $0xb4] sm:$0xff]
    %v4597 = vld [vmem:[#allocation9 + $0xbc] sm:$0xf]
    %v4598 = vld [vmem:[#allocation9 + $0xc0] sm:$0xff]
    %v4599 = vld [vmem:[#allocation9 + $0xc8] sm:$0xf]
    %v4600 = vld [vmem:[#allocation9 + $0xcc] sm:$0xff]
    %v4601 = vld [vmem:[#allocation9 + $0xd4] sm:$0xf]
    %v4602 = vld [vmem:[#allocation9 + $0xd8] sm:$0xff]
    %v4603 = vld [vmem:[#allocation9 + $0xe0] sm:$0xf]
    %v4604 = vld [vmem:[#allocation9 + $0xe4] sm:$0xff]
    %v4605 = vld [vmem:[#allocation9 + $0xec] sm:$0xf]
    %v4606 = vld [vmem:[%s5] sm:$0xff]
    %v4607 = vld [vmem:[%s5 + $0x8] sm:$0xff]
    %v4608 = vld [vmem:[%s5 + $0x10] sm:$0xff]
    %v4609 = vld [vmem:[%s5 + $0x18] sm:$0xff]
    %v4610 = vld [vmem:[%s5 + $0x20] sm:$0xff]
    %v4611 = vld [vmem:[%s5 + $0x28] sm:$0xff]
    %v4612 = vld [vmem:[%s5 + $0x30] sm:$0xff]
    %v4613 = vld [vmem:[%s5 + $0x38] sm:$0xff]
    %v4614 = vld [vmem:[%s5 + $0x40] sm:$0xff]
    %v4615 = vld [vmem:[%s5 + $0x48] sm:$0xff]
    %v4616 = vld [vmem:[%s5 + $0x50] sm:$0xff]
    %v4617 = vld [vmem:[%s5 + $0x58] sm:$0xff]
    %v4618 = vld [vmem:[%s5 + $0x60] sm:$0xff]
    %v4619 = vld [vmem:[%s5 + $0x68] sm:$0xff]
    %v4620 = vld [vmem:[%s5 + $0x70] sm:$0xff]
    %v4621 = vld [vmem:[%s5 + $0x78] sm:$0xff]
    %v4622 = vld [vmem:[%s5 + $0x80] sm:$0xff]
    %v4623 = vld [vmem:[%s5 + $0x88] sm:$0xff]
    %v4624 = vld [vmem:[%s5 + $0x90] sm:$0xff]
    %v4625 = vld [vmem:[%s5 + $0x98] sm:$0xff]
    %4627 = vset.pattern.permute.xlu0 0
    %4628 = vperm.xlu0 %4627, %v4606
    %v4629 = vpop.permute.xlu0 %4628
    %4632 = vset.pattern.permute.xlu0 0
    %4633 = vperm.xlu0 %4632, %v4607
    %v4634 = vpop.permute.xlu0 %4633
    %4637 = vset.pattern.permute.xlu0 0
    %4638 = vperm.xlu0 %4637, %v4608
    %v4639 = vpop.permute.xlu0 %4638
    %4642 = vset.pattern.permute.xlu0 0
    %4643 = vperm.xlu0 %4642, %v4609
    %v4644 = vpop.permute.xlu0 %4643
    %4647 = vset.pattern.permute.xlu0 0
    %4648 = vperm.xlu0 %4647, %v4610
    %v4649 = vpop.permute.xlu0 %4648
    %4652 = vset.pattern.permute.xlu0 0
    %4653 = vperm.xlu0 %4652, %v4611
    %v4654 = vpop.permute.xlu0 %4653
    %4657 = vset.pattern.permute.xlu0 0
    %4658 = vperm.xlu0 %4657, %v4612
    %v4659 = vpop.permute.xlu0 %4658
    %4662 = vset.pattern.permute.xlu0 0
    %4663 = vperm.xlu0 %4662, %v4613
    %v4664 = vpop.permute.xlu0 %4663
    %4667 = vset.pattern.permute.xlu0 0
    %4668 = vperm.xlu0 %4667, %v4614
    %v4669 = vpop.permute.xlu0 %4668
    %4672 = vset.pattern.permute.xlu0 0
    %4673 = vperm.xlu0 %4672, %v4615
    %v4674 = vpop.permute.xlu0 %4673
    %4677 = vset.pattern.permute.xlu0 0
    %4678 = vperm.xlu0 %4677, %v4616
    %v4679 = vpop.permute.xlu0 %4678
    %4682 = vset.pattern.permute.xlu0 0
    %4683 = vperm.xlu0 %4682, %v4617
    %v4684 = vpop.permute.xlu0 %4683
    %4687 = vset.pattern.permute.xlu0 0
    %4688 = vperm.xlu0 %4687, %v4618
    %v4689 = vpop.permute.xlu0 %4688
    %4692 = vset.pattern.permute.xlu0 0
    %4693 = vperm.xlu0 %4692, %v4619
    %v4694 = vpop.permute.xlu0 %4693
    %4697 = vset.pattern.permute.xlu0 0
    %4698 = vperm.xlu0 %4697, %v4620
    %v4699 = vpop.permute.xlu0 %4698
    %4702 = vset.pattern.permute.xlu0 0
    %4703 = vperm.xlu0 %4702, %v4621
    %v4704 = vpop.permute.xlu0 %4703
    %4707 = vset.pattern.permute.xlu0 0
    %4708 = vperm.xlu0 %4707, %v4622
    %v4709 = vpop.permute.xlu0 %4708
    %4712 = vset.pattern.permute.xlu0 0
    %4713 = vperm.xlu0 %4712, %v4623
    %v4714 = vpop.permute.xlu0 %4713
    %4717 = vset.pattern.permute.xlu0 0
    %4718 = vperm.xlu0 %4717, %v4624
    %v4719 = vpop.permute.xlu0 %4718
    %4722 = vset.pattern.permute.xlu0 0
    %4723 = vperm.xlu0 %4722, %v4625
    %v4724 = vpop.permute.xlu0 %4723
    %v4766 = vunpack.c.l.b16 %v4566
    %v4767 = vunpack.c.h.b16 %v4566
    %v4768 = vunpack.c.l.b16 %v4567
    %v4769 = vunpack.c.l.b16 %v4568
    %v4770 = vunpack.c.h.b16 %v4568
    %v4771 = vunpack.c.l.b16 %v4569
    %v4772 = vunpack.c.l.b16 %v4570
    %v4773 = vunpack.c.h.b16 %v4570
    %v4774 = vunpack.c.l.b16 %v4571
    %v4775 = vunpack.c.l.b16 %v4572
    %v4776 = vunpack.c.h.b16 %v4572
    %v4777 = vunpack.c.l.b16 %v4573
    %v4778 = vunpack.c.l.b16 %v4574
    %v4779 = vunpack.c.h.b16 %v4574
    %v4780 = vunpack.c.l.b16 %v4575
    %v4781 = vunpack.c.l.b16 %v4576
    %v4782 = vunpack.c.h.b16 %v4576
    %v4783 = vunpack.c.l.b16 %v4577
    %v4784 = vunpack.c.l.b16 %v4578
    %v4785 = vunpack.c.h.b16 %v4578
    %v4786 = vunpack.c.l.b16 %v4579
    %v4787 = vunpack.c.l.b16 %v4580
    %v4788 = vunpack.c.h.b16 %v4580
    %v4789 = vunpack.c.l.b16 %v4581
    %v4790 = vunpack.c.l.b16 %v4582
    %v4791 = vunpack.c.h.b16 %v4582
    %v4792 = vunpack.c.l.b16 %v4583
    %v4793 = vunpack.c.l.b16 %v4584
    %v4794 = vunpack.c.h.b16 %v4584
    %v4795 = vunpack.c.l.b16 %v4585
    %v4796 = vunpack.c.l.b16 %v4586
    %v4797 = vunpack.c.h.b16 %v4586
    %v4798 = vunpack.c.l.b16 %v4587
    %v4799 = vunpack.c.l.b16 %v4588
    %v4800 = vunpack.c.h.b16 %v4588
    %v4801 = vunpack.c.l.b16 %v4589
    %v4802 = vunpack.c.l.b16 %v4590
    %v4803 = vunpack.c.h.b16 %v4590
    %v4804 = vunpack.c.l.b16 %v4591
    %v4805 = vunpack.c.l.b16 %v4592
    %v4806 = vunpack.c.h.b16 %v4592
    %v4807 = vunpack.c.l.b16 %v4593
    %v4808 = vunpack.c.l.b16 %v4594
    %v4809 = vunpack.c.h.b16 %v4594
    %v4810 = vunpack.c.l.b16 %v4595
    %v4811 = vunpack.c.l.b16 %v4596
    %v4812 = vunpack.c.h.b16 %v4596
    %v4813 = vunpack.c.l.b16 %v4597
    %v4814 = vunpack.c.l.b16 %v4598
    %v4815 = vunpack.c.h.b16 %v4598
    %v4816 = vunpack.c.l.b16 %v4599
    %v4817 = vunpack.c.l.b16 %v4600
    %v4818 = vunpack.c.h.b16 %v4600
    %v4819 = vunpack.c.l.b16 %v4601
    %v4820 = vunpack.c.l.b16 %v4602
    %v4821 = vunpack.c.h.b16 %v4602
    %v4822 = vunpack.c.l.b16 %v4603
    %v4823 = vunpack.c.l.b16 %v4604
    %v4824 = vunpack.c.h.b16 %v4604
    %v4825 = vunpack.c.l.b16 %v4605
    %v4826 = vpack.c.b16 %v4769, %v4766
    %v4827 = vpack.c.b16 %v4770, %v4767
    %v4828 = vpack.c.b16 %v4771, %v4768
    %v4829 = vpack.c.b16 %v4775, %v4772
    %v4830 = vpack.c.b16 %v4776, %v4773
    %v4831 = vpack.c.b16 %v4777, %v4774
    %v4832 = vpack.c.b16 %v4781, %v4778
    %v4833 = vpack.c.b16 %v4782, %v4779
    %v4834 = vpack.c.b16 %v4783, %v4780
    %v4835 = vpack.c.b16 %v4787, %v4784
    %v4836 = vpack.c.b16 %v4788, %v4785
    %v4837 = vpack.c.b16 %v4789, %v4786
    %v4838 = vpack.c.b16 %v4793, %v4790
    %v4839 = vpack.c.b16 %v4794, %v4791
    %v4840 = vpack.c.b16 %v4795, %v4792
    %v4841 = vpack.c.b16 %v4799, %v4796
    %v4842 = vpack.c.b16 %v4800, %v4797
    %v4843 = vpack.c.b16 %v4801, %v4798
    %v4844 = vpack.c.b16 %v4805, %v4802
    %v4845 = vpack.c.b16 %v4806, %v4803
    %v4846 = vpack.c.b16 %v4807, %v4804
    %v4847 = vpack.c.b16 %v4811, %v4808
    %v4848 = vpack.c.b16 %v4812, %v4809
    %v4849 = vpack.c.b16 %v4813, %v4810
    %v4850 = vpack.c.b16 %v4817, %v4814
    %v4851 = vpack.c.b16 %v4818, %v4815
    %v4852 = vpack.c.b16 %v4819, %v4816
    %v4853 = vpack.c.b16 %v4823, %v4820
    %v4854 = vpack.c.b16 %v4824, %v4821
    %v4855 = vpack.c.b16 %v4825, %v4822
    %4886 = vmatprep.subr.bf16.mxu0 0
    %4887 = vmatpush1.bf16.msra.mxu0 %v4542
    %4888 = vmatprep.subr.bf16.mxu0 0
    %4889 = vmatpush1.bf16.msra.mxu0 %v4543
    %4890 = vmatprep.subr.bf16.mxu0 0
    %4891 = vmatpush1.bf16.msra.mxu0 %v4544
    %4892 = vmatprep.subr.bf16.mxu0 0
    %4893 = vmatpush1.bf16.msra.mxu0 %v4545
    %4894 = vmatprep.subr.bf16.mxu0 0
    %4895 = vmatpush1.bf16.msra.mxu0 %v4546
    %4896 = vmatprep.subr.bf16.mxu0 0
    %4897 = vmatpush1.bf16.msra.mxu0 %v4547
    %4898 = vmatprep.subr.bf16.mxu0 0
    %4899 = vmatpush1.bf16.msra.mxu0 %v4548
    %4900 = vmatprep.subr.bf16.mxu0 0
    %4901 = vmatpush1.bf16.msra.mxu0 %v4549
    %4902 = vmatprep.subr.bf16.mxu0 0
    %4903 = vmatpush1.bf16.msra.mxu0 %v4550
    %4904 = vmatprep.subr.bf16.mxu0 0
    %4905 = vmatpush1.bf16.msra.mxu0 %v4551
    %4906 = vmatprep.subr.bf16.mxu0 0
    %4907 = vmatpush1.bf16.msra.mxu0 %v4552
    %4908 = vmatprep.subr.bf16.mxu0 0
    %4909 = vmatpush1.bf16.msra.mxu0 %v4553
    %4910 = vmatprep.subr.bf16.mxu0 0
    %4911 = vmatpush1.bf16.msra.mxu0 %v4554
    %4912 = vmatprep.subr.bf16.mxu0 0
    %4913 = vmatpush1.bf16.msra.mxu0 %v4555
    %4914 = vmatprep.subr.bf16.mxu0 0
    %4915 = vmatpush1.bf16.msra.mxu0 %v4556
    %4916 = vmatprep.subr.bf16.mxu0 0
    %4917 = vmatpush1.bf16.msra.mxu0 %v4557
    %4918 = vmatprep.mubr.bf16.mxu0 %v4827
    %4919 = vmatmul.mubr.bf16.gmra.mrb[0].mxu0 %v4826
    %v4920 = vpop.f32.mrb[0].mxu0
    %v4921 = vadd.f32 %v4629, %v4920
    %v4922 = vpop.f32.mrb[0].mxu0
    %v4923 = vpop.f32.mrb[0].mxu0
    %v4924 = vadd.f32 %v4634, %v4923
    %v4925 = vpop.f32.mrb[0].mxu0
    %4926 = vmatprep.mubr.bf16.mxu0 %v4830
    %4927 = vmatmul.mubr.bf16.gmra.mrb[0].mxu0 %v4829
    %v4928 = vpop.f32.mrb[0].mxu0
    %v4929 = vadd.f32 %v4639, %v4928
    %v4930 = vpop.f32.mrb[0].mxu0
    %v4931 = vpop.f32.mrb[0].mxu0
    %v4932 = vadd.f32 %v4644, %v4931
    %v4933 = vpop.f32.mrb[0].mxu0
    %4934 = vmatprep.mubr.bf16.mxu0 %v4833
    %4935 = vmatmul.mubr.bf16.gmra.mrb[0].mxu0 %v4832
    %v4936 = vpop.f32.mrb[0].mxu0
    %v4937 = vadd.f32 %v4649, %v4936
    %v4938 = vpop.f32.mrb[0].mxu0
    %v4939 = vpop.f32.mrb[0].mxu0
    %v4940 = vadd.f32 %v4654, %v4939
    %v4941 = vpop.f32.mrb[0].mxu0
    %4942 = vmatprep.mubr.bf16.mxu0 %v4836
    %4943 = vmatmul.mubr.bf16.gmra.mrb[0].mxu0 %v4835
    %v4944 = vpop.f32.mrb[0].mxu0
    %v4945 = vadd.f32 %v4659, %v4944
    %v4946 = vpop.f32.mrb[0].mxu0
    %v4947 = vpop.f32.mrb[0].mxu0
    %v4948 = vadd.f32 %v4664, %v4947
    %v4949 = vpop.f32.mrb[0].mxu0
    %4950 = vmatprep.mubr.bf16.mxu0 %v4839
    %4951 = vmatmul.mubr.bf16.gmra.mrb[0].mxu0 %v4838
    %v4952 = vpop.f32.mrb[0].mxu0
    %v4953 = vadd.f32 %v4669, %v4952
    %v4954 = vpop.f32.mrb[0].mxu0
    %v4955 = vpop.f32.mrb[0].mxu0
    %v4956 = vadd.f32 %v4674, %v4955
    %v4957 = vpop.f32.mrb[0].mxu0
    %4958 = vmatprep.mubr.bf16.mxu0 %v4842
    %4959 = vmatmul.mubr.bf16.gmra.mrb[0].mxu0 %v4841
    %v4960 = vpop.f32.mrb[0].mxu0
    %v4961 = vadd.f32 %v4679, %v4960
    %v4962 = vpop.f32.mrb[0].mxu0
    %v4963 = vpop.f32.mrb[0].mxu0
    %v4964 = vadd.f32 %v4684, %v4963
    %v4965 = vpop.f32.mrb[0].mxu0
    %4966 = vmatprep.mubr.bf16.mxu0 %v4845
    %4967 = vmatmul.mubr.bf16.gmra.mrb[0].mxu0 %v4844
    %v4968 = vpop.f32.mrb[0].mxu0
    %v4969 = vadd.f32 %v4689, %v4968
    %v4970 = vpop.f32.mrb[0].mxu0
    %v4971 = vpop.f32.mrb[0].mxu0
    %v4972 = vadd.f32 %v4694, %v4971
    %v4973 = vpop.f32.mrb[0].mxu0
    %4974 = vmatprep.mubr.bf16.mxu0 %v4848
    %4975 = vmatmul.mubr.bf16.gmra.mrb[0].mxu0 %v4847
    %v4976 = vpop.f32.mrb[0].mxu0
    %v4977 = vadd.f32 %v4699, %v4976
    %v4978 = vpop.f32.mrb[0].mxu0
    %v4979 = vpop.f32.mrb[0].mxu0
    %v4980 = vadd.f32 %v4704, %v4979
    %v4981 = vpop.f32.mrb[0].mxu0
    %4982 = vmatprep.mubr.bf16.mxu0 %v4851
    %4983 = vmatmul.mubr.bf16.gmra.mrb[0].mxu0 %v4850
    %v4984 = vpop.f32.mrb[0].mxu0
    %v4985 = vadd.f32 %v4709, %v4984
    %v4986 = vpop.f32.mrb[0].mxu0
    %v4987 = vpop.f32.mrb[0].mxu0
    %v4988 = vadd.f32 %v4714, %v4987
    %v4989 = vpop.f32.mrb[0].mxu0
    %4990 = vmatprep.mubr.bf16.mxu0 %v4854
    %4991 = vmatmul.mubr.bf16.gmra.mrb[0].mxu0 %v4853
    %v4992 = vpop.f32.mrb[0].mxu0
    %v4993 = vadd.f32 %v4719, %v4992
    %v4994 = vpop.f32.mrb[0].mxu0
    %v4995 = vpop.f32.mrb[0].mxu0
    %v4996 = vadd.f32 %v4724, %v4995
    %v4997 = vpop.f32.mrb[0].mxu0
    %4998 = vdwg.mxu0
    %4999 = vmatprep.subr.bf16.mxu0 0
    %5000 = vmatpush1.bf16.msra.mxu0 %v4558
    %5001 = vmatprep.subr.bf16.mxu0 0
    %5002 = vmatpush1.bf16.msra.mxu0 %v4559
    %5003 = vmatprep.subr.bf16.mxu0 0
    %5004 = vmatpush1.bf16.msra.mxu0 %v4560
    %5005 = vmatprep.subr.bf16.mxu0 0
    %5006 = vmatpush1.bf16.msra.mxu0 %v4561
    %5007 = vmatprep.subr.bf16.mxu0 0
    %5008 = vmatpush1.bf16.msra.mxu0 %v4562
    %5009 = vmatprep.subr.bf16.mxu0 0
    %5010 = vmatpush1.bf16.msra.mxu0 %v4563
    %5011 = vmatprep.subr.bf16.mxu0 0
    %5012 = vmatpush1.bf16.msra.mxu0 %v4564
    %5013 = vmatprep.subr.bf16.mxu0 0
    %5014 = vmatpush1.bf16.msra.mxu0 %v4565
    %5015 = vmatprep.subr.bf16.mxu0 0
    %5016 = vmatpush1.bf16.msra.mxu0 0
    %5017 = vmatprep.subr.bf16.mxu0 0
    %5018 = vmatpush1.bf16.msra.mxu0 0
    %5019 = vmatprep.subr.bf16.mxu0 0
    %5020 = vmatpush1.bf16.msra.mxu0 0
    %5021 = vmatprep.subr.bf16.mxu0 0
    %5022 = vmatpush1.bf16.msra.mxu0 0
    %5023 = vmatprep.subr.bf16.mxu0 0
    %5024 = vmatpush1.bf16.msra.mxu0 0
    %5025 = vmatprep.subr.bf16.mxu0 0
    %5026 = vmatpush1.bf16.msra.mxu0 0
    %5027 = vmatprep.subr.bf16.mxu0 0
    %5028 = vmatpush1.bf16.msra.mxu0 0
    %5029 = vmatprep.subr.bf16.mxu0 0
    %5030 = vmatpush1.bf16.msra.mxu0 0
    %5031 = vmatprep.mubr.bf16.mxu0 0
    %5032 = vmatmul.mubr.bf16.gmra.mrb[0].mxu0 %v4828
    %v5033 = vpop.f32.mrb[0].mxu0
    %v5034 = vadd.f32 %v4921, %v5033
    %v5035 = vpop.f32.mrb[0].mxu0
    %v5036 = vpop.f32.mrb[0].mxu0
    %v5037 = vadd.f32 %v4924, %v5036
    %v5038 = vpop.f32.mrb[0].mxu0
    %5039 = vmatprep.mubr.bf16.mxu0 0
    %5040 = vmatmul.mubr.bf16.gmra.mrb[0].mxu0 %v4831
    %v5041 = vpop.f32.mrb[0].mxu0
    %v5042 = vadd.f32 %v4929, %v5041
    %v5043 = vpop.f32.mrb[0].mxu0
    %v5044 = vpop.f32.mrb[0].mxu0
    %v5045 = vadd.f32 %v4932, %v5044
    %v5046 = vpop.f32.mrb[0].mxu0
    %5047 = vmatprep.mubr.bf16.mxu0 0
    %5048 = vmatmul.mubr.bf16.gmra.mrb[0].mxu0 %v4834
    %v5049 = vpop.f32.mrb[0].mxu0
    %v5050 = vadd.f32 %v4937, %v5049
    %v5051 = vpop.f32.mrb[0].mxu0
    %v5052 = vpop.f32.mrb[0].mxu0
    %v5053 = vadd.f32 %v4940, %v5052
    %v5054 = vpop.f32.mrb[0].mxu0
    %5055 = vmatprep.mubr.bf16.mxu0 0
    %5056 = vmatmul.mubr.bf16.gmra.mrb[0].mxu0 %v4837
    %v5057 = vpop.f32.mrb[0].mxu0
    %v5058 = vadd.f32 %v4945, %v5057
    %v5059 = vpop.f32.mrb[0].mxu0
    %v5060 = vpop.f32.mrb[0].mxu0
    %v5061 = vadd.f32 %v4948, %v5060
    %v5062 = vpop.f32.mrb[0].mxu0
    %5063 = vmatprep.mubr.bf16.mxu0 0
    %5064 = vmatmul.mubr.bf16.gmra.mrb[0].mxu0 %v4840
    %v5065 = vpop.f32.mrb[0].mxu0
    %v5066 = vadd.f32 %v4953, %v5065
    %v5067 = vpop.f32.mrb[0].mxu0
    %v5068 = vpop.f32.mrb[0].mxu0
    %v5069 = vadd.f32 %v4956, %v5068
    %v5070 = vpop.f32.mrb[0].mxu0
    %5071 = vmatprep.mubr.bf16.mxu0 0
    %5072 = vmatmul.mubr.bf16.gmra.mrb[0].mxu0 %v4843
    %v5073 = vpop.f32.mrb[0].mxu0
    %v5074 = vadd.f32 %v4961, %v5073
    %v5075 = vpop.f32.mrb[0].mxu0
    %v5076 = vpop.f32.mrb[0].mxu0
    %v5077 = vadd.f32 %v4964, %v5076
    %v5078 = vpop.f32.mrb[0].mxu0
    %5079 = vmatprep.mubr.bf16.mxu0 0
    %5080 = vmatmul.mubr.bf16.gmra.mrb[0].mxu0 %v4846
    %v5081 = vpop.f32.mrb[0].mxu0
    %v5082 = vadd.f32 %v4969, %v5081
    %v5083 = vpop.f32.mrb[0].mxu0
    %v5084 = vpop.f32.mrb[0].mxu0
    %v5085 = vadd.f32 %v4972, %v5084
    %v5086 = vpop.f32.mrb[0].mxu0
    %5087 = vmatprep.mubr.bf16.mxu0 0
    %5088 = vmatmul.mubr.bf16.gmra.mrb[0].mxu0 %v4849
    %v5089 = vpop.f32.mrb[0].mxu0
    %v5090 = vadd.f32 %v4977, %v5089
    %v5091 = vpop.f32.mrb[0].mxu0
    %v5092 = vpop.f32.mrb[0].mxu0
    %v5093 = vadd.f32 %v4980, %v5092
    %v5094 = vpop.f32.mrb[0].mxu0
    %5095 = vmatprep.mubr.bf16.mxu0 0
    %5096 = vmatmul.mubr.bf16.gmra.mrb[0].mxu0 %v4852
    %v5097 = vpop.f32.mrb[0].mxu0
    %v5098 = vadd.f32 %v4985, %v5097
    %v5099 = vpop.f32.mrb[0].mxu0
    %v5100 = vpop.f32.mrb[0].mxu0
    %v5101 = vadd.f32 %v4988, %v5100
    %v5102 = vpop.f32.mrb[0].mxu0
    %5103 = vmatprep.mubr.bf16.mxu0 0
    %5104 = vmatmul.mubr.bf16.gmra.mrb[0].mxu0 %v4855
    %v5105 = vpop.f32.mrb[0].mxu0
    %v5106 = vadd.f32 %v4993, %v5105
    %v5107 = vpop.f32.mrb[0].mxu0
    %v5108 = vpop.f32.mrb[0].mxu0
    %v5109 = vadd.f32 %v4996, %v5108
    %v5110 = vpop.f32.mrb[0].mxu0
    %5111 = vdwg.mxu0
    %v5112 = vmax.f32 %v5034, 0.0
    %v5113 = vmax.f32 %v5037, 0.0
    %v5114 = vmax.f32 %v5042, 0.0
    %v5115 = vmax.f32 %v5045, 0.0
    %v5116 = vmax.f32 %v5050, 0.0
    %v5117 = vmax.f32 %v5053, 0.0
    %v5118 = vmax.f32 %v5058, 0.0
    %v5119 = vmax.f32 %v5061, 0.0
    %v5120 = vmax.f32 %v5066, 0.0
    %v5121 = vmax.f32 %v5069, 0.0
    %v5122 = vmax.f32 %v5074, 0.0
    %v5123 = vmax.f32 %v5077, 0.0
    %v5124 = vmax.f32 %v5082, 0.0
    %v5125 = vmax.f32 %v5085, 0.0
    %v5126 = vmax.f32 %v5090, 0.0
    %v5127 = vmax.f32 %v5093, 0.0
    %v5128 = vmax.f32 %v5098, 0.0
    %v5129 = vmax.f32 %v5101, 0.0
    %v5130 = vmax.f32 %v5106, 0.0
    %v5131 = vmax.f32 %v5109, 0.0
    %v5132 = vld [vmem:[%s6] sm:$0xff]
    %v5133 = vpack.c.bf16 %v5113, %v5112
    %v5134 = vpack.c.bf16 %v5115, %v5114
    %v5135 = vpack.c.bf16 %v5117, %v5116
    %v5136 = vpack.c.bf16 %v5119, %v5118
    %v5137 = vpack.c.bf16 %v5121, %v5120
    %v5138 = vpack.c.bf16 %v5123, %v5122
    %v5139 = vpack.c.bf16 %v5125, %v5124
    %v5140 = vpack.c.bf16 %v5127, %v5126
    %v5141 = vpack.c.bf16 %v5129, %v5128
    %v5142 = vpack.c.bf16 %v5131, %v5130
    %v5143 = vld [vmem:[%s7] sm:$0xff]
    %5145 = vset.pattern.permute.xlu0 0
    %5146 = vperm.xlu0 %5145, %v5143
    %v5147 = vpop.permute.xlu0 %5146
    %v5150 = vunpack.c.l.b16 %v5132
    %v5151 = vunpack.c.h.b16 %v5132
    %v5152 = vpack.c.b16 %v5150, %v5150
    %v5153 = vpack.c.b16 %v5151, %v5151
    %vm5155 = vcmask 261120
    %v5157 = vsel %vm5155, %v5153, 0
    %5159 = vmatprep.subr.bf16.mxu0 0
    %5160 = vmatpush1.bf16.msra.mxu0 %v5133
    %5161 = vmatprep.subr.bf16.mxu0 0
    %5162 = vmatpush1.bf16.msra.mxu0 %v5134
    %5163 = vmatprep.subr.bf16.mxu0 0
    %5164 = vmatpush1.bf16.msra.mxu0 %v5135
    %5165 = vmatprep.subr.bf16.mxu0 0
    %5166 = vmatpush1.bf16.msra.mxu0 %v5136
    %5167 = vmatprep.subr.bf16.mxu0 0
    %5168 = vmatpush1.bf16.msra.mxu0 %v5137
    %5169 = vmatprep.subr.bf16.mxu0 0
    %5170 = vmatpush1.bf16.msra.mxu0 %v5138
    %5171 = vmatprep.subr.bf16.mxu0 0
    %5172 = vmatpush1.bf16.msra.mxu0 %v5139
    %5173 = vmatprep.subr.bf16.mxu0 0
    %5174 = vmatpush1.bf16.msra.mxu0 %v5140
    %5175 = vmatprep.subr.bf16.mxu0 0
    %5176 = vmatpush1.bf16.msra.mxu0 %v5141
    %5177 = vmatprep.subr.bf16.mxu0 0
    %5178 = vmatpush1.bf16.msra.mxu0 %v5142
    %5179 = vmatprep.subr.bf16.mxu0 0
    %5180 = vmatpush1.bf16.msra.mxu0 0
    %5181 = vmatprep.subr.bf16.mxu0 0
    %5182 = vmatpush1.bf16.msra.mxu0 0
    %5183 = vmatprep.subr.bf16.mxu0 0
    %5184 = vmatpush1.bf16.msra.mxu0 0
    %5185 = vmatprep.subr.bf16.mxu0 0
    %5186 = vmatpush1.bf16.msra.mxu0 0
    %5187 = vmatprep.subr.bf16.mxu0 0
    %5188 = vmatpush1.bf16.msra.mxu0 0
    %5189 = vmatprep.subr.bf16.mxu0 0
    %5190 = vmatpush1.bf16.msra.mxu0 0
    %5191 = vmatprep.mubr.bf16.mxu0 %v5157
    %5192 = vmatmul.mubr.bf16.gmra.mrb[0].mxu0 %v5152
    %v5193 = vpop.f32.mrb[0].mxu0
    %v5194 = vadd.f32 %v5147, %v5193
    %v5195 = vpop.f32.mrb[0].mxu0
    %v5196 = vpop.f32.mrb[0].mxu0
    %v5197 = vpop.f32.mrb[0].mxu0
    %5198 = vdwg.mxu0
    %v5199 = vrot.slane %v5194, 4
    %v5200 = vmax.f32 %v5194, %v5199
    %v5201 = vrot.slane %v5200, 2
    %v5202 = vmax.f32 %v5200, %v5201
    %v5203 = vrot.slane %v5202, 1
    %v5204 = vmax.f32 %v5202, %v5203
    %v5205 = vsub.f32 %v5194, %v5204
    %v5206 = vmul.f32 %v5205, 1.442695
    %v5207 = vpow.pop %v5206
    %v5208 = vrot.slane %v5207, 4
    %v5209 = vadd.f32 %v5207, %v5208
    %v5210 = vrot.slane %v5209, 2
    %v5211 = vadd.f32 %v5209, %v5210
    %v5212 = vrot.slane %v5211, 1
    %v5213 = vadd.f32 %v5211, %v5212
    %v5214 = vrcp.pop %v5213
    %v5215 = vmul.f32 %v5207, %v5214
    %5216 = vst [vmem:[%s10] sm:$0xff] %v5215
    // Predicated region
    $region46: #{cnn_forward.2} parent=1 // pred_check
      _
    $region47: #{cnn_forward.2} parent=1 // pred_check_branch
      %5218 = sbr.rel (0) target = $region49
    $region48: #{cnn_forward.2} parent=1 // pred_region
      _
    $region49: #{cnn_forward.2} parent=1 // pred_fallthru
      _
    // Predicated region
    $region50: #{cnn_forward.2} parent=1 // pred_check
      _
    $region51: #{cnn_forward.2} parent=1 // pred_check_branch
      %5220 = sbr.rel (0) target = $region53
    $region52: #{cnn_forward.2} parent=1 // pred_region
      _
    $region53: #{cnn_forward.2} parent=1 // pred_fallthru
      _
    %5221 = vsyncpa [#allocation8], 1
    %5222 = vsyncpa [#allocation10], 1

</llo_original>
